<compile_context>
chip_gen: v7x
topology: tpu7x:2x2x1
jax: 0.10.0
libtpu: 0.0.40
codegen_flags: <defaults>
</compile_context>

<pallas_src>
import functools

import jax
import jax.numpy as jnp
from jax.experimental import pallas as pl
from jax.experimental.pallas import tpu as pltpu

# Original layer sizes and lane-dense (multiple-of-128) padded widths.
SIZES = (784, 520, 320, 240, 120, 10)
PADDED = (784, 640, 384, 256, 128, 128)

MAX_TILE_ROWS = 512   # per-step batch tile cap; safe under v5e's 16 MiB scoped VMEM


def _round_up(x, m):
    return (x + m - 1) // m * m


# -----------------------------------------------------------------------------
# Feature probe: single-buffered BlockSpecs (pipeline_mode=pl.Buffered(1)) for
# the grid-invariant weights/biases.  If this jax/Mosaic build rejects it, fall
# back to plain constant-index specs (still VMEM-resident, just double-buffered).
# -----------------------------------------------------------------------------
@functools.lru_cache(maxsize=None)
def _single_buffer_supported():
    try:
        spec = pl.BlockSpec((8, 128), lambda i: (0, 0),
                            pipeline_mode=pl.Buffered(1))

        def _copy(x_ref, o_ref):
            o_ref[...] = x_ref[...]

        fn = pl.pallas_call(
            _copy,
            out_shape=jax.ShapeDtypeStruct((8, 128), jnp.float32),
            grid=(1,),
            in_specs=[spec],
            out_specs=pl.BlockSpec((8, 128), lambda i: (0, 0)),
        )
        jax.block_until_ready(fn(jnp.zeros((8, 128), jnp.float32)))
        return True
    except Exception:
        return False


def _resident_spec(block_shape):
    """Constant-index spec for grid-invariant (VMEM-resident) operands."""
    const = lambda i: (0,) * len(block_shape)
    if _single_buffer_supported():
        return pl.BlockSpec(block_shape, const, pipeline_mode=pl.Buffered(1))
    return pl.BlockSpec(block_shape, const)


# -----------------------------------------------------------------------------
# Kernel
# -----------------------------------------------------------------------------
def _mlp_kernel(x_ref,
                w1_ref, b1_ref, w2_ref, b2_ref, w3_ref, b3_ref,
                w4_ref, b4_ref, w5_ref, b5_ref,
                o_ref):
    """Fused, batch-tiled 5-layer MLP.

    x_ref : (TM, 784)  bf16 batch tile (pipelined over the grid)
    wk_ref: (Kp, Np)   bf16 weights, VMEM-resident (constant index_map)
    bk_ref: (1, Np)    f32 biases
    o_ref : (TM, 128)  f32 lane-dense logits tile (cols >= 10 are padding)
    """

    def layer(h_bf16, w_ref, b_ref, relu):
        # bf16 operands feed the MXU; accumulate + bias (+ ReLU) in f32 on the VPU.
        y = jnp.dot(h_bf16, w_ref[...], preferred_element_type=jnp.float32)
        y = y + b_ref[...]
        return jnp.maximum(y, 0.0) if relu else y

    h = x_ref[...]                                                     # bf16 (TM, 784)
    h = layer(h, w1_ref, b1_ref, True).astype(jnp.bfloat16)            # (TM, 640)
    h = layer(h, w2_ref, b2_ref, True).astype(jnp.bfloat16)            # (TM, 384)
    h = layer(h, w3_ref, b3_ref, True).astype(jnp.bfloat16)            # (TM, 256)
    h = layer(h, w4_ref, b4_ref, True).astype(jnp.bfloat16)            # (TM, 128)
    o_ref[...] = layer(h, w5_ref, b5_ref, False).astype(o_ref.dtype)   # f32 (TM, 128)


# -----------------------------------------------------------------------------
# Parameter prep / wrapper
# -----------------------------------------------------------------------------
def prepare_params(params):
    """Zero-pad every layer to the lane-dense widths; weights bf16, biases f32.

    Padded rows/cols contribute zero (zero weights, zero bias, ReLU(0)=0), so
    the original 10 logit columns are numerically unchanged.
    Returns a flat tuple (w1, b1, ..., w5, b5).
    """
    flat = []
    for i, (w, b) in enumerate(params):
        in_p, out_p = PADDED[i], PADDED[i + 1]
        w_pad = jnp.zeros((in_p, out_p), jnp.float32).at[:w.shape[0], :w.shape[1]].set(w)
        b_pad = jnp.zeros((1, out_p), jnp.float32).at[0, :b.shape[0]].set(b)
        flat.append(w_pad.astype(jnp.bfloat16))   # MXU operand dtype
        flat.append(b_pad)                        # bias stays f32 (post-accum add)
    return tuple(flat)


@jax.jit
def net_forward(x, flat_params):
    """x: [B, 1, 28, 28] (or anything flattenable to [-1, 784])."""
    # Glue: x.view(-1, 784).  Activations travel as bf16 (MXU operand dtype),
    # halving the dominant HBM input stream of the pallas_call.
    x2d = x.reshape(-1, SIZES[0]).astype(jnp.bfloat16)
    B = x2d.shape[0]

    # Batch tiling:
    #  * at most MAX_TILE_ROWS rows per grid step,
    #  * >= 2 grid steps whenever B >= 16 so the "parallel" batch axis can be
    #    sharded across v7x's two TensorCores,
    #  * padding spread evenly across steps (no round-up-to-full-tile waste),
    #  * TM a multiple of 16 (clean bf16 sublane packing; also satisfies the
    #    (8,128) block constraint for the f32 output tile).
    steps = 1 if B < 16 else max(2, pl.cdiv(B, MAX_TILE_ROWS))
    TM = _round_up(pl.cdiv(B, steps), 16)
    B_pad = steps * TM
    if B_pad != B:
        x2d = jnp.pad(x2d, ((0, B_pad - B), (0, 0)))

    n_out = PADDED[-1]
    in_specs = [pl.BlockSpec((TM, SIZES[0]), lambda i: (i, 0))]   # x: pipelined tile
    for li in range(5):
        in_specs.append(_resident_spec((PADDED[li], PADDED[li + 1])))   # weight
        in_specs.append(_resident_spec((1, PADDED[li + 1])))            # bias
    out_spec = pl.BlockSpec((TM, n_out), lambda i: (i, 0))

    flops = 2 * B_pad * sum(PADDED[i] * PADDED[i + 1] for i in range(5))
    w_bytes = sum(PADDED[i] * PADDED[i + 1] * 2 + PADDED[i + 1] * 4 for i in range(5))
    bytes_accessed = w_bytes + B_pad * (SIZES[0] * 2 + n_out * 4)

    out = pl.pallas_call(
        _mlp_kernel,
        out_shape=jax.ShapeDtypeStruct((B_pad, n_out), jnp.float32),
        grid=(steps,),
        in_specs=in_specs,
        out_specs=out_spec,
        compiler_params=pltpu.CompilerParams(
            dimension_semantics=("parallel",)),
        cost_estimate=pl.CostEstimate(
            flops=flops, transcendentals=0, bytes_accessed=bytes_accessed),
    )(x2d, *flat_params)

    # Slice away batch padding and the lane-padding of the 10 logits.
    return out[:B, :SIZES[-1]]


# -----------------------------------------------------------------------------
# Init + pure-JAX reference (mirrors the kernel's bf16-operand / f32-accum dots)
# -----------------------------------------------------------------------------
def init_params(key):
    """PyTorch nn.Linear-style init: U(-1/sqrt(fan_in), 1/sqrt(fan_in)).
    Weights stored as (in_features, out_features), i.e. y = x @ W + b."""
    params = []
    for i in range(len(SIZES) - 1):
        fan_in, fan_out = SIZES[i], SIZES[i + 1]
        key, kw, kb = jax.random.split(key, 3)
        bound = 1.0 / (fan_in ** 0.5)
        w = jax.random.uniform(kw, (fan_in, fan_out), jnp.float32, -bound, bound)
        b = jax.random.uniform(kb, (fan_out,), jnp.float32, -bound, bound)
        params.append((w, b))
    return params


def reference_forward(x, params):
    h = x.reshape(-1, SIZES[0]).astype(jnp.bfloat16)
    for i, (w, b) in enumerate(params):
        y = jnp.dot(h, w.astype(jnp.bfloat16), preferred_element_type=jnp.float32) + b
        if i < len(params) - 1:
            h = jnp.maximum(y, 0.0).astype(jnp.bfloat16)
        else:
            h = y
    return h


if __name__ == "__main__":
    key = jax.random.PRNGKey(0)
    kp, kx1, kx2 = jax.random.split(key, 3)

    params = init_params(kp)
    flat_params = prepare_params(params)

    # Warm the Buffered(1) feature probe outside of any jit trace.
    _single_buffer_supported()

    # 1) Small MNIST-like batch: [B=8, 1, 28, 28] -> single grid step.
    x_small = jax.random.normal(kx1, (8, 1, 28, 28), jnp.float32)
    out_small = jax.block_until_ready(net_forward(x_small, flat_params))
    ref_small = reference_forward(x_small, params)
    assert out_small.shape == (8, 10), out_small.shape
    assert jnp.allclose(out_small, ref_small, atol=3e-3, rtol=3e-3), "mismatch (B=8)"

    # 2) Awkward batch: [B=20] -> 2 grid steps + batch padding path.
    x_odd = jax.random.normal(kx2, (20, 1, 28, 28), jnp.float32)
    out_odd = jax.block_until_ready(net_forward(x_odd, flat_params))
    ref_odd = reference_forward(x_odd, params)
    assert out_odd.shape == (20, 10), out_odd.shape
    assert jnp.allclose(out_odd, ref_odd, atol=3e-3, rtol=3e-3), "mismatch (B=20)"

    print("KERNEL_OK")
</pallas_src>

<mosaic_0001>
module attributes {stable_mosaic.version = 11 : i64} {
  func.func @_copy(%arg0: i32, %arg1: memref<8x128xf32, #tpu.memory_space<vmem>>, %arg2: memref<8x128xf32, #tpu.memory_space<vmem>>) attributes {dimension_semantics = [#tpu.dimension_semantics<arbitrary>], iteration_bounds = array<i64: 1>, scalar_prefetch = 0 : i64, scratch_operands = 0 : i64, tpu.core_type = #tpu.core_type<tc>, window_params = [{pipeline_mode = #tpu.pipeline_mode<synchronous>, transform_indices = @transform_0, window_bounds = array<i64: 8, 128>}, {pipeline_mode = #tpu.pipeline_mode<synchronous>, transform_indices = @transform_1, window_bounds = array<i64: 8, 128>}]} {
    %c0 = arith.constant 0 : index
    %c0_0 = arith.constant 0 : index
    %0 = vector.load %arg1[%c0, %c0_0] : memref<8x128xf32, #tpu.memory_space<vmem>>, vector<8x128xf32>
    %c0_1 = arith.constant 0 : index
    %c0_2 = arith.constant 0 : index
    %1 = vector.load %arg2[%c0_1, %c0_2] : memref<8x128xf32, #tpu.memory_space<vmem>>, vector<8x128xf32>
    tpu.vector_store %arg2[%c0_1, %c0_2], %0 {strides = array<i32>} : memref<8x128xf32, #tpu.memory_space<vmem>>, vector<8x128xf32>,
    return
  }
  func.func @transform_0(%arg0: i32) -> (i32, i32) {
    %c0_i32 = arith.constant 0 : i32
    %c0_i32_0 = arith.constant 0 : i32
    %c0_i32_1 = arith.constant 0 : i32
    return %c0_i32, %c0_i32_0 : i32, i32
  }
  func.func @transform_1(%arg0: i32) -> (i32, i32) {
    %c0_i32 = arith.constant 0 : i32
    %c0_i32_0 = arith.constant 0 : i32
    %c0_i32_1 = arith.constant 0 : i32
    return %c0_i32, %c0_i32_0 : i32, i32
  }
}

module attributes {stable_mosaic.version = 11 : i64} {
  func.func @_mlp_kernel(%arg0: i32, %arg1: memref<16x784xbf16, #tpu.memory_space<vmem>>, %arg2: memref<784x640xbf16, #tpu.memory_space<vmem>>, %arg3: memref<1x640xf32, #tpu.memory_space<vmem>>, %arg4: memref<640x384xbf16, #tpu.memory_space<vmem>>, %arg5: memref<1x384xf32, #tpu.memory_space<vmem>>, %arg6: memref<384x256xbf16, #tpu.memory_space<vmem>>, %arg7: memref<1x256xf32, #tpu.memory_space<vmem>>, %arg8: memref<256x128xbf16, #tpu.memory_space<vmem>>, %arg9: memref<1x128xf32, #tpu.memory_space<vmem>>, %arg10: memref<128x128xbf16, #tpu.memory_space<vmem>>, %arg11: memref<1x128xf32, #tpu.memory_space<vmem>>, %arg12: memref<16x128xf32, #tpu.memory_space<vmem>>) attributes {dimension_semantics = [#tpu.dimension_semantics<parallel>], iteration_bounds = array<i64: 1>, scalar_prefetch = 0 : i64, scratch_operands = 0 : i64, tpu.core_type = #tpu.core_type<tc>, window_params = [{transform_indices = @transform_0, window_bounds = array<i64: 16, 784>}, {pipeline_mode = #tpu.pipeline_mode<synchronous>, transform_indices = @transform_1, window_bounds = array<i64: 784, 640>}, {pipeline_mode = #tpu.pipeline_mode<synchronous>, transform_indices = @transform_2, window_bounds = array<i64: 1, 640>}, {pipeline_mode = #tpu.pipeline_mode<synchronous>, transform_indices = @transform_3, window_bounds = array<i64: 640, 384>}, {pipeline_mode = #tpu.pipeline_mode<synchronous>, transform_indices = @transform_4, window_bounds = array<i64: 1, 384>}, {pipeline_mode = #tpu.pipeline_mode<synchronous>, transform_indices = @transform_5, window_bounds = array<i64: 384, 256>}, {pipeline_mode = #tpu.pipeline_mode<synchronous>, transform_indices = @transform_6, window_bounds = array<i64: 1, 256>}, {pipeline_mode = #tpu.pipeline_mode<synchronous>, transform_indices = @transform_7, window_bounds = array<i64: 256, 128>}, {pipeline_mode = #tpu.pipeline_mode<synchronous>, transform_indices = @transform_8, window_bounds = array<i64: 1, 128>}, {pipeline_mode = #tpu.pipeline_mode<synchronous>, transform_indices = @transform_9, window_bounds = array<i64: 128, 128>}, {pipeline_mode = #tpu.pipeline_mode<synchronous>, transform_indices = @transform_10, window_bounds = array<i64: 1, 128>}, {transform_indices = @transform_11, window_bounds = array<i64: 16, 128>}]} {
    %c0 = arith.constant 0 : index
    %c0_0 = arith.constant 0 : index
    %0 = vector.load %arg1[%c0, %c0_0] : memref<16x784xbf16, #tpu.memory_space<vmem>>, vector<16x784xbf16>
    %c0_1 = arith.constant 0 : index
    %c0_2 = arith.constant 0 : index
    %1 = vector.load %arg2[%c0_1, %c0_2] : memref<784x640xbf16, #tpu.memory_space<vmem>>, vector<784x640xbf16>
    %cst = arith.constant dense<0.000000e+00> : vector<16x640xf32>
    %2 = tpu.matmul %0, %1, %cst {dimension_numbers = #tpu.dot_dimension_numbers<[1], [0], [0], [1], [0, 0, 1, 1], [], []>} : vector<16x784xbf16>, vector<784x640xbf16>, vector<16x640xf32> -> vector<16x640xf32>
    %c0_3 = arith.constant 0 : index
    %c0_4 = arith.constant 0 : index
    %3 = vector.load %arg3[%c0_3, %c0_4] : memref<1x640xf32, #tpu.memory_space<vmem>>, vector<1x640xf32>
    %4 = vector.broadcast %3 : vector<1x640xf32> to vector<16x640xf32>
    %5 = arith.addf %2, %4 : vector<16x640xf32>
    %cst_5 = arith.constant 0.000000e+00 : f32
    %6 = vector.broadcast %cst_5 : f32 to vector<16x640xf32>
    %7 = arith.maximumf %5, %6 : vector<16x640xf32>
    %8 = arith.truncf %7 : vector<16x640xf32> to vector<16x640xbf16>
    %c0_6 = arith.constant 0 : index
    %c0_7 = arith.constant 0 : index
    %9 = vector.load %arg4[%c0_6, %c0_7] : memref<640x384xbf16, #tpu.memory_space<vmem>>, vector<640x384xbf16>
    %cst_8 = arith.constant dense<0.000000e+00> : vector<16x384xf32>
    %10 = tpu.matmul %8, %9, %cst_8 {dimension_numbers = #tpu.dot_dimension_numbers<[1], [0], [0], [1], [0, 0, 1, 1], [], []>} : vector<16x640xbf16>, vector<640x384xbf16>, vector<16x384xf32> -> vector<16x384xf32>
    %c0_9 = arith.constant 0 : index
    %c0_10 = arith.constant 0 : index
    %11 = vector.load %arg5[%c0_9, %c0_10] : memref<1x384xf32, #tpu.memory_space<vmem>>, vector<1x384xf32>
    %12 = vector.broadcast %11 : vector<1x384xf32> to vector<16x384xf32>
    %13 = arith.addf %10, %12 : vector<16x384xf32>
    %cst_11 = arith.constant 0.000000e+00 : f32
    %14 = vector.broadcast %cst_11 : f32 to vector<16x384xf32>
    %15 = arith.maximumf %13, %14 : vector<16x384xf32>
    %16 = arith.truncf %15 : vector<16x384xf32> to vector<16x384xbf16>
    %c0_12 = arith.constant 0 : index
    %c0_13 = arith.constant 0 : index
    %17 = vector.load %arg6[%c0_12, %c0_13] : memref<384x256xbf16, #tpu.memory_space<vmem>>, vector<384x256xbf16>
    %cst_14 = arith.constant dense<0.000000e+00> : vector<16x256xf32>
    %18 = tpu.matmul %16, %17, %cst_14 {dimension_numbers = #tpu.dot_dimension_numbers<[1], [0], [0], [1], [0, 0, 1, 1], [], []>} : vector<16x384xbf16>, vector<384x256xbf16>, vector<16x256xf32> -> vector<16x256xf32>
    %c0_15 = arith.constant 0 : index
    %c0_16 = arith.constant 0 : index
    %19 = vector.load %arg7[%c0_15, %c0_16] : memref<1x256xf32, #tpu.memory_space<vmem>>, vector<1x256xf32>
    %20 = vector.broadcast %19 : vector<1x256xf32> to vector<16x256xf32>
    %21 = arith.addf %18, %20 : vector<16x256xf32>
    %cst_17 = arith.constant 0.000000e+00 : f32
    %22 = vector.broadcast %cst_17 : f32 to vector<16x256xf32>
    %23 = arith.maximumf %21, %22 : vector<16x256xf32>
    %24 = arith.truncf %23 : vector<16x256xf32> to vector<16x256xbf16>
    %c0_18 = arith.constant 0 : index
    %c0_19 = arith.constant 0 : index
    %25 = vector.load %arg8[%c0_18, %c0_19] : memref<256x128xbf16, #tpu.memory_space<vmem>>, vector<256x128xbf16>
    %cst_20 = arith.constant dense<0.000000e+00> : vector<16x128xf32>
    %26 = tpu.matmul %24, %25, %cst_20 {dimension_numbers = #tpu.dot_dimension_numbers<[1], [0], [0], [1], [0, 0, 1, 1], [], []>} : vector<16x256xbf16>, vector<256x128xbf16>, vector<16x128xf32> -> vector<16x128xf32>
    %c0_21 = arith.constant 0 : index
    %c0_22 = arith.constant 0 : index
    %27 = vector.load %arg9[%c0_21, %c0_22] : memref<1x128xf32, #tpu.memory_space<vmem>>, vector<1x128xf32>
    %28 = vector.broadcast %27 : vector<1x128xf32> to vector<16x128xf32>
    %29 = arith.addf %26, %28 : vector<16x128xf32>
    %cst_23 = arith.constant 0.000000e+00 : f32
    %30 = vector.broadcast %cst_23 : f32 to vector<16x128xf32>
    %31 = arith.maximumf %29, %30 : vector<16x128xf32>
    %32 = arith.truncf %31 : vector<16x128xf32> to vector<16x128xbf16>
    %c0_24 = arith.constant 0 : index
    %c0_25 = arith.constant 0 : index
    %33 = vector.load %arg10[%c0_24, %c0_25] : memref<128x128xbf16, #tpu.memory_space<vmem>>, vector<128x128xbf16>
    %cst_26 = arith.constant dense<0.000000e+00> : vector<16x128xf32>
    %34 = tpu.matmul %32, %33, %cst_26 {dimension_numbers = #tpu.dot_dimension_numbers<[1], [0], [0], [1], [0, 0, 1, 1], [], []>} : vector<16x128xbf16>, vector<128x128xbf16>, vector<16x128xf32> -> vector<16x128xf32>
    %c0_27 = arith.constant 0 : index
    %c0_28 = arith.constant 0 : index
    %35 = vector.load %arg11[%c0_27, %c0_28] : memref<1x128xf32, #tpu.memory_space<vmem>>, vector<1x128xf32>
    %36 = vector.broadcast %35 : vector<1x128xf32> to vector<16x128xf32>
    %37 = arith.addf %34, %36 : vector<16x128xf32>
    %c0_29 = arith.constant 0 : index
    %c0_30 = arith.constant 0 : index
    %38 = vector.load %arg12[%c0_29, %c0_30] : memref<16x128xf32, #tpu.memory_space<vmem>>, vector<16x128xf32>
    tpu.vector_store %arg12[%c0_29, %c0_30], %37 {strides = array<i32>} : memref<16x128xf32, #tpu.memory_space<vmem>>, vector<16x128xf32>,
    return
  }
  func.func @transform_0(%arg0: i32) -> (i32, i32) {
    %c0_i32 = arith.constant 0 : i32
    %c0_i32_0 = arith.constant 0 : i32
    return %arg0, %c0_i32 : i32, i32
  }
  func.func @transform_1(%arg0: i32) -> (i32, i32) {
    %c0_i32 = arith.constant 0 : i32
    %c0_i32_0 = arith.constant 0 : i32
    %c0_i32_1 = arith.constant 0 : i32
    return %c0_i32, %c0_i32_0 : i32, i32
  }
  func.func @transform_2(%arg0: i32) -> (i32, i32) {
    %c0_i32 = arith.constant 0 : i32
    %c0_i32_0 = arith.constant 0 : i32
    %c0_i32_1 = arith.constant 0 : i32
    return %c0_i32, %c0_i32_0 : i32, i32
  }
  func.func @transform_3(%arg0: i32) -> (i32, i32) {
    %c0_i32 = arith.constant 0 : i32
    %c0_i32_0 = arith.constant 0 : i32
    %c0_i32_1 = arith.constant 0 : i32
    return %c0_i32, %c0_i32_0 : i32, i32
  }
  func.func @transform_4(%arg0: i32) -> (i32, i32) {
    %c0_i32 = arith.constant 0 : i32
    %c0_i32_0 = arith.constant 0 : i32
    %c0_i32_1 = arith.constant 0 : i32
    return %c0_i32, %c0_i32_0 : i32, i32
  }
  func.func @transform_5(%arg0: i32) -> (i32, i32) {
    %c0_i32 = arith.constant 0 : i32
    %c0_i32_0 = arith.constant 0 : i32
    %c0_i32_1 = arith.constant 0 : i32
    return %c0_i32, %c0_i32_0 : i32, i32
  }
  func.func @transform_6(%arg0: i32) -> (i32, i32) {
    %c0_i32 = arith.constant 0 : i32
    %c0_i32_0 = arith.constant 0 : i32
    %c0_i32_1 = arith.constant 0 : i32
    return %c0_i32, %c0_i32_0 : i32, i32
  }
  func.func @transform_7(%arg0: i32) -> (i32, i32) {
    %c0_i32 = arith.constant 0 : i32
    %c0_i32_0 = arith.constant 0 : i32
    %c0_i32_1 = arith.constant 0 : i32
    return %c0_i32, %c0_i32_0 : i32, i32
  }
  func.func @transform_8(%arg0: i32) -> (i32, i32) {
    %c0_i32 = arith.constant 0 : i32
    %c0_i32_0 = arith.constant 0 : i32
    %c0_i32_1 = arith.constant 0 : i32
    return %c0_i32, %c0_i32_0 : i32, i32
  }
  func.func @transform_9(%arg0: i32) -> (i32, i32) {
    %c0_i32 = arith.constant 0 : i32
    %c0_i32_0 = arith.constant 0 : i32
    %c0_i32_1 = arith.constant 0 : i32
    return %c0_i32, %c0_i32_0 : i32, i32
  }
  func.func @transform_10(%arg0: i32) -> (i32, i32) {
    %c0_i32 = arith.constant 0 : i32
    %c0_i32_0 = arith.constant 0 : i32
    %c0_i32_1 = arith.constant 0 : i32
    return %c0_i32, %c0_i32_0 : i32, i32
  }
  func.func @transform_11(%arg0: i32) -> (i32, i32) {
    %c0_i32 = arith.constant 0 : i32
    %c0_i32_0 = arith.constant 0 : i32
    return %arg0, %c0_i32 : i32, i32
  }
}

</mosaic_0001>

<llo_original>
// kernel: tpu_custom_call.1
$region0: #{tpu_custom_call.1}
  #allocation0 [shape = 'u32[]', space=smem, size = 0x4, offset = 0x4, fixed_abs, tag = 'smem constant byte address 0x4 - core index']
  #allocation1 [shape = 'u32[144,128]{1,0:T(1,128)}', space=vmem, size = 0x12000, scoped, tag = 'internal scratch']
  %s0 = inlined_call_operand.hbm [shape: f32[8,128], index: 0, kind: input, shape index: {}]
  %s1 = inlined_call_operand.hbm [shape: f32[8,128], index: 1, kind: output, shape index: {}]
  %s2 = sld [smem:[#allocation0]]
  $region18: #{tpu_custom_call.1} parent=0
    _
  %s4 = ssub.s32 1, %s2
  %s5 = scalar_select 0, %s4, %s2
  $region1: #{tpu_custom_call.1} parent=0
    #allocation2 [shape = 'u8[4096]{0}', space=vmem, size = 0x1000, scoped, tag = 'input window, operand 0, single buffered']
    #allocation3 [shape = 's32[1]{0}', space=sflag, size = 0x4, scoped, tag = 'scoped memory for tpu_custom_call.1']
    #allocation4 [shape = 's32[1]{0}', space=sflag, size = 0x4, scoped, tag = 'scoped memory for tpu_custom_call.1']
    #allocation5 [shape = 'u8[4096]{0}', space=vmem, size = 0x1000, scoped, tag = 'output window, operand 0, single buffered']
    %6 = vsyncpa [#allocation3], 0
    %7 = vsyncpa [#allocation4], 0
    // Predicated region
    $region2: #{tpu_custom_call.1} parent=1 // pred_check
      _
    $region3: #{tpu_custom_call.1} parent=1 // pred_check_branch
      %9 = sbr.rel (0) target = $region5
    $region4: #{tpu_custom_call.1} parent=1 // pred_region
      %s11 = ssub.s32 128, 128
      %12 = vsyncadd [#allocation3], %s11
      %s14 = sshll.u32 [#allocation2], 4
      %s15 = int_to_ptr.vmem [resolvable:$true] %s14
      %17 = dma.hbm_to_vmem [thread:$0]  %s0, 128, %s15, [#allocation3]
    $region5: #{tpu_custom_call.1} parent=1 // pred_fallthru
      _
    // Predicated region
    $region6: #{tpu_custom_call.1} parent=1 // pred_check
      _
    $region7: #{tpu_custom_call.1} parent=1 // pred_check_branch
      %19 = sbr.rel (0) target = $region9
    $region8: #{tpu_custom_call.1} parent=1 // pred_region
      %20 = dma.done [#allocation3], 128
    $region9: #{tpu_custom_call.1} parent=1 // pred_fallthru
      _
    %v21 = vld [vmem:[#allocation2] sm:$0xff]
    %22 = vst [vmem:[#allocation5] sm:$0xff] %v21
    // Predicated region
    $region10: #{tpu_custom_call.1} parent=1 // pred_check
      _
    $region11: #{tpu_custom_call.1} parent=1 // pred_check_branch
      %24 = sbr.rel (0) target = $region13
    $region12: #{tpu_custom_call.1} parent=1 // pred_region
      %s26 = ssub.s32 128, 128
      %27 = vsyncadd [#allocation4], %s26
      %s29 = sshll.u32 [#allocation5], 4
      %s30 = int_to_ptr.vmem [resolvable:$true] %s29
      %32 = dma.vmem_to_hbm [thread:$0]  %s30, 128, %s1, [#allocation4]
    $region13: #{tpu_custom_call.1} parent=1 // pred_fallthru
      _
    // Predicated region
    $region14: #{tpu_custom_call.1} parent=1 // pred_check
      _
    $region15: #{tpu_custom_call.1} parent=1 // pred_check_branch
      %34 = sbr.rel (0) target = $region17
    $region16: #{tpu_custom_call.1} parent=1 // pred_region
      %35 = dma.done [#allocation4], 128
    $region17: #{tpu_custom_call.1} parent=1 // pred_fallthru
      _
    %36 = vsyncpa [#allocation3], 1
    %37 = vsyncpa [#allocation4], 1

// kernel: net_forward.1
$region0: #{net_forward.1}
  #allocation0 [shape = 'u32[]', space=smem, size = 0x4, offset = 0x4, fixed_abs, tag = 'smem constant byte address 0x4 - core index']
  #allocation1 [shape = 'u32[144,128]{1,0:T(1,128)}', space=vmem, size = 0x12000, scoped, tag = 'internal scratch']
  %s0 = inlined_call_operand.vmem [shape: bf16[16,784], index: 0, kind: input, shape index: {}]
  %s1 = inlined_call_operand.hbm [shape: bf16[784,640], index: 1, kind: input, shape index: {}]
  %s2 = inlined_call_operand.vmem [shape: f32[1,640], index: 2, kind: input, shape index: {}]
  %s3 = inlined_call_operand.hbm [shape: bf16[640,384], index: 3, kind: input, shape index: {}]
  %s4 = inlined_call_operand.vmem [shape: f32[1,384], index: 4, kind: input, shape index: {}]
  %s5 = inlined_call_operand.vmem [shape: bf16[384,256], index: 5, kind: input, shape index: {}]
  %s6 = inlined_call_operand.vmem [shape: f32[1,256], index: 6, kind: input, shape index: {}]
  %s7 = inlined_call_operand.vmem [shape: bf16[256,128], index: 7, kind: input, shape index: {}]
  %s8 = inlined_call_operand.vmem [shape: f32[1,128], index: 8, kind: input, shape index: {}]
  %s9 = inlined_call_operand.vmem [shape: bf16[128,128], index: 9, kind: input, shape index: {}]
  %s10 = inlined_call_operand.vmem [shape: f32[1,128], index: 10, kind: input, shape index: {}]
  %s11 = inlined_call_operand.vmem [shape: f32[16,128], index: 11, kind: output, shape index: {}]
  %s12 = sld [smem:[#allocation0]]
  $region62: #{net_forward.1} parent=0
    _
  %s14 = ssub.s32 1, %s12
  %s15 = scalar_select 0, %s14, %s12
  $region1: #{net_forward.1} parent=0
    #allocation2 [shape = 'u8[1003520]{0}', space=vmem, size = 0xf5000, scoped, tag = 'input window, operand 1, single buffered']
    #allocation3 [shape = 's32[1]{0}', space=sflag, size = 0x4, scoped, tag = 'scoped memory for net_forward.1']
    #allocation4 [shape = 'u8[491520]{0}', space=vmem, size = 0x78000, scoped, tag = 'input window, operand 3, single buffered']
    #allocation5 [shape = 's32[1]{0}', space=sflag, size = 0x4, scoped, tag = 'scoped memory for net_forward.1']
    %16 = vsyncpa [#allocation3], 0
    %17 = vsyncpa [#allocation5], 0
    // Predicated region
    $region2: #{net_forward.1} parent=1 // pred_check
      _
    $region3: #{net_forward.1} parent=1 // pred_check_branch
      %19 = sbr.rel (0) target = $region5
    $region4: #{net_forward.1} parent=1 // pred_region
      _
    $region5: #{net_forward.1} parent=1 // pred_fallthru
      _
    // Predicated region
    $region6: #{net_forward.1} parent=1 // pred_check
      _
    $region7: #{net_forward.1} parent=1 // pred_check_branch
      %21 = sbr.rel (0) target = $region9
    $region8: #{net_forward.1} parent=1 // pred_region
      %s23 = ssub.s32 31360, 31360
      %24 = vsyncadd [#allocation3], %s23
      %s25 = sshll.u32 [#allocation2], 4
      %s26 = int_to_ptr.vmem [resolvable:$true] %s25
      %31 = dma.hbm_to_vmem [thread:$0]  %s1, 31360, %s26, [#allocation3], 320, 320, 20
    $region9: #{net_forward.1} parent=1 // pred_fallthru
      _
    // Predicated region
    $region10: #{net_forward.1} parent=1 // pred_check
      _
    $region11: #{net_forward.1} parent=1 // pred_check_branch
      %33 = sbr.rel (0) target = $region13
    $region12: #{net_forward.1} parent=1 // pred_region
      _
    $region13: #{net_forward.1} parent=1 // pred_fallthru
      _
    // Predicated region
    $region14: #{net_forward.1} parent=1 // pred_check
      _
    $region15: #{net_forward.1} parent=1 // pred_check_branch
      %35 = sbr.rel (0) target = $region17
    $region16: #{net_forward.1} parent=1 // pred_region
      %s37 = ssub.s32 15360, 15360
      %38 = vsyncadd [#allocation5], %s37
      %s39 = sshll.u32 [#allocation4], 4
      %s40 = int_to_ptr.vmem [resolvable:$true] %s39
      %45 = dma.hbm_to_vmem [thread:$0]  %s3, 15360, %s40, [#allocation5], 192, 192, 12
    $region17: #{net_forward.1} parent=1 // pred_fallthru
      _
    // Predicated region
    $region18: #{net_forward.1} parent=1 // pred_check
      _
    $region19: #{net_forward.1} parent=1 // pred_check_branch
      %47 = sbr.rel (0) target = $region21
    $region20: #{net_forward.1} parent=1 // pred_region
      _
    $region21: #{net_forward.1} parent=1 // pred_fallthru
      _
    // Predicated region
    $region22: #{net_forward.1} parent=1 // pred_check
      _
    $region23: #{net_forward.1} parent=1 // pred_check_branch
      %49 = sbr.rel (0) target = $region25
    $region24: #{net_forward.1} parent=1 // pred_region
      _
    $region25: #{net_forward.1} parent=1 // pred_fallthru
      _
    // Predicated region
    $region26: #{net_forward.1} parent=1 // pred_check
      _
    $region27: #{net_forward.1} parent=1 // pred_check_branch
      %51 = sbr.rel (0) target = $region29
    $region28: #{net_forward.1} parent=1 // pred_region
      _
    $region29: #{net_forward.1} parent=1 // pred_fallthru
      _
    // Predicated region
    $region30: #{net_forward.1} parent=1 // pred_check
      _
    $region31: #{net_forward.1} parent=1 // pred_check_branch
      %53 = sbr.rel (0) target = $region33
    $region32: #{net_forward.1} parent=1 // pred_region
      _
    $region33: #{net_forward.1} parent=1 // pred_fallthru
      _
    // Predicated region
    $region34: #{net_forward.1} parent=1 // pred_check
      _
    $region35: #{net_forward.1} parent=1 // pred_check_branch
      %55 = sbr.rel (0) target = $region37
    $region36: #{net_forward.1} parent=1 // pred_region
      _
    $region37: #{net_forward.1} parent=1 // pred_fallthru
      _
    // Predicated region
    $region38: #{net_forward.1} parent=1 // pred_check
      _
    $region39: #{net_forward.1} parent=1 // pred_check_branch
      %57 = sbr.rel (0) target = $region41
    $region40: #{net_forward.1} parent=1 // pred_region
      _
    $region41: #{net_forward.1} parent=1 // pred_fallthru
      _
    // Predicated region
    $region42: #{net_forward.1} parent=1 // pred_check
      _
    $region43: #{net_forward.1} parent=1 // pred_check_branch
      %59 = sbr.rel (0) target = $region45
    $region44: #{net_forward.1} parent=1 // pred_region
      _
    $region45: #{net_forward.1} parent=1 // pred_fallthru
      _
    // Predicated region
    $region46: #{net_forward.1} parent=1 // pred_check
      _
    $region47: #{net_forward.1} parent=1 // pred_check_branch
      %61 = sbr.rel (0) target = $region49
    $region48: #{net_forward.1} parent=1 // pred_region
      %62 = dma.done [#allocation3], 31360
    $region49: #{net_forward.1} parent=1 // pred_fallthru
      _
    // Predicated region
    $region50: #{net_forward.1} parent=1 // pred_check
      _
    $region51: #{net_forward.1} parent=1 // pred_check_branch
      %64 = sbr.rel (0) target = $region53
    $region52: #{net_forward.1} parent=1 // pred_region
      %65 = dma.done [#allocation5], 15360
    $region53: #{net_forward.1} parent=1 // pred_fallthru
      _
    %v67 = vld [vmem:[%s0] sm:$0xff]
    %v68 = vld [vmem:[%s0 + $0x8] sm:$0xff]
    %v69 = vld [vmem:[%s0 + $0x10] sm:$0xff]
    %v70 = vld [vmem:[%s0 + $0x18] sm:$0xf]
    %v71 = vld [vmem:[%s0 + $0x1c] sm:$0xff]
    %v72 = vld [vmem:[%s0 + $0x24] sm:$0xff]
    %v73 = vld [vmem:[%s0 + $0x2c] sm:$0xff]
    %v74 = vld [vmem:[%s0 + $0x34] sm:$0xf]
    %v75 = vld [vmem:[#allocation2] sm:$0xff]
    %v76 = vld [vmem:[#allocation2 + $0x8] sm:$0xff]
    %v77 = vld [vmem:[#allocation2 + $0x10] sm:$0xf]
    %v78 = vld [vmem:[#allocation2 + $0x14] sm:$0xff]
    %v79 = vld [vmem:[#allocation2 + $0x1c] sm:$0xff]
    %v80 = vld [vmem:[#allocation2 + $0x24] sm:$0xf]
    %v81 = vld [vmem:[#allocation2 + $0x28] sm:$0xff]
    %v82 = vld [vmem:[#allocation2 + $0x30] sm:$0xff]
    %v83 = vld [vmem:[#allocation2 + $0x38] sm:$0xf]
    %v84 = vld [vmem:[#allocation2 + $0x3c] sm:$0xff]
    %v85 = vld [vmem:[#allocation2 + $0x44] sm:$0xff]
    %v86 = vld [vmem:[#allocation2 + $0x4c] sm:$0xf]
    %v87 = vld [vmem:[#allocation2 + $0x50] sm:$0xff]
    %v88 = vld [vmem:[#allocation2 + $0x58] sm:$0xff]
    %v89 = vld [vmem:[#allocation2 + $0x60] sm:$0xf]
    %v90 = vld [vmem:[#allocation2 + $0x64] sm:$0xff]
    %v91 = vld [vmem:[#allocation2 + $0x6c] sm:$0xff]
    %v92 = vld [vmem:[#allocation2 + $0x74] sm:$0xf]
    %v93 = vld [vmem:[#allocation2 + $0x78] sm:$0xff]
    %v94 = vld [vmem:[#allocation2 + $0x80] sm:$0xff]
    %v95 = vld [vmem:[#allocation2 + $0x88] sm:$0xf]
    %v96 = vld [vmem:[#allocation2 + $0x8c] sm:$0xff]
    %v97 = vld [vmem:[#allocation2 + $0x94] sm:$0xff]
    %v98 = vld [vmem:[#allocation2 + $0x9c] sm:$0xf]
    %v99 = vld [vmem:[#allocation2 + $0xa0] sm:$0xff]
    %v100 = vld [vmem:[#allocation2 + $0xa8] sm:$0xff]
    %v101 = vld [vmem:[#allocation2 + $0xb0] sm:$0xf]
    %v102 = vld [vmem:[#allocation2 + $0xb4] sm:$0xff]
    %v103 = vld [vmem:[#allocation2 + $0xbc] sm:$0xff]
    %v104 = vld [vmem:[#allocation2 + $0xc4] sm:$0xf]
    %v105 = vld [vmem:[#allocation2 + $0xc8] sm:$0xff]
    %v106 = vld [vmem:[#allocation2 + $0xd0] sm:$0xff]
    %v107 = vld [vmem:[#allocation2 + $0xd8] sm:$0xf]
    %v108 = vld [vmem:[#allocation2 + $0xdc] sm:$0xff]
    %v109 = vld [vmem:[#allocation2 + $0xe4] sm:$0xff]
    %v110 = vld [vmem:[#allocation2 + $0xec] sm:$0xf]
    %v111 = vld [vmem:[#allocation2 + $0xf0] sm:$0xff]
    %v112 = vld [vmem:[#allocation2 + $0xf8] sm:$0xff]
    %v113 = vld [vmem:[#allocation2 + $0x100] sm:$0xf]
    %v114 = vld [vmem:[#allocation2 + $0x104] sm:$0xff]
    %v115 = vld [vmem:[#allocation2 + $0x10c] sm:$0xff]
    %v116 = vld [vmem:[#allocation2 + $0x114] sm:$0xf]
    %v117 = vld [vmem:[#allocation2 + $0x118] sm:$0xff]
    %v118 = vld [vmem:[#allocation2 + $0x120] sm:$0xff]
    %v119 = vld [vmem:[#allocation2 + $0x128] sm:$0xf]
    %v120 = vld [vmem:[#allocation2 + $0x12c] sm:$0xff]
    %v121 = vld [vmem:[#allocation2 + $0x134] sm:$0xff]
    %v122 = vld [vmem:[#allocation2 + $0x13c] sm:$0xf]
    %v123 = vld [vmem:[#allocation2 + $0x140] sm:$0xff]
    %v124 = vld [vmem:[#allocation2 + $0x148] sm:$0xff]
    %v125 = vld [vmem:[#allocation2 + $0x150] sm:$0xf]
    %v126 = vld [vmem:[#allocation2 + $0x154] sm:$0xff]
    %v127 = vld [vmem:[#allocation2 + $0x15c] sm:$0xff]
    %v128 = vld [vmem:[#allocation2 + $0x164] sm:$0xf]
    %v129 = vld [vmem:[#allocation2 + $0x168] sm:$0xff]
    %v130 = vld [vmem:[#allocation2 + $0x170] sm:$0xff]
    %v131 = vld [vmem:[#allocation2 + $0x178] sm:$0xf]
    %v132 = vld [vmem:[#allocation2 + $0x17c] sm:$0xff]
    %v133 = vld [vmem:[#allocation2 + $0x184] sm:$0xff]
    %v134 = vld [vmem:[#allocation2 + $0x18c] sm:$0xf]
    %v135 = vld [vmem:[#allocation2 + $0x190] sm:$0xff]
    %v136 = vld [vmem:[#allocation2 + $0x198] sm:$0xff]
    %v137 = vld [vmem:[#allocation2 + $0x1a0] sm:$0xf]
    %v138 = vld [vmem:[#allocation2 + $0x1a4] sm:$0xff]
    %v139 = vld [vmem:[#allocation2 + $0x1ac] sm:$0xff]
    %v140 = vld [vmem:[#allocation2 + $0x1b4] sm:$0xf]
    %v141 = vld [vmem:[#allocation2 + $0x1b8] sm:$0xff]
    %v142 = vld [vmem:[#allocation2 + $0x1c0] sm:$0xff]
    %v143 = vld [vmem:[#allocation2 + $0x1c8] sm:$0xf]
    %v144 = vld [vmem:[#allocation2 + $0x1cc] sm:$0xff]
    %v145 = vld [vmem:[#allocation2 + $0x1d4] sm:$0xff]
    %v146 = vld [vmem:[#allocation2 + $0x1dc] sm:$0xf]
    %v147 = vld [vmem:[#allocation2 + $0x1e0] sm:$0xff]
    %v148 = vld [vmem:[#allocation2 + $0x1e8] sm:$0xff]
    %v149 = vld [vmem:[#allocation2 + $0x1f0] sm:$0xf]
    %v150 = vld [vmem:[#allocation2 + $0x1f4] sm:$0xff]
    %v151 = vld [vmem:[#allocation2 + $0x1fc] sm:$0xff]
    %v152 = vld [vmem:[#allocation2 + $0x204] sm:$0xf]
    %v153 = vld [vmem:[#allocation2 + $0x208] sm:$0xff]
    %v154 = vld [vmem:[#allocation2 + $0x210] sm:$0xff]
    %v155 = vld [vmem:[#allocation2 + $0x218] sm:$0xf]
    %v156 = vld [vmem:[#allocation2 + $0x21c] sm:$0xff]
    %v157 = vld [vmem:[#allocation2 + $0x224] sm:$0xff]
    %v158 = vld [vmem:[#allocation2 + $0x22c] sm:$0xf]
    %v159 = vld [vmem:[#allocation2 + $0x230] sm:$0xff]
    %v160 = vld [vmem:[#allocation2 + $0x238] sm:$0xff]
    %v161 = vld [vmem:[#allocation2 + $0x240] sm:$0xf]
    %v162 = vld [vmem:[#allocation2 + $0x244] sm:$0xff]
    %v163 = vld [vmem:[#allocation2 + $0x24c] sm:$0xff]
    %v164 = vld [vmem:[#allocation2 + $0x254] sm:$0xf]
    %v165 = vld [vmem:[#allocation2 + $0x258] sm:$0xff]
    %v166 = vld [vmem:[#allocation2 + $0x260] sm:$0xff]
    %v167 = vld [vmem:[#allocation2 + $0x268] sm:$0xf]
    %v168 = vld [vmem:[#allocation2 + $0x26c] sm:$0xff]
    %v169 = vld [vmem:[#allocation2 + $0x274] sm:$0xff]
    %v170 = vld [vmem:[#allocation2 + $0x27c] sm:$0xf]
    %v171 = vld [vmem:[#allocation2 + $0x280] sm:$0xff]
    %v172 = vld [vmem:[#allocation2 + $0x288] sm:$0xff]
    %v173 = vld [vmem:[#allocation2 + $0x290] sm:$0xf]
    %v174 = vld [vmem:[#allocation2 + $0x294] sm:$0xff]
    %v175 = vld [vmem:[#allocation2 + $0x29c] sm:$0xff]
    %v176 = vld [vmem:[#allocation2 + $0x2a4] sm:$0xf]
    %v177 = vld [vmem:[#allocation2 + $0x2a8] sm:$0xff]
    %v178 = vld [vmem:[#allocation2 + $0x2b0] sm:$0xff]
    %v179 = vld [vmem:[#allocation2 + $0x2b8] sm:$0xf]
    %v180 = vld [vmem:[#allocation2 + $0x2bc] sm:$0xff]
    %v181 = vld [vmem:[#allocation2 + $0x2c4] sm:$0xff]
    %v182 = vld [vmem:[#allocation2 + $0x2cc] sm:$0xf]
    %v183 = vld [vmem:[#allocation2 + $0x2d0] sm:$0xff]
    %v184 = vld [vmem:[#allocation2 + $0x2d8] sm:$0xff]
    %v185 = vld [vmem:[#allocation2 + $0x2e0] sm:$0xf]
    %v186 = vld [vmem:[#allocation2 + $0x2e4] sm:$0xff]
    %v187 = vld [vmem:[#allocation2 + $0x2ec] sm:$0xff]
    %v188 = vld [vmem:[#allocation2 + $0x2f4] sm:$0xf]
    %v189 = vld [vmem:[#allocation2 + $0x2f8] sm:$0xff]
    %v190 = vld [vmem:[#allocation2 + $0x300] sm:$0xff]
    %v191 = vld [vmem:[#allocation2 + $0x308] sm:$0xf]
    %v192 = vld [vmem:[#allocation2 + $0x30c] sm:$0xff]
    %v193 = vld [vmem:[#allocation2 + $0x314] sm:$0xff]
    %v194 = vld [vmem:[#allocation2 + $0x31c] sm:$0xf]
    %v195 = vld [vmem:[#allocation2 + $0x320] sm:$0xff]
    %v196 = vld [vmem:[#allocation2 + $0x328] sm:$0xff]
    %v197 = vld [vmem:[#allocation2 + $0x330] sm:$0xf]
    %v198 = vld [vmem:[#allocation2 + $0x334] sm:$0xff]
    %v199 = vld [vmem:[#allocation2 + $0x33c] sm:$0xff]
    %v200 = vld [vmem:[#allocation2 + $0x344] sm:$0xf]
    %v201 = vld [vmem:[#allocation2 + $0x348] sm:$0xff]
    %v202 = vld [vmem:[#allocation2 + $0x350] sm:$0xff]
    %v203 = vld [vmem:[#allocation2 + $0x358] sm:$0xf]
    %v204 = vld [vmem:[#allocation2 + $0x35c] sm:$0xff]
    %v205 = vld [vmem:[#allocation2 + $0x364] sm:$0xff]
    %v206 = vld [vmem:[#allocation2 + $0x36c] sm:$0xf]
    %v207 = vld [vmem:[#allocation2 + $0x370] sm:$0xff]
    %v208 = vld [vmem:[#allocation2 + $0x378] sm:$0xff]
    %v209 = vld [vmem:[#allocation2 + $0x380] sm:$0xf]
    %v210 = vld [vmem:[#allocation2 + $0x384] sm:$0xff]
    %v211 = vld [vmem:[#allocation2 + $0x38c] sm:$0xff]
    %v212 = vld [vmem:[#allocation2 + $0x394] sm:$0xf]
    %v213 = vld [vmem:[#allocation2 + $0x398] sm:$0xff]
    %v214 = vld [vmem:[#allocation2 + $0x3a0] sm:$0xff]
    %v215 = vld [vmem:[#allocation2 + $0x3a8] sm:$0xf]
    %v216 = vld [vmem:[#allocation2 + $0x3ac] sm:$0xff]
    %v217 = vld [vmem:[#allocation2 + $0x3b4] sm:$0xff]
    %v218 = vld [vmem:[#allocation2 + $0x3bc] sm:$0xf]
    %v219 = vld [vmem:[#allocation2 + $0x3c0] sm:$0xff]
    %v220 = vld [vmem:[#allocation2 + $0x3c8] sm:$0xff]
    %v221 = vld [vmem:[#allocation2 + $0x3d0] sm:$0xf]
    %v222 = vld [vmem:[#allocation2 + $0x3d4] sm:$0xff]
    %v223 = vld [vmem:[#allocation2 + $0x3dc] sm:$0xff]
    %v224 = vld [vmem:[#allocation2 + $0x3e4] sm:$0xf]
    %v225 = vld [vmem:[#allocation2 + $0x3e8] sm:$0xff]
    %v226 = vld [vmem:[#allocation2 + $0x3f0] sm:$0xff]
    %v227 = vld [vmem:[#allocation2 + $0x3f8] sm:$0xf]
    %v228 = vld [vmem:[#allocation2 + $0x3fc] sm:$0xff]
    %v229 = vld [vmem:[#allocation2 + $0x404] sm:$0xff]
    %v230 = vld [vmem:[#allocation2 + $0x40c] sm:$0xf]
    %v231 = vld [vmem:[#allocation2 + $0x410] sm:$0xff]
    %v232 = vld [vmem:[#allocation2 + $0x418] sm:$0xff]
    %v233 = vld [vmem:[#allocation2 + $0x420] sm:$0xf]
    %v234 = vld [vmem:[#allocation2 + $0x424] sm:$0xff]
    %v235 = vld [vmem:[#allocation2 + $0x42c] sm:$0xff]
    %v236 = vld [vmem:[#allocation2 + $0x434] sm:$0xf]
    %v237 = vld [vmem:[#allocation2 + $0x438] sm:$0xff]
    %v238 = vld [vmem:[#allocation2 + $0x440] sm:$0xff]
    %v239 = vld [vmem:[#allocation2 + $0x448] sm:$0xf]
    %v240 = vld [vmem:[#allocation2 + $0x44c] sm:$0xff]
    %v241 = vld [vmem:[#allocation2 + $0x454] sm:$0xff]
    %v242 = vld [vmem:[#allocation2 + $0x45c] sm:$0xf]
    %v243 = vld [vmem:[#allocation2 + $0x460] sm:$0xff]
    %v244 = vld [vmem:[#allocation2 + $0x468] sm:$0xff]
    %v245 = vld [vmem:[#allocation2 + $0x470] sm:$0xf]
    %v246 = vld [vmem:[#allocation2 + $0x474] sm:$0xff]
    %v247 = vld [vmem:[#allocation2 + $0x47c] sm:$0xff]
    %v248 = vld [vmem:[#allocation2 + $0x484] sm:$0xf]
    %v249 = vld [vmem:[#allocation2 + $0x488] sm:$0xff]
    %v250 = vld [vmem:[#allocation2 + $0x490] sm:$0xff]
    %v251 = vld [vmem:[#allocation2 + $0x498] sm:$0xf]
    %v252 = vld [vmem:[#allocation2 + $0x49c] sm:$0xff]
    %v253 = vld [vmem:[#allocation2 + $0x4a4] sm:$0xff]
    %v254 = vld [vmem:[#allocation2 + $0x4ac] sm:$0xf]
    %v255 = vld [vmem:[#allocation2 + $0x4b0] sm:$0xff]
    %v256 = vld [vmem:[#allocation2 + $0x4b8] sm:$0xff]
    %v257 = vld [vmem:[#allocation2 + $0x4c0] sm:$0xf]
    %v258 = vld [vmem:[#allocation2 + $0x4c4] sm:$0xff]
    %v259 = vld [vmem:[#allocation2 + $0x4cc] sm:$0xff]
    %v260 = vld [vmem:[#allocation2 + $0x4d4] sm:$0xf]
    %v261 = vld [vmem:[#allocation2 + $0x4d8] sm:$0xff]
    %v262 = vld [vmem:[#allocation2 + $0x4e0] sm:$0xff]
    %v263 = vld [vmem:[#allocation2 + $0x4e8] sm:$0xf]
    %v264 = vld [vmem:[#allocation2 + $0x4ec] sm:$0xff]
    %v265 = vld [vmem:[#allocation2 + $0x4f4] sm:$0xff]
    %v266 = vld [vmem:[#allocation2 + $0x4fc] sm:$0xf]
    %v267 = vld [vmem:[#allocation2 + $0x500] sm:$0xff]
    %v268 = vld [vmem:[#allocation2 + $0x508] sm:$0xff]
    %v269 = vld [vmem:[#allocation2 + $0x510] sm:$0xf]
    %v270 = vld [vmem:[#allocation2 + $0x514] sm:$0xff]
    %v271 = vld [vmem:[#allocation2 + $0x51c] sm:$0xff]
    %v272 = vld [vmem:[#allocation2 + $0x524] sm:$0xf]
    %v273 = vld [vmem:[#allocation2 + $0x528] sm:$0xff]
    %v274 = vld [vmem:[#allocation2 + $0x530] sm:$0xff]
    %v275 = vld [vmem:[#allocation2 + $0x538] sm:$0xf]
    %v276 = vld [vmem:[#allocation2 + $0x53c] sm:$0xff]
    %v277 = vld [vmem:[#allocation2 + $0x544] sm:$0xff]
    %v278 = vld [vmem:[#allocation2 + $0x54c] sm:$0xf]
    %v279 = vld [vmem:[#allocation2 + $0x550] sm:$0xff]
    %v280 = vld [vmem:[#allocation2 + $0x558] sm:$0xff]
    %v281 = vld [vmem:[#allocation2 + $0x560] sm:$0xf]
    %v282 = vld [vmem:[#allocation2 + $0x564] sm:$0xff]
    %v283 = vld [vmem:[#allocation2 + $0x56c] sm:$0xff]
    %v284 = vld [vmem:[#allocation2 + $0x574] sm:$0xf]
    %v285 = vld [vmem:[#allocation2 + $0x578] sm:$0xff]
    %v286 = vld [vmem:[#allocation2 + $0x580] sm:$0xff]
    %v287 = vld [vmem:[#allocation2 + $0x588] sm:$0xf]
    %v288 = vld [vmem:[#allocation2 + $0x58c] sm:$0xff]
    %v289 = vld [vmem:[#allocation2 + $0x594] sm:$0xff]
    %v290 = vld [vmem:[#allocation2 + $0x59c] sm:$0xf]
    %v291 = vld [vmem:[#allocation2 + $0x5a0] sm:$0xff]
    %v292 = vld [vmem:[#allocation2 + $0x5a8] sm:$0xff]
    %v293 = vld [vmem:[#allocation2 + $0x5b0] sm:$0xf]
    %v294 = vld [vmem:[#allocation2 + $0x5b4] sm:$0xff]
    %v295 = vld [vmem:[#allocation2 + $0x5bc] sm:$0xff]
    %v296 = vld [vmem:[#allocation2 + $0x5c4] sm:$0xf]
    %v297 = vld [vmem:[#allocation2 + $0x5c8] sm:$0xff]
    %v298 = vld [vmem:[#allocation2 + $0x5d0] sm:$0xff]
    %v299 = vld [vmem:[#allocation2 + $0x5d8] sm:$0xf]
    %v300 = vld [vmem:[#allocation2 + $0x5dc] sm:$0xff]
    %v301 = vld [vmem:[#allocation2 + $0x5e4] sm:$0xff]
    %v302 = vld [vmem:[#allocation2 + $0x5ec] sm:$0xf]
    %v303 = vld [vmem:[#allocation2 + $0x5f0] sm:$0xff]
    %v304 = vld [vmem:[#allocation2 + $0x5f8] sm:$0xff]
    %v305 = vld [vmem:[#allocation2 + $0x600] sm:$0xf]
    %v306 = vld [vmem:[#allocation2 + $0x604] sm:$0xff]
    %v307 = vld [vmem:[#allocation2 + $0x60c] sm:$0xff]
    %v308 = vld [vmem:[#allocation2 + $0x614] sm:$0xf]
    %v309 = vld [vmem:[#allocation2 + $0x618] sm:$0xff]
    %v310 = vld [vmem:[#allocation2 + $0x620] sm:$0xff]
    %v311 = vld [vmem:[#allocation2 + $0x628] sm:$0xf]
    %v312 = vld [vmem:[#allocation2 + $0x62c] sm:$0xff]
    %v313 = vld [vmem:[#allocation2 + $0x634] sm:$0xff]
    %v314 = vld [vmem:[#allocation2 + $0x63c] sm:$0xf]
    %v315 = vld [vmem:[#allocation2 + $0x640] sm:$0xff]
    %v316 = vld [vmem:[#allocation2 + $0x648] sm:$0xff]
    %v317 = vld [vmem:[#allocation2 + $0x650] sm:$0xf]
    %v318 = vld [vmem:[#allocation2 + $0x654] sm:$0xff]
    %v319 = vld [vmem:[#allocation2 + $0x65c] sm:$0xff]
    %v320 = vld [vmem:[#allocation2 + $0x664] sm:$0xf]
    %v321 = vld [vmem:[#allocation2 + $0x668] sm:$0xff]
    %v322 = vld [vmem:[#allocation2 + $0x670] sm:$0xff]
    %v323 = vld [vmem:[#allocation2 + $0x678] sm:$0xf]
    %v324 = vld [vmem:[#allocation2 + $0x67c] sm:$0xff]
    %v325 = vld [vmem:[#allocation2 + $0x684] sm:$0xff]
    %v326 = vld [vmem:[#allocation2 + $0x68c] sm:$0xf]
    %v327 = vld [vmem:[#allocation2 + $0x690] sm:$0xff]
    %v328 = vld [vmem:[#allocation2 + $0x698] sm:$0xff]
    %v329 = vld [vmem:[#allocation2 + $0x6a0] sm:$0xf]
    %v330 = vld [vmem:[#allocation2 + $0x6a4] sm:$0xff]
    %v331 = vld [vmem:[#allocation2 + $0x6ac] sm:$0xff]
    %v332 = vld [vmem:[#allocation2 + $0x6b4] sm:$0xf]
    %v333 = vld [vmem:[#allocation2 + $0x6b8] sm:$0xff]
    %v334 = vld [vmem:[#allocation2 + $0x6c0] sm:$0xff]
    %v335 = vld [vmem:[#allocation2 + $0x6c8] sm:$0xf]
    %v336 = vld [vmem:[#allocation2 + $0x6cc] sm:$0xff]
    %v337 = vld [vmem:[#allocation2 + $0x6d4] sm:$0xff]
    %v338 = vld [vmem:[#allocation2 + $0x6dc] sm:$0xf]
    %v339 = vld [vmem:[#allocation2 + $0x6e0] sm:$0xff]
    %v340 = vld [vmem:[#allocation2 + $0x6e8] sm:$0xff]
    %v341 = vld [vmem:[#allocation2 + $0x6f0] sm:$0xf]
    %v342 = vld [vmem:[#allocation2 + $0x6f4] sm:$0xff]
    %v343 = vld [vmem:[#allocation2 + $0x6fc] sm:$0xff]
    %v344 = vld [vmem:[#allocation2 + $0x704] sm:$0xf]
    %v345 = vld [vmem:[#allocation2 + $0x708] sm:$0xff]
    %v346 = vld [vmem:[#allocation2 + $0x710] sm:$0xff]
    %v347 = vld [vmem:[#allocation2 + $0x718] sm:$0xf]
    %v348 = vld [vmem:[#allocation2 + $0x71c] sm:$0xff]
    %v349 = vld [vmem:[#allocation2 + $0x724] sm:$0xff]
    %v350 = vld [vmem:[#allocation2 + $0x72c] sm:$0xf]
    %v351 = vld [vmem:[#allocation2 + $0x730] sm:$0xff]
    %v352 = vld [vmem:[#allocation2 + $0x738] sm:$0xff]
    %v353 = vld [vmem:[#allocation2 + $0x740] sm:$0xf]
    %v354 = vld [vmem:[#allocation2 + $0x744] sm:$0xff]
    %v355 = vld [vmem:[#allocation2 + $0x74c] sm:$0xff]
    %v356 = vld [vmem:[#allocation2 + $0x754] sm:$0xf]
    %v357 = vld [vmem:[#allocation2 + $0x758] sm:$0xff]
    %v358 = vld [vmem:[#allocation2 + $0x760] sm:$0xff]
    %v359 = vld [vmem:[#allocation2 + $0x768] sm:$0xf]
    %v360 = vld [vmem:[#allocation2 + $0x76c] sm:$0xff]
    %v361 = vld [vmem:[#allocation2 + $0x774] sm:$0xff]
    %v362 = vld [vmem:[#allocation2 + $0x77c] sm:$0xf]
    %v363 = vld [vmem:[#allocation2 + $0x780] sm:$0xff]
    %v364 = vld [vmem:[#allocation2 + $0x788] sm:$0xff]
    %v365 = vld [vmem:[#allocation2 + $0x790] sm:$0xf]
    %v366 = vld [vmem:[#allocation2 + $0x794] sm:$0xff]
    %v367 = vld [vmem:[#allocation2 + $0x79c] sm:$0xff]
    %v368 = vld [vmem:[#allocation2 + $0x7a4] sm:$0xf]
    %v369 = vld [vmem:[%s2] sm:$0x1f]
    %v371 = vlaneseq
    %v372 = vshrl.u32 %v371, 7
    %v373 = vsub.s32 0, %v372
    %v374 = vrot.slane %v369, %v373
    %v375 = vlaneseq
    %v376 = vshrl.u32 %v375, 7
    %v377 = vsub.s32 1, %v376
    %v378 = vrot.slane %v369, %v377
    %v379 = vlaneseq
    %v380 = vshrl.u32 %v379, 7
    %v381 = vsub.s32 2, %v380
    %v382 = vrot.slane %v369, %v381
    %v383 = vlaneseq
    %v384 = vshrl.u32 %v383, 7
    %v385 = vsub.s32 3, %v384
    %v386 = vrot.slane %v369, %v385
    %v387 = vlaneseq
    %v388 = vshrl.u32 %v387, 7
    %v389 = vsub.s32 4, %v388
    %v390 = vrot.slane %v369, %v389
    %v404 = vunpack.c.l.b16 %v67
    %v405 = vunpack.c.h.b16 %v67
    %v406 = vunpack.c.l.b16 %v68
    %v407 = vunpack.c.h.b16 %v68
    %v408 = vunpack.c.l.b16 %v69
    %v409 = vunpack.c.h.b16 %v69
    %v410 = vunpack.c.l.b16 %v70
    %v411 = vunpack.c.l.b16 %v71
    %v412 = vunpack.c.h.b16 %v71
    %v413 = vunpack.c.l.b16 %v72
    %v414 = vunpack.c.h.b16 %v72
    %v415 = vunpack.c.l.b16 %v73
    %v416 = vunpack.c.h.b16 %v73
    %v417 = vunpack.c.l.b16 %v74
    %v418 = vpack.c.b16 %v411, %v404
    %v419 = vpack.c.b16 %v412, %v405
    %v420 = vpack.c.b16 %v413, %v406
    %v421 = vpack.c.b16 %v414, %v407
    %v422 = vpack.c.b16 %v415, %v408
    %v423 = vpack.c.b16 %v416, %v409
    %v424 = vpack.c.b16 %v417, %v410
    %v725 = vunpack.c.l.b16 %v75
    %v726 = vunpack.c.h.b16 %v75
    %v727 = vunpack.c.l.b16 %v76
    %v728 = vunpack.c.h.b16 %v76
    %v729 = vunpack.c.l.b16 %v77
    %v730 = vunpack.c.l.b16 %v78
    %v731 = vunpack.c.h.b16 %v78
    %v732 = vunpack.c.l.b16 %v79
    %v733 = vunpack.c.h.b16 %v79
    %v734 = vunpack.c.l.b16 %v80
    %v735 = vunpack.c.l.b16 %v81
    %v736 = vunpack.c.h.b16 %v81
    %v737 = vunpack.c.l.b16 %v82
    %v738 = vunpack.c.h.b16 %v82
    %v739 = vunpack.c.l.b16 %v83
    %v740 = vunpack.c.l.b16 %v84
    %v741 = vunpack.c.h.b16 %v84
    %v742 = vunpack.c.l.b16 %v85
    %v743 = vunpack.c.h.b16 %v85
    %v744 = vunpack.c.l.b16 %v86
    %v745 = vunpack.c.l.b16 %v87
    %v746 = vunpack.c.h.b16 %v87
    %v747 = vunpack.c.l.b16 %v88
    %v748 = vunpack.c.h.b16 %v88
    %v749 = vunpack.c.l.b16 %v89
    %v750 = vunpack.c.l.b16 %v90
    %v751 = vunpack.c.h.b16 %v90
    %v752 = vunpack.c.l.b16 %v91
    %v753 = vunpack.c.h.b16 %v91
    %v754 = vunpack.c.l.b16 %v92
    %v755 = vunpack.c.l.b16 %v93
    %v756 = vunpack.c.h.b16 %v93
    %v757 = vunpack.c.l.b16 %v94
    %v758 = vunpack.c.h.b16 %v94
    %v759 = vunpack.c.l.b16 %v95
    %v760 = vunpack.c.l.b16 %v96
    %v761 = vunpack.c.h.b16 %v96
    %v762 = vunpack.c.l.b16 %v97
    %v763 = vunpack.c.h.b16 %v97
    %v764 = vunpack.c.l.b16 %v98
    %v765 = vunpack.c.l.b16 %v99
    %v766 = vunpack.c.h.b16 %v99
    %v767 = vunpack.c.l.b16 %v100
    %v768 = vunpack.c.h.b16 %v100
    %v769 = vunpack.c.l.b16 %v101
    %v770 = vunpack.c.l.b16 %v102
    %v771 = vunpack.c.h.b16 %v102
    %v772 = vunpack.c.l.b16 %v103
    %v773 = vunpack.c.h.b16 %v103
    %v774 = vunpack.c.l.b16 %v104
    %v775 = vunpack.c.l.b16 %v105
    %v776 = vunpack.c.h.b16 %v105
    %v777 = vunpack.c.l.b16 %v106
    %v778 = vunpack.c.h.b16 %v106
    %v779 = vunpack.c.l.b16 %v107
    %v780 = vunpack.c.l.b16 %v108
    %v781 = vunpack.c.h.b16 %v108
    %v782 = vunpack.c.l.b16 %v109
    %v783 = vunpack.c.h.b16 %v109
    %v784 = vunpack.c.l.b16 %v110
    %v785 = vunpack.c.l.b16 %v111
    %v786 = vunpack.c.h.b16 %v111
    %v787 = vunpack.c.l.b16 %v112
    %v788 = vunpack.c.h.b16 %v112
    %v789 = vunpack.c.l.b16 %v113
    %v790 = vunpack.c.l.b16 %v114
    %v791 = vunpack.c.h.b16 %v114
    %v792 = vunpack.c.l.b16 %v115
    %v793 = vunpack.c.h.b16 %v115
    %v794 = vunpack.c.l.b16 %v116
    %v795 = vunpack.c.l.b16 %v117
    %v796 = vunpack.c.h.b16 %v117
    %v797 = vunpack.c.l.b16 %v118
    %v798 = vunpack.c.h.b16 %v118
    %v799 = vunpack.c.l.b16 %v119
    %v800 = vunpack.c.l.b16 %v120
    %v801 = vunpack.c.h.b16 %v120
    %v802 = vunpack.c.l.b16 %v121
    %v803 = vunpack.c.h.b16 %v121
    %v804 = vunpack.c.l.b16 %v122
    %v805 = vunpack.c.l.b16 %v123
    %v806 = vunpack.c.h.b16 %v123
    %v807 = vunpack.c.l.b16 %v124
    %v808 = vunpack.c.h.b16 %v124
    %v809 = vunpack.c.l.b16 %v125
    %v810 = vunpack.c.l.b16 %v126
    %v811 = vunpack.c.h.b16 %v126
    %v812 = vunpack.c.l.b16 %v127
    %v813 = vunpack.c.h.b16 %v127
    %v814 = vunpack.c.l.b16 %v128
    %v815 = vunpack.c.l.b16 %v129
    %v816 = vunpack.c.h.b16 %v129
    %v817 = vunpack.c.l.b16 %v130
    %v818 = vunpack.c.h.b16 %v130
    %v819 = vunpack.c.l.b16 %v131
    %v820 = vunpack.c.l.b16 %v132
    %v821 = vunpack.c.h.b16 %v132
    %v822 = vunpack.c.l.b16 %v133
    %v823 = vunpack.c.h.b16 %v133
    %v824 = vunpack.c.l.b16 %v134
    %v825 = vunpack.c.l.b16 %v135
    %v826 = vunpack.c.h.b16 %v135
    %v827 = vunpack.c.l.b16 %v136
    %v828 = vunpack.c.h.b16 %v136
    %v829 = vunpack.c.l.b16 %v137
    %v830 = vunpack.c.l.b16 %v138
    %v831 = vunpack.c.h.b16 %v138
    %v832 = vunpack.c.l.b16 %v139
    %v833 = vunpack.c.h.b16 %v139
    %v834 = vunpack.c.l.b16 %v140
    %v835 = vunpack.c.l.b16 %v141
    %v836 = vunpack.c.h.b16 %v141
    %v837 = vunpack.c.l.b16 %v142
    %v838 = vunpack.c.h.b16 %v142
    %v839 = vunpack.c.l.b16 %v143
    %v840 = vunpack.c.l.b16 %v144
    %v841 = vunpack.c.h.b16 %v144
    %v842 = vunpack.c.l.b16 %v145
    %v843 = vunpack.c.h.b16 %v145
    %v844 = vunpack.c.l.b16 %v146
    %v845 = vunpack.c.l.b16 %v147
    %v846 = vunpack.c.h.b16 %v147
    %v847 = vunpack.c.l.b16 %v148
    %v848 = vunpack.c.h.b16 %v148
    %v849 = vunpack.c.l.b16 %v149
    %v850 = vunpack.c.l.b16 %v150
    %v851 = vunpack.c.h.b16 %v150
    %v852 = vunpack.c.l.b16 %v151
    %v853 = vunpack.c.h.b16 %v151
    %v854 = vunpack.c.l.b16 %v152
    %v855 = vunpack.c.l.b16 %v153
    %v856 = vunpack.c.h.b16 %v153
    %v857 = vunpack.c.l.b16 %v154
    %v858 = vunpack.c.h.b16 %v154
    %v859 = vunpack.c.l.b16 %v155
    %v860 = vunpack.c.l.b16 %v156
    %v861 = vunpack.c.h.b16 %v156
    %v862 = vunpack.c.l.b16 %v157
    %v863 = vunpack.c.h.b16 %v157
    %v864 = vunpack.c.l.b16 %v158
    %v865 = vunpack.c.l.b16 %v159
    %v866 = vunpack.c.h.b16 %v159
    %v867 = vunpack.c.l.b16 %v160
    %v868 = vunpack.c.h.b16 %v160
    %v869 = vunpack.c.l.b16 %v161
    %v870 = vunpack.c.l.b16 %v162
    %v871 = vunpack.c.h.b16 %v162
    %v872 = vunpack.c.l.b16 %v163
    %v873 = vunpack.c.h.b16 %v163
    %v874 = vunpack.c.l.b16 %v164
    %v875 = vunpack.c.l.b16 %v165
    %v876 = vunpack.c.h.b16 %v165
    %v877 = vunpack.c.l.b16 %v166
    %v878 = vunpack.c.h.b16 %v166
    %v879 = vunpack.c.l.b16 %v167
    %v880 = vunpack.c.l.b16 %v168
    %v881 = vunpack.c.h.b16 %v168
    %v882 = vunpack.c.l.b16 %v169
    %v883 = vunpack.c.h.b16 %v169
    %v884 = vunpack.c.l.b16 %v170
    %v885 = vunpack.c.l.b16 %v171
    %v886 = vunpack.c.h.b16 %v171
    %v887 = vunpack.c.l.b16 %v172
    %v888 = vunpack.c.h.b16 %v172
    %v889 = vunpack.c.l.b16 %v173
    %v890 = vunpack.c.l.b16 %v174
    %v891 = vunpack.c.h.b16 %v174
    %v892 = vunpack.c.l.b16 %v175
    %v893 = vunpack.c.h.b16 %v175
    %v894 = vunpack.c.l.b16 %v176
    %v895 = vunpack.c.l.b16 %v177
    %v896 = vunpack.c.h.b16 %v177
    %v897 = vunpack.c.l.b16 %v178
    %v898 = vunpack.c.h.b16 %v178
    %v899 = vunpack.c.l.b16 %v179
    %v900 = vunpack.c.l.b16 %v180
    %v901 = vunpack.c.h.b16 %v180
    %v902 = vunpack.c.l.b16 %v181
    %v903 = vunpack.c.h.b16 %v181
    %v904 = vunpack.c.l.b16 %v182
    %v905 = vunpack.c.l.b16 %v183
    %v906 = vunpack.c.h.b16 %v183
    %v907 = vunpack.c.l.b16 %v184
    %v908 = vunpack.c.h.b16 %v184
    %v909 = vunpack.c.l.b16 %v185
    %v910 = vunpack.c.l.b16 %v186
    %v911 = vunpack.c.h.b16 %v186
    %v912 = vunpack.c.l.b16 %v187
    %v913 = vunpack.c.h.b16 %v187
    %v914 = vunpack.c.l.b16 %v188
    %v915 = vunpack.c.l.b16 %v189
    %v916 = vunpack.c.h.b16 %v189
    %v917 = vunpack.c.l.b16 %v190
    %v918 = vunpack.c.h.b16 %v190
    %v919 = vunpack.c.l.b16 %v191
    %v920 = vunpack.c.l.b16 %v192
    %v921 = vunpack.c.h.b16 %v192
    %v922 = vunpack.c.l.b16 %v193
    %v923 = vunpack.c.h.b16 %v193
    %v924 = vunpack.c.l.b16 %v194
    %v925 = vunpack.c.l.b16 %v195
    %v926 = vunpack.c.h.b16 %v195
    %v927 = vunpack.c.l.b16 %v196
    %v928 = vunpack.c.h.b16 %v196
    %v929 = vunpack.c.l.b16 %v197
    %v930 = vunpack.c.l.b16 %v198
    %v931 = vunpack.c.h.b16 %v198
    %v932 = vunpack.c.l.b16 %v199
    %v933 = vunpack.c.h.b16 %v199
    %v934 = vunpack.c.l.b16 %v200
    %v935 = vunpack.c.l.b16 %v201
    %v936 = vunpack.c.h.b16 %v201
    %v937 = vunpack.c.l.b16 %v202
    %v938 = vunpack.c.h.b16 %v202
    %v939 = vunpack.c.l.b16 %v203
    %v940 = vunpack.c.l.b16 %v204
    %v941 = vunpack.c.h.b16 %v204
    %v942 = vunpack.c.l.b16 %v205
    %v943 = vunpack.c.h.b16 %v205
    %v944 = vunpack.c.l.b16 %v206
    %v945 = vunpack.c.l.b16 %v207
    %v946 = vunpack.c.h.b16 %v207
    %v947 = vunpack.c.l.b16 %v208
    %v948 = vunpack.c.h.b16 %v208
    %v949 = vunpack.c.l.b16 %v209
    %v950 = vunpack.c.l.b16 %v210
    %v951 = vunpack.c.h.b16 %v210
    %v952 = vunpack.c.l.b16 %v211
    %v953 = vunpack.c.h.b16 %v211
    %v954 = vunpack.c.l.b16 %v212
    %v955 = vunpack.c.l.b16 %v213
    %v956 = vunpack.c.h.b16 %v213
    %v957 = vunpack.c.l.b16 %v214
    %v958 = vunpack.c.h.b16 %v214
    %v959 = vunpack.c.l.b16 %v215
    %v960 = vunpack.c.l.b16 %v216
    %v961 = vunpack.c.h.b16 %v216
    %v962 = vunpack.c.l.b16 %v217
    %v963 = vunpack.c.h.b16 %v217
    %v964 = vunpack.c.l.b16 %v218
    %v965 = vunpack.c.l.b16 %v219
    %v966 = vunpack.c.h.b16 %v219
    %v967 = vunpack.c.l.b16 %v220
    %v968 = vunpack.c.h.b16 %v220
    %v969 = vunpack.c.l.b16 %v221
    %v970 = vunpack.c.l.b16 %v222
    %v971 = vunpack.c.h.b16 %v222
    %v972 = vunpack.c.l.b16 %v223
    %v973 = vunpack.c.h.b16 %v223
    %v974 = vunpack.c.l.b16 %v224
    %v975 = vunpack.c.l.b16 %v225
    %v976 = vunpack.c.h.b16 %v225
    %v977 = vunpack.c.l.b16 %v226
    %v978 = vunpack.c.h.b16 %v226
    %v979 = vunpack.c.l.b16 %v227
    %v980 = vunpack.c.l.b16 %v228
    %v981 = vunpack.c.h.b16 %v228
    %v982 = vunpack.c.l.b16 %v229
    %v983 = vunpack.c.h.b16 %v229
    %v984 = vunpack.c.l.b16 %v230
    %v985 = vunpack.c.l.b16 %v231
    %v986 = vunpack.c.h.b16 %v231
    %v987 = vunpack.c.l.b16 %v232
    %v988 = vunpack.c.h.b16 %v232
    %v989 = vunpack.c.l.b16 %v233
    %v990 = vunpack.c.l.b16 %v234
    %v991 = vunpack.c.h.b16 %v234
    %v992 = vunpack.c.l.b16 %v235
    %v993 = vunpack.c.h.b16 %v235
    %v994 = vunpack.c.l.b16 %v236
    %v995 = vunpack.c.l.b16 %v237
    %v996 = vunpack.c.h.b16 %v237
    %v997 = vunpack.c.l.b16 %v238
    %v998 = vunpack.c.h.b16 %v238
    %v999 = vunpack.c.l.b16 %v239
    %v1000 = vunpack.c.l.b16 %v240
    %v1001 = vunpack.c.h.b16 %v240
    %v1002 = vunpack.c.l.b16 %v241
    %v1003 = vunpack.c.h.b16 %v241
    %v1004 = vunpack.c.l.b16 %v242
    %v1005 = vunpack.c.l.b16 %v243
    %v1006 = vunpack.c.h.b16 %v243
    %v1007 = vunpack.c.l.b16 %v244
    %v1008 = vunpack.c.h.b16 %v244
    %v1009 = vunpack.c.l.b16 %v245
    %v1010 = vunpack.c.l.b16 %v246
    %v1011 = vunpack.c.h.b16 %v246
    %v1012 = vunpack.c.l.b16 %v247
    %v1013 = vunpack.c.h.b16 %v247
    %v1014 = vunpack.c.l.b16 %v248
    %v1015 = vunpack.c.l.b16 %v249
    %v1016 = vunpack.c.h.b16 %v249
    %v1017 = vunpack.c.l.b16 %v250
    %v1018 = vunpack.c.h.b16 %v250
    %v1019 = vunpack.c.l.b16 %v251
    %v1020 = vunpack.c.l.b16 %v252
    %v1021 = vunpack.c.h.b16 %v252
    %v1022 = vunpack.c.l.b16 %v253
    %v1023 = vunpack.c.h.b16 %v253
    %v1024 = vunpack.c.l.b16 %v254
    %v1025 = vunpack.c.l.b16 %v255
    %v1026 = vunpack.c.h.b16 %v255
    %v1027 = vunpack.c.l.b16 %v256
    %v1028 = vunpack.c.h.b16 %v256
    %v1029 = vunpack.c.l.b16 %v257
    %v1030 = vunpack.c.l.b16 %v258
    %v1031 = vunpack.c.h.b16 %v258
    %v1032 = vunpack.c.l.b16 %v259
    %v1033 = vunpack.c.h.b16 %v259
    %v1034 = vunpack.c.l.b16 %v260
    %v1035 = vunpack.c.l.b16 %v261
    %v1036 = vunpack.c.h.b16 %v261
    %v1037 = vunpack.c.l.b16 %v262
    %v1038 = vunpack.c.h.b16 %v262
    %v1039 = vunpack.c.l.b16 %v263
    %v1040 = vunpack.c.l.b16 %v264
    %v1041 = vunpack.c.h.b16 %v264
    %v1042 = vunpack.c.l.b16 %v265
    %v1043 = vunpack.c.h.b16 %v265
    %v1044 = vunpack.c.l.b16 %v266
    %v1045 = vunpack.c.l.b16 %v267
    %v1046 = vunpack.c.h.b16 %v267
    %v1047 = vunpack.c.l.b16 %v268
    %v1048 = vunpack.c.h.b16 %v268
    %v1049 = vunpack.c.l.b16 %v269
    %v1050 = vunpack.c.l.b16 %v270
    %v1051 = vunpack.c.h.b16 %v270
    %v1052 = vunpack.c.l.b16 %v271
    %v1053 = vunpack.c.h.b16 %v271
    %v1054 = vunpack.c.l.b16 %v272
    %v1055 = vunpack.c.l.b16 %v273
    %v1056 = vunpack.c.h.b16 %v273
    %v1057 = vunpack.c.l.b16 %v274
    %v1058 = vunpack.c.h.b16 %v274
    %v1059 = vunpack.c.l.b16 %v275
    %v1060 = vunpack.c.l.b16 %v276
    %v1061 = vunpack.c.h.b16 %v276
    %v1062 = vunpack.c.l.b16 %v277
    %v1063 = vunpack.c.h.b16 %v277
    %v1064 = vunpack.c.l.b16 %v278
    %v1065 = vunpack.c.l.b16 %v279
    %v1066 = vunpack.c.h.b16 %v279
    %v1067 = vunpack.c.l.b16 %v280
    %v1068 = vunpack.c.h.b16 %v280
    %v1069 = vunpack.c.l.b16 %v281
    %v1070 = vunpack.c.l.b16 %v282
    %v1071 = vunpack.c.h.b16 %v282
    %v1072 = vunpack.c.l.b16 %v283
    %v1073 = vunpack.c.h.b16 %v283
    %v1074 = vunpack.c.l.b16 %v284
    %v1075 = vunpack.c.l.b16 %v285
    %v1076 = vunpack.c.h.b16 %v285
    %v1077 = vunpack.c.l.b16 %v286
    %v1078 = vunpack.c.h.b16 %v286
    %v1079 = vunpack.c.l.b16 %v287
    %v1080 = vunpack.c.l.b16 %v288
    %v1081 = vunpack.c.h.b16 %v288
    %v1082 = vunpack.c.l.b16 %v289
    %v1083 = vunpack.c.h.b16 %v289
    %v1084 = vunpack.c.l.b16 %v290
    %v1085 = vunpack.c.l.b16 %v291
    %v1086 = vunpack.c.h.b16 %v291
    %v1087 = vunpack.c.l.b16 %v292
    %v1088 = vunpack.c.h.b16 %v292
    %v1089 = vunpack.c.l.b16 %v293
    %v1090 = vunpack.c.l.b16 %v294
    %v1091 = vunpack.c.h.b16 %v294
    %v1092 = vunpack.c.l.b16 %v295
    %v1093 = vunpack.c.h.b16 %v295
    %v1094 = vunpack.c.l.b16 %v296
    %v1095 = vunpack.c.l.b16 %v297
    %v1096 = vunpack.c.h.b16 %v297
    %v1097 = vunpack.c.l.b16 %v298
    %v1098 = vunpack.c.h.b16 %v298
    %v1099 = vunpack.c.l.b16 %v299
    %v1100 = vunpack.c.l.b16 %v300
    %v1101 = vunpack.c.h.b16 %v300
    %v1102 = vunpack.c.l.b16 %v301
    %v1103 = vunpack.c.h.b16 %v301
    %v1104 = vunpack.c.l.b16 %v302
    %v1105 = vunpack.c.l.b16 %v303
    %v1106 = vunpack.c.h.b16 %v303
    %v1107 = vunpack.c.l.b16 %v304
    %v1108 = vunpack.c.h.b16 %v304
    %v1109 = vunpack.c.l.b16 %v305
    %v1110 = vunpack.c.l.b16 %v306
    %v1111 = vunpack.c.h.b16 %v306
    %v1112 = vunpack.c.l.b16 %v307
    %v1113 = vunpack.c.h.b16 %v307
    %v1114 = vunpack.c.l.b16 %v308
    %v1115 = vunpack.c.l.b16 %v309
    %v1116 = vunpack.c.h.b16 %v309
    %v1117 = vunpack.c.l.b16 %v310
    %v1118 = vunpack.c.h.b16 %v310
    %v1119 = vunpack.c.l.b16 %v311
    %v1120 = vunpack.c.l.b16 %v312
    %v1121 = vunpack.c.h.b16 %v312
    %v1122 = vunpack.c.l.b16 %v313
    %v1123 = vunpack.c.h.b16 %v313
    %v1124 = vunpack.c.l.b16 %v314
    %v1125 = vunpack.c.l.b16 %v315
    %v1126 = vunpack.c.h.b16 %v315
    %v1127 = vunpack.c.l.b16 %v316
    %v1128 = vunpack.c.h.b16 %v316
    %v1129 = vunpack.c.l.b16 %v317
    %v1130 = vunpack.c.l.b16 %v318
    %v1131 = vunpack.c.h.b16 %v318
    %v1132 = vunpack.c.l.b16 %v319
    %v1133 = vunpack.c.h.b16 %v319
    %v1134 = vunpack.c.l.b16 %v320
    %v1135 = vunpack.c.l.b16 %v321
    %v1136 = vunpack.c.h.b16 %v321
    %v1137 = vunpack.c.l.b16 %v322
    %v1138 = vunpack.c.h.b16 %v322
    %v1139 = vunpack.c.l.b16 %v323
    %v1140 = vunpack.c.l.b16 %v324
    %v1141 = vunpack.c.h.b16 %v324
    %v1142 = vunpack.c.l.b16 %v325
    %v1143 = vunpack.c.h.b16 %v325
    %v1144 = vunpack.c.l.b16 %v326
    %v1145 = vunpack.c.l.b16 %v327
    %v1146 = vunpack.c.h.b16 %v327
    %v1147 = vunpack.c.l.b16 %v328
    %v1148 = vunpack.c.h.b16 %v328
    %v1149 = vunpack.c.l.b16 %v329
    %v1150 = vunpack.c.l.b16 %v330
    %v1151 = vunpack.c.h.b16 %v330
    %v1152 = vunpack.c.l.b16 %v331
    %v1153 = vunpack.c.h.b16 %v331
    %v1154 = vunpack.c.l.b16 %v332
    %v1155 = vunpack.c.l.b16 %v333
    %v1156 = vunpack.c.h.b16 %v333
    %v1157 = vunpack.c.l.b16 %v334
    %v1158 = vunpack.c.h.b16 %v334
    %v1159 = vunpack.c.l.b16 %v335
    %v1160 = vunpack.c.l.b16 %v336
    %v1161 = vunpack.c.h.b16 %v336
    %v1162 = vunpack.c.l.b16 %v337
    %v1163 = vunpack.c.h.b16 %v337
    %v1164 = vunpack.c.l.b16 %v338
    %v1165 = vunpack.c.l.b16 %v339
    %v1166 = vunpack.c.h.b16 %v339
    %v1167 = vunpack.c.l.b16 %v340
    %v1168 = vunpack.c.h.b16 %v340
    %v1169 = vunpack.c.l.b16 %v341
    %v1170 = vunpack.c.l.b16 %v342
    %v1171 = vunpack.c.h.b16 %v342
    %v1172 = vunpack.c.l.b16 %v343
    %v1173 = vunpack.c.h.b16 %v343
    %v1174 = vunpack.c.l.b16 %v344
    %v1175 = vunpack.c.l.b16 %v345
    %v1176 = vunpack.c.h.b16 %v345
    %v1177 = vunpack.c.l.b16 %v346
    %v1178 = vunpack.c.h.b16 %v346
    %v1179 = vunpack.c.l.b16 %v347
    %v1180 = vunpack.c.l.b16 %v348
    %v1181 = vunpack.c.h.b16 %v348
    %v1182 = vunpack.c.l.b16 %v349
    %v1183 = vunpack.c.h.b16 %v349
    %v1184 = vunpack.c.l.b16 %v350
    %v1185 = vunpack.c.l.b16 %v351
    %v1186 = vunpack.c.h.b16 %v351
    %v1187 = vunpack.c.l.b16 %v352
    %v1188 = vunpack.c.h.b16 %v352
    %v1189 = vunpack.c.l.b16 %v353
    %v1190 = vunpack.c.l.b16 %v354
    %v1191 = vunpack.c.h.b16 %v354
    %v1192 = vunpack.c.l.b16 %v355
    %v1193 = vunpack.c.h.b16 %v355
    %v1194 = vunpack.c.l.b16 %v356
    %v1195 = vunpack.c.l.b16 %v357
    %v1196 = vunpack.c.h.b16 %v357
    %v1197 = vunpack.c.l.b16 %v358
    %v1198 = vunpack.c.h.b16 %v358
    %v1199 = vunpack.c.l.b16 %v359
    %v1200 = vunpack.c.l.b16 %v360
    %v1201 = vunpack.c.h.b16 %v360
    %v1202 = vunpack.c.l.b16 %v361
    %v1203 = vunpack.c.h.b16 %v361
    %v1204 = vunpack.c.l.b16 %v362
    %v1205 = vunpack.c.l.b16 %v363
    %v1206 = vunpack.c.h.b16 %v363
    %v1207 = vunpack.c.l.b16 %v364
    %v1208 = vunpack.c.h.b16 %v364
    %v1209 = vunpack.c.l.b16 %v365
    %v1210 = vunpack.c.l.b16 %v366
    %v1211 = vunpack.c.h.b16 %v366
    %v1212 = vunpack.c.l.b16 %v367
    %v1213 = vunpack.c.h.b16 %v367
    %v1214 = vunpack.c.l.b16 %v368
    %v1215 = vpack.c.b16 %v730, %v725
    %v1216 = vpack.c.b16 %v731, %v726
    %v1217 = vpack.c.b16 %v732, %v727
    %v1218 = vpack.c.b16 %v733, %v728
    %v1219 = vpack.c.b16 %v734, %v729
    %v1220 = vpack.c.b16 %v740, %v735
    %v1221 = vpack.c.b16 %v741, %v736
    %v1222 = vpack.c.b16 %v742, %v737
    %v1223 = vpack.c.b16 %v743, %v738
    %v1224 = vpack.c.b16 %v744, %v739
    %v1225 = vpack.c.b16 %v750, %v745
    %v1226 = vpack.c.b16 %v751, %v746
    %v1227 = vpack.c.b16 %v752, %v747
    %v1228 = vpack.c.b16 %v753, %v748
    %v1229 = vpack.c.b16 %v754, %v749
    %v1230 = vpack.c.b16 %v760, %v755
    %v1231 = vpack.c.b16 %v761, %v756
    %v1232 = vpack.c.b16 %v762, %v757
    %v1233 = vpack.c.b16 %v763, %v758
    %v1234 = vpack.c.b16 %v764, %v759
    %v1235 = vpack.c.b16 %v770, %v765
    %v1236 = vpack.c.b16 %v771, %v766
    %v1237 = vpack.c.b16 %v772, %v767
    %v1238 = vpack.c.b16 %v773, %v768
    %v1239 = vpack.c.b16 %v774, %v769
    %v1240 = vpack.c.b16 %v780, %v775
    %v1241 = vpack.c.b16 %v781, %v776
    %v1242 = vpack.c.b16 %v782, %v777
    %v1243 = vpack.c.b16 %v783, %v778
    %v1244 = vpack.c.b16 %v784, %v779
    %v1245 = vpack.c.b16 %v790, %v785
    %v1246 = vpack.c.b16 %v791, %v786
    %v1247 = vpack.c.b16 %v792, %v787
    %v1248 = vpack.c.b16 %v793, %v788
    %v1249 = vpack.c.b16 %v794, %v789
    %v1250 = vpack.c.b16 %v800, %v795
    %v1251 = vpack.c.b16 %v801, %v796
    %v1252 = vpack.c.b16 %v802, %v797
    %v1253 = vpack.c.b16 %v803, %v798
    %v1254 = vpack.c.b16 %v804, %v799
    %v1255 = vpack.c.b16 %v810, %v805
    %v1256 = vpack.c.b16 %v811, %v806
    %v1257 = vpack.c.b16 %v812, %v807
    %v1258 = vpack.c.b16 %v813, %v808
    %v1259 = vpack.c.b16 %v814, %v809
    %v1260 = vpack.c.b16 %v820, %v815
    %v1261 = vpack.c.b16 %v821, %v816
    %v1262 = vpack.c.b16 %v822, %v817
    %v1263 = vpack.c.b16 %v823, %v818
    %v1264 = vpack.c.b16 %v824, %v819
    %v1265 = vpack.c.b16 %v830, %v825
    %v1266 = vpack.c.b16 %v831, %v826
    %v1267 = vpack.c.b16 %v832, %v827
    %v1268 = vpack.c.b16 %v833, %v828
    %v1269 = vpack.c.b16 %v834, %v829
    %v1270 = vpack.c.b16 %v840, %v835
    %v1271 = vpack.c.b16 %v841, %v836
    %v1272 = vpack.c.b16 %v842, %v837
    %v1273 = vpack.c.b16 %v843, %v838
    %v1274 = vpack.c.b16 %v844, %v839
    %v1275 = vpack.c.b16 %v850, %v845
    %v1276 = vpack.c.b16 %v851, %v846
    %v1277 = vpack.c.b16 %v852, %v847
    %v1278 = vpack.c.b16 %v853, %v848
    %v1279 = vpack.c.b16 %v854, %v849
    %v1280 = vpack.c.b16 %v860, %v855
    %v1281 = vpack.c.b16 %v861, %v856
    %v1282 = vpack.c.b16 %v862, %v857
    %v1283 = vpack.c.b16 %v863, %v858
    %v1284 = vpack.c.b16 %v864, %v859
    %v1285 = vpack.c.b16 %v870, %v865
    %v1286 = vpack.c.b16 %v871, %v866
    %v1287 = vpack.c.b16 %v872, %v867
    %v1288 = vpack.c.b16 %v873, %v868
    %v1289 = vpack.c.b16 %v874, %v869
    %v1290 = vpack.c.b16 %v880, %v875
    %v1291 = vpack.c.b16 %v881, %v876
    %v1292 = vpack.c.b16 %v882, %v877
    %v1293 = vpack.c.b16 %v883, %v878
    %v1294 = vpack.c.b16 %v884, %v879
    %v1295 = vpack.c.b16 %v890, %v885
    %v1296 = vpack.c.b16 %v891, %v886
    %v1297 = vpack.c.b16 %v892, %v887
    %v1298 = vpack.c.b16 %v893, %v888
    %v1299 = vpack.c.b16 %v894, %v889
    %v1300 = vpack.c.b16 %v900, %v895
    %v1301 = vpack.c.b16 %v901, %v896
    %v1302 = vpack.c.b16 %v902, %v897
    %v1303 = vpack.c.b16 %v903, %v898
    %v1304 = vpack.c.b16 %v904, %v899
    %v1305 = vpack.c.b16 %v910, %v905
    %v1306 = vpack.c.b16 %v911, %v906
    %v1307 = vpack.c.b16 %v912, %v907
    %v1308 = vpack.c.b16 %v913, %v908
    %v1309 = vpack.c.b16 %v914, %v909
    %v1310 = vpack.c.b16 %v920, %v915
    %v1311 = vpack.c.b16 %v921, %v916
    %v1312 = vpack.c.b16 %v922, %v917
    %v1313 = vpack.c.b16 %v923, %v918
    %v1314 = vpack.c.b16 %v924, %v919
    %v1315 = vpack.c.b16 %v930, %v925
    %v1316 = vpack.c.b16 %v931, %v926
    %v1317 = vpack.c.b16 %v932, %v927
    %v1318 = vpack.c.b16 %v933, %v928
    %v1319 = vpack.c.b16 %v934, %v929
    %v1320 = vpack.c.b16 %v940, %v935
    %v1321 = vpack.c.b16 %v941, %v936
    %v1322 = vpack.c.b16 %v942, %v937
    %v1323 = vpack.c.b16 %v943, %v938
    %v1324 = vpack.c.b16 %v944, %v939
    %v1325 = vpack.c.b16 %v950, %v945
    %v1326 = vpack.c.b16 %v951, %v946
    %v1327 = vpack.c.b16 %v952, %v947
    %v1328 = vpack.c.b16 %v953, %v948
    %v1329 = vpack.c.b16 %v954, %v949
    %v1330 = vpack.c.b16 %v960, %v955
    %v1331 = vpack.c.b16 %v961, %v956
    %v1332 = vpack.c.b16 %v962, %v957
    %v1333 = vpack.c.b16 %v963, %v958
    %v1334 = vpack.c.b16 %v964, %v959
    %v1335 = vpack.c.b16 %v970, %v965
    %v1336 = vpack.c.b16 %v971, %v966
    %v1337 = vpack.c.b16 %v972, %v967
    %v1338 = vpack.c.b16 %v973, %v968
    %v1339 = vpack.c.b16 %v974, %v969
    %v1340 = vpack.c.b16 %v980, %v975
    %v1341 = vpack.c.b16 %v981, %v976
    %v1342 = vpack.c.b16 %v982, %v977
    %v1343 = vpack.c.b16 %v983, %v978
    %v1344 = vpack.c.b16 %v984, %v979
    %v1345 = vpack.c.b16 %v990, %v985
    %v1346 = vpack.c.b16 %v991, %v986
    %v1347 = vpack.c.b16 %v992, %v987
    %v1348 = vpack.c.b16 %v993, %v988
    %v1349 = vpack.c.b16 %v994, %v989
    %v1350 = vpack.c.b16 %v1000, %v995
    %v1351 = vpack.c.b16 %v1001, %v996
    %v1352 = vpack.c.b16 %v1002, %v997
    %v1353 = vpack.c.b16 %v1003, %v998
    %v1354 = vpack.c.b16 %v1004, %v999
    %v1355 = vpack.c.b16 %v1010, %v1005
    %v1356 = vpack.c.b16 %v1011, %v1006
    %v1357 = vpack.c.b16 %v1012, %v1007
    %v1358 = vpack.c.b16 %v1013, %v1008
    %v1359 = vpack.c.b16 %v1014, %v1009
    %v1360 = vpack.c.b16 %v1020, %v1015
    %v1361 = vpack.c.b16 %v1021, %v1016
    %v1362 = vpack.c.b16 %v1022, %v1017
    %v1363 = vpack.c.b16 %v1023, %v1018
    %v1364 = vpack.c.b16 %v1024, %v1019
    %v1365 = vpack.c.b16 %v1030, %v1025
    %v1366 = vpack.c.b16 %v1031, %v1026
    %v1367 = vpack.c.b16 %v1032, %v1027
    %v1368 = vpack.c.b16 %v1033, %v1028
    %v1369 = vpack.c.b16 %v1034, %v1029
    %v1370 = vpack.c.b16 %v1040, %v1035
    %v1371 = vpack.c.b16 %v1041, %v1036
    %v1372 = vpack.c.b16 %v1042, %v1037
    %v1373 = vpack.c.b16 %v1043, %v1038
    %v1374 = vpack.c.b16 %v1044, %v1039
    %v1375 = vpack.c.b16 %v1050, %v1045
    %v1376 = vpack.c.b16 %v1051, %v1046
    %v1377 = vpack.c.b16 %v1052, %v1047
    %v1378 = vpack.c.b16 %v1053, %v1048
    %v1379 = vpack.c.b16 %v1054, %v1049
    %v1380 = vpack.c.b16 %v1060, %v1055
    %v1381 = vpack.c.b16 %v1061, %v1056
    %v1382 = vpack.c.b16 %v1062, %v1057
    %v1383 = vpack.c.b16 %v1063, %v1058
    %v1384 = vpack.c.b16 %v1064, %v1059
    %v1385 = vpack.c.b16 %v1070, %v1065
    %v1386 = vpack.c.b16 %v1071, %v1066
    %v1387 = vpack.c.b16 %v1072, %v1067
    %v1388 = vpack.c.b16 %v1073, %v1068
    %v1389 = vpack.c.b16 %v1074, %v1069
    %v1390 = vpack.c.b16 %v1080, %v1075
    %v1391 = vpack.c.b16 %v1081, %v1076
    %v1392 = vpack.c.b16 %v1082, %v1077
    %v1393 = vpack.c.b16 %v1083, %v1078
    %v1394 = vpack.c.b16 %v1084, %v1079
    %v1395 = vpack.c.b16 %v1090, %v1085
    %v1396 = vpack.c.b16 %v1091, %v1086
    %v1397 = vpack.c.b16 %v1092, %v1087
    %v1398 = vpack.c.b16 %v1093, %v1088
    %v1399 = vpack.c.b16 %v1094, %v1089
    %v1400 = vpack.c.b16 %v1100, %v1095
    %v1401 = vpack.c.b16 %v1101, %v1096
    %v1402 = vpack.c.b16 %v1102, %v1097
    %v1403 = vpack.c.b16 %v1103, %v1098
    %v1404 = vpack.c.b16 %v1104, %v1099
    %v1405 = vpack.c.b16 %v1110, %v1105
    %v1406 = vpack.c.b16 %v1111, %v1106
    %v1407 = vpack.c.b16 %v1112, %v1107
    %v1408 = vpack.c.b16 %v1113, %v1108
    %v1409 = vpack.c.b16 %v1114, %v1109
    %v1410 = vpack.c.b16 %v1120, %v1115
    %v1411 = vpack.c.b16 %v1121, %v1116
    %v1412 = vpack.c.b16 %v1122, %v1117
    %v1413 = vpack.c.b16 %v1123, %v1118
    %v1414 = vpack.c.b16 %v1124, %v1119
    %v1415 = vpack.c.b16 %v1130, %v1125
    %v1416 = vpack.c.b16 %v1131, %v1126
    %v1417 = vpack.c.b16 %v1132, %v1127
    %v1418 = vpack.c.b16 %v1133, %v1128
    %v1419 = vpack.c.b16 %v1134, %v1129
    %v1420 = vpack.c.b16 %v1140, %v1135
    %v1421 = vpack.c.b16 %v1141, %v1136
    %v1422 = vpack.c.b16 %v1142, %v1137
    %v1423 = vpack.c.b16 %v1143, %v1138
    %v1424 = vpack.c.b16 %v1144, %v1139
    %v1425 = vpack.c.b16 %v1150, %v1145
    %v1426 = vpack.c.b16 %v1151, %v1146
    %v1427 = vpack.c.b16 %v1152, %v1147
    %v1428 = vpack.c.b16 %v1153, %v1148
    %v1429 = vpack.c.b16 %v1154, %v1149
    %v1430 = vpack.c.b16 %v1160, %v1155
    %v1431 = vpack.c.b16 %v1161, %v1156
    %v1432 = vpack.c.b16 %v1162, %v1157
    %v1433 = vpack.c.b16 %v1163, %v1158
    %v1434 = vpack.c.b16 %v1164, %v1159
    %v1435 = vpack.c.b16 %v1170, %v1165
    %v1436 = vpack.c.b16 %v1171, %v1166
    %v1437 = vpack.c.b16 %v1172, %v1167
    %v1438 = vpack.c.b16 %v1173, %v1168
    %v1439 = vpack.c.b16 %v1174, %v1169
    %v1440 = vpack.c.b16 %v1180, %v1175
    %v1441 = vpack.c.b16 %v1181, %v1176
    %v1442 = vpack.c.b16 %v1182, %v1177
    %v1443 = vpack.c.b16 %v1183, %v1178
    %v1444 = vpack.c.b16 %v1184, %v1179
    %v1445 = vpack.c.b16 %v1190, %v1185
    %v1446 = vpack.c.b16 %v1191, %v1186
    %v1447 = vpack.c.b16 %v1192, %v1187
    %v1448 = vpack.c.b16 %v1193, %v1188
    %v1449 = vpack.c.b16 %v1194, %v1189
    %v1450 = vpack.c.b16 %v1200, %v1195
    %v1451 = vpack.c.b16 %v1201, %v1196
    %v1452 = vpack.c.b16 %v1202, %v1197
    %v1453 = vpack.c.b16 %v1203, %v1198
    %v1454 = vpack.c.b16 %v1204, %v1199
    %v1455 = vpack.c.b16 %v1210, %v1205
    %v1456 = vpack.c.b16 %v1211, %v1206
    %v1457 = vpack.c.b16 %v1212, %v1207
    %v1458 = vpack.c.b16 %v1213, %v1208
    %v1459 = vpack.c.b16 %v1214, %v1209
    %vm1705 = vcmask 130048
    %v1707 = vsel %vm1705, %v424, 0
    %1709 = vmatprep.subr.bf16.mxu0 %v1216
    %1710 = vmatpush1.bf16.msra.mxu0 %v1215
    %1711 = vmatprep.subr.bf16.mxu0 %v1221
    %1712 = vmatpush1.bf16.msra.mxu0 %v1220
    %1713 = vmatprep.subr.bf16.mxu0 %v1226
    %1714 = vmatpush1.bf16.msra.mxu0 %v1225
    %1715 = vmatprep.subr.bf16.mxu0 %v1231
    %1716 = vmatpush1.bf16.msra.mxu0 %v1230
    %1717 = vmatprep.subr.bf16.mxu0 %v1236
    %1718 = vmatpush1.bf16.msra.mxu0 %v1235
    %1719 = vmatprep.subr.bf16.mxu0 %v1241
    %1720 = vmatpush1.bf16.msra.mxu0 %v1240
    %1721 = vmatprep.subr.bf16.mxu0 %v1246
    %1722 = vmatpush1.bf16.msra.mxu0 %v1245
    %1723 = vmatprep.subr.bf16.mxu0 %v1251
    %1724 = vmatpush1.bf16.msra.mxu0 %v1250
    %1725 = vmatprep.subr.bf16.mxu0 %v1256
    %1726 = vmatpush1.bf16.msra.mxu0 %v1255
    %1727 = vmatprep.subr.bf16.mxu0 %v1261
    %1728 = vmatpush1.bf16.msra.mxu0 %v1260
    %1729 = vmatprep.subr.bf16.mxu0 %v1266
    %1730 = vmatpush1.bf16.msra.mxu0 %v1265
    %1731 = vmatprep.subr.bf16.mxu0 %v1271
    %1732 = vmatpush1.bf16.msra.mxu0 %v1270
    %1733 = vmatprep.subr.bf16.mxu0 %v1276
    %1734 = vmatpush1.bf16.msra.mxu0 %v1275
    %1735 = vmatprep.subr.bf16.mxu0 %v1281
    %1736 = vmatpush1.bf16.msra.mxu0 %v1280
    %1737 = vmatprep.subr.bf16.mxu0 %v1286
    %1738 = vmatpush1.bf16.msra.mxu0 %v1285
    %1739 = vmatprep.subr.bf16.mxu0 %v1291
    %1740 = vmatpush1.bf16.msra.mxu0 %v1290
    %1741 = vmatprep.mubr.bf16.mxu0 %v419
    %1742 = vmatmul.mubr.bf16.gmra.mrb[0].mxu0 %v418
    %v1743 = vpop.f32.mrb[0].mxu0
    %v1744 = vadd.f32 %v374, %v1743
    %v1745 = vpop.f32.mrb[0].mxu0
    %v1746 = vadd.f32 %v378, %v1745
    %v1747 = vpop.f32.mrb[0].mxu0
    %v1748 = vadd.f32 %v374, %v1747
    %v1749 = vpop.f32.mrb[0].mxu0
    %v1750 = vadd.f32 %v378, %v1749
    %1751 = vdwg.mxu0
    %1752 = vmatprep.subr.bf16.mxu0 %v1296
    %1753 = vmatpush1.bf16.msra.mxu0 %v1295
    %1754 = vmatprep.subr.bf16.mxu0 %v1301
    %1755 = vmatpush1.bf16.msra.mxu0 %v1300
    %1756 = vmatprep.subr.bf16.mxu0 %v1306
    %1757 = vmatpush1.bf16.msra.mxu0 %v1305
    %1758 = vmatprep.subr.bf16.mxu0 %v1311
    %1759 = vmatpush1.bf16.msra.mxu0 %v1310
    %1760 = vmatprep.subr.bf16.mxu0 %v1316
    %1761 = vmatpush1.bf16.msra.mxu0 %v1315
    %1762 = vmatprep.subr.bf16.mxu0 %v1321
    %1763 = vmatpush1.bf16.msra.mxu0 %v1320
    %1764 = vmatprep.subr.bf16.mxu0 %v1326
    %1765 = vmatpush1.bf16.msra.mxu0 %v1325
    %1766 = vmatprep.subr.bf16.mxu0 %v1331
    %1767 = vmatpush1.bf16.msra.mxu0 %v1330
    %1768 = vmatprep.subr.bf16.mxu0 %v1336
    %1769 = vmatpush1.bf16.msra.mxu0 %v1335
    %1770 = vmatprep.subr.bf16.mxu0 %v1341
    %1771 = vmatpush1.bf16.msra.mxu0 %v1340
    %1772 = vmatprep.subr.bf16.mxu0 %v1346
    %1773 = vmatpush1.bf16.msra.mxu0 %v1345
    %1774 = vmatprep.subr.bf16.mxu0 %v1351
    %1775 = vmatpush1.bf16.msra.mxu0 %v1350
    %1776 = vmatprep.subr.bf16.mxu0 %v1356
    %1777 = vmatpush1.bf16.msra.mxu0 %v1355
    %1778 = vmatprep.subr.bf16.mxu0 %v1361
    %1779 = vmatpush1.bf16.msra.mxu0 %v1360
    %1780 = vmatprep.subr.bf16.mxu0 %v1366
    %1781 = vmatpush1.bf16.msra.mxu0 %v1365
    %1782 = vmatprep.subr.bf16.mxu0 %v1371
    %1783 = vmatpush1.bf16.msra.mxu0 %v1370
    %1784 = vmatprep.mubr.bf16.mxu0 %v421
    %1785 = vmatmul.mubr.bf16.gmra.mrb[0].mxu0 %v420
    %v1786 = vpop.f32.mrb[0].mxu0
    %v1787 = vadd.f32 %v1744, %v1786
    %v1788 = vpop.f32.mrb[0].mxu0
    %v1789 = vadd.f32 %v1746, %v1788
    %v1790 = vpop.f32.mrb[0].mxu0
    %v1791 = vadd.f32 %v1748, %v1790
    %v1792 = vpop.f32.mrb[0].mxu0
    %v1793 = vadd.f32 %v1750, %v1792
    %1794 = vdwg.mxu0
    %1795 = vmatprep.subr.bf16.mxu0 %v1376
    %1796 = vmatpush1.bf16.msra.mxu0 %v1375
    %1797 = vmatprep.subr.bf16.mxu0 %v1381
    %1798 = vmatpush1.bf16.msra.mxu0 %v1380
    %1799 = vmatprep.subr.bf16.mxu0 %v1386
    %1800 = vmatpush1.bf16.msra.mxu0 %v1385
    %1801 = vmatprep.subr.bf16.mxu0 %v1391
    %1802 = vmatpush1.bf16.msra.mxu0 %v1390
    %1803 = vmatprep.subr.bf16.mxu0 %v1396
    %1804 = vmatpush1.bf16.msra.mxu0 %v1395
    %1805 = vmatprep.subr.bf16.mxu0 %v1401
    %1806 = vmatpush1.bf16.msra.mxu0 %v1400
    %1807 = vmatprep.subr.bf16.mxu0 %v1406
    %1808 = vmatpush1.bf16.msra.mxu0 %v1405
    %1809 = vmatprep.subr.bf16.mxu0 %v1411
    %1810 = vmatpush1.bf16.msra.mxu0 %v1410
    %1811 = vmatprep.subr.bf16.mxu0 %v1416
    %1812 = vmatpush1.bf16.msra.mxu0 %v1415
    %1813 = vmatprep.subr.bf16.mxu0 %v1421
    %1814 = vmatpush1.bf16.msra.mxu0 %v1420
    %1815 = vmatprep.subr.bf16.mxu0 %v1426
    %1816 = vmatpush1.bf16.msra.mxu0 %v1425
    %1817 = vmatprep.subr.bf16.mxu0 %v1431
    %1818 = vmatpush1.bf16.msra.mxu0 %v1430
    %1819 = vmatprep.subr.bf16.mxu0 %v1436
    %1820 = vmatpush1.bf16.msra.mxu0 %v1435
    %1821 = vmatprep.subr.bf16.mxu0 %v1441
    %1822 = vmatpush1.bf16.msra.mxu0 %v1440
    %1823 = vmatprep.subr.bf16.mxu0 %v1446
    %1824 = vmatpush1.bf16.msra.mxu0 %v1445
    %1825 = vmatprep.subr.bf16.mxu0 %v1451
    %1826 = vmatpush1.bf16.msra.mxu0 %v1450
    %1827 = vmatprep.mubr.bf16.mxu0 %v423
    %1828 = vmatmul.mubr.bf16.gmra.mrb[0].mxu0 %v422
    %v1829 = vpop.f32.mrb[0].mxu0
    %v1830 = vadd.f32 %v1787, %v1829
    %v1831 = vpop.f32.mrb[0].mxu0
    %v1832 = vadd.f32 %v1789, %v1831
    %v1833 = vpop.f32.mrb[0].mxu0
    %v1834 = vadd.f32 %v1791, %v1833
    %v1835 = vpop.f32.mrb[0].mxu0
    %v1836 = vadd.f32 %v1793, %v1835
    %1837 = vdwg.mxu0
    %1838 = vmatprep.subr.bf16.mxu0 %v1456
    %1839 = vmatpush1.bf16.msra.mxu0 %v1455
    %1840 = vmatprep.subr.bf16.mxu0 0
    %1841 = vmatpush1.bf16.msra.mxu0 0
    %1842 = vmatprep.subr.bf16.mxu0 0
    %1843 = vmatpush1.bf16.msra.mxu0 0
    %1844 = vmatprep.subr.bf16.mxu0 0
    %1845 = vmatpush1.bf16.msra.mxu0 0
    %1846 = vmatprep.subr.bf16.mxu0 0
    %1847 = vmatpush1.bf16.msra.mxu0 0
    %1848 = vmatprep.subr.bf16.mxu0 0
    %1849 = vmatpush1.bf16.msra.mxu0 0
    %1850 = vmatprep.subr.bf16.mxu0 0
    %1851 = vmatpush1.bf16.msra.mxu0 0
    %1852 = vmatprep.subr.bf16.mxu0 0
    %1853 = vmatpush1.bf16.msra.mxu0 0
    %1854 = vmatprep.subr.bf16.mxu0 0
    %1855 = vmatpush1.bf16.msra.mxu0 0
    %1856 = vmatprep.subr.bf16.mxu0 0
    %1857 = vmatpush1.bf16.msra.mxu0 0
    %1858 = vmatprep.subr.bf16.mxu0 0
    %1859 = vmatpush1.bf16.msra.mxu0 0
    %1860 = vmatprep.subr.bf16.mxu0 0
    %1861 = vmatpush1.bf16.msra.mxu0 0
    %1862 = vmatprep.subr.bf16.mxu0 0
    %1863 = vmatpush1.bf16.msra.mxu0 0
    %1864 = vmatprep.subr.bf16.mxu0 0
    %1865 = vmatpush1.bf16.msra.mxu0 0
    %1866 = vmatprep.subr.bf16.mxu0 0
    %1867 = vmatpush1.bf16.msra.mxu0 0
    %1868 = vmatprep.subr.bf16.mxu0 0
    %1869 = vmatpush1.bf16.msra.mxu0 0
    %1870 = vmatprep.mubr.bf16.mxu0 0
    %1871 = vmatmul.mubr.bf16.gmra.mrb[0].mxu0 %v1707
    %v1872 = vpop.f32.mrb[0].mxu0
    %v1873 = vadd.f32 %v1830, %v1872
    %v1874 = vpop.f32.mrb[0].mxu0
    %v1875 = vadd.f32 %v1832, %v1874
    %v1876 = vpop.f32.mrb[0].mxu0
    %v1877 = vadd.f32 %v1834, %v1876
    %v1878 = vpop.f32.mrb[0].mxu0
    %v1879 = vadd.f32 %v1836, %v1878
    %1880 = vdwg.mxu0
    %1881 = vmatprep.subr.bf16.mxu0 %v1218
    %1882 = vmatpush1.bf16.msra.mxu0 %v1217
    %1883 = vmatprep.subr.bf16.mxu0 %v1223
    %1884 = vmatpush1.bf16.msra.mxu0 %v1222
    %1885 = vmatprep.subr.bf16.mxu0 %v1228
    %1886 = vmatpush1.bf16.msra.mxu0 %v1227
    %1887 = vmatprep.subr.bf16.mxu0 %v1233
    %1888 = vmatpush1.bf16.msra.mxu0 %v1232
    %1889 = vmatprep.subr.bf16.mxu0 %v1238
    %1890 = vmatpush1.bf16.msra.mxu0 %v1237
    %1891 = vmatprep.subr.bf16.mxu0 %v1243
    %1892 = vmatpush1.bf16.msra.mxu0 %v1242
    %1893 = vmatprep.subr.bf16.mxu0 %v1248
    %1894 = vmatpush1.bf16.msra.mxu0 %v1247
    %1895 = vmatprep.subr.bf16.mxu0 %v1253
    %1896 = vmatpush1.bf16.msra.mxu0 %v1252
    %1897 = vmatprep.subr.bf16.mxu0 %v1258
    %1898 = vmatpush1.bf16.msra.mxu0 %v1257
    %1899 = vmatprep.subr.bf16.mxu0 %v1263
    %1900 = vmatpush1.bf16.msra.mxu0 %v1262
    %1901 = vmatprep.subr.bf16.mxu0 %v1268
    %1902 = vmatpush1.bf16.msra.mxu0 %v1267
    %1903 = vmatprep.subr.bf16.mxu0 %v1273
    %1904 = vmatpush1.bf16.msra.mxu0 %v1272
    %1905 = vmatprep.subr.bf16.mxu0 %v1278
    %1906 = vmatpush1.bf16.msra.mxu0 %v1277
    %1907 = vmatprep.subr.bf16.mxu0 %v1283
    %1908 = vmatpush1.bf16.msra.mxu0 %v1282
    %1909 = vmatprep.subr.bf16.mxu0 %v1288
    %1910 = vmatpush1.bf16.msra.mxu0 %v1287
    %1911 = vmatprep.subr.bf16.mxu0 %v1293
    %1912 = vmatpush1.bf16.msra.mxu0 %v1292
    %1913 = vmatprep.mubr.bf16.mxu0 %v419
    %1914 = vmatmul.mubr.bf16.gmra.mrb[0].mxu0 %v418
    %v1915 = vpop.f32.mrb[0].mxu0
    %v1916 = vadd.f32 %v382, %v1915
    %v1917 = vpop.f32.mrb[0].mxu0
    %v1918 = vadd.f32 %v386, %v1917
    %v1919 = vpop.f32.mrb[0].mxu0
    %v1920 = vadd.f32 %v382, %v1919
    %v1921 = vpop.f32.mrb[0].mxu0
    %v1922 = vadd.f32 %v386, %v1921
    %1923 = vdwg.mxu0
    %1924 = vmatprep.subr.bf16.mxu0 %v1298
    %1925 = vmatpush1.bf16.msra.mxu0 %v1297
    %1926 = vmatprep.subr.bf16.mxu0 %v1303
    %1927 = vmatpush1.bf16.msra.mxu0 %v1302
    %1928 = vmatprep.subr.bf16.mxu0 %v1308
    %1929 = vmatpush1.bf16.msra.mxu0 %v1307
    %1930 = vmatprep.subr.bf16.mxu0 %v1313
    %1931 = vmatpush1.bf16.msra.mxu0 %v1312
    %1932 = vmatprep.subr.bf16.mxu0 %v1318
    %1933 = vmatpush1.bf16.msra.mxu0 %v1317
    %1934 = vmatprep.subr.bf16.mxu0 %v1323
    %1935 = vmatpush1.bf16.msra.mxu0 %v1322
    %1936 = vmatprep.subr.bf16.mxu0 %v1328
    %1937 = vmatpush1.bf16.msra.mxu0 %v1327
    %1938 = vmatprep.subr.bf16.mxu0 %v1333
    %1939 = vmatpush1.bf16.msra.mxu0 %v1332
    %1940 = vmatprep.subr.bf16.mxu0 %v1338
    %1941 = vmatpush1.bf16.msra.mxu0 %v1337
    %1942 = vmatprep.subr.bf16.mxu0 %v1343
    %1943 = vmatpush1.bf16.msra.mxu0 %v1342
    %1944 = vmatprep.subr.bf16.mxu0 %v1348
    %1945 = vmatpush1.bf16.msra.mxu0 %v1347
    %1946 = vmatprep.subr.bf16.mxu0 %v1353
    %1947 = vmatpush1.bf16.msra.mxu0 %v1352
    %1948 = vmatprep.subr.bf16.mxu0 %v1358
    %1949 = vmatpush1.bf16.msra.mxu0 %v1357
    %1950 = vmatprep.subr.bf16.mxu0 %v1363
    %1951 = vmatpush1.bf16.msra.mxu0 %v1362
    %1952 = vmatprep.subr.bf16.mxu0 %v1368
    %1953 = vmatpush1.bf16.msra.mxu0 %v1367
    %1954 = vmatprep.subr.bf16.mxu0 %v1373
    %1955 = vmatpush1.bf16.msra.mxu0 %v1372
    %1956 = vmatprep.mubr.bf16.mxu0 %v421
    %1957 = vmatmul.mubr.bf16.gmra.mrb[0].mxu0 %v420
    %v1958 = vpop.f32.mrb[0].mxu0
    %v1959 = vadd.f32 %v1916, %v1958
    %v1960 = vpop.f32.mrb[0].mxu0
    %v1961 = vadd.f32 %v1918, %v1960
    %v1962 = vpop.f32.mrb[0].mxu0
    %v1963 = vadd.f32 %v1920, %v1962
    %v1964 = vpop.f32.mrb[0].mxu0
    %v1965 = vadd.f32 %v1922, %v1964
    %1966 = vdwg.mxu0
    %1967 = vmatprep.subr.bf16.mxu0 %v1378
    %1968 = vmatpush1.bf16.msra.mxu0 %v1377
    %1969 = vmatprep.subr.bf16.mxu0 %v1383
    %1970 = vmatpush1.bf16.msra.mxu0 %v1382
    %1971 = vmatprep.subr.bf16.mxu0 %v1388
    %1972 = vmatpush1.bf16.msra.mxu0 %v1387
    %1973 = vmatprep.subr.bf16.mxu0 %v1393
    %1974 = vmatpush1.bf16.msra.mxu0 %v1392
    %1975 = vmatprep.subr.bf16.mxu0 %v1398
    %1976 = vmatpush1.bf16.msra.mxu0 %v1397
    %1977 = vmatprep.subr.bf16.mxu0 %v1403
    %1978 = vmatpush1.bf16.msra.mxu0 %v1402
    %1979 = vmatprep.subr.bf16.mxu0 %v1408
    %1980 = vmatpush1.bf16.msra.mxu0 %v1407
    %1981 = vmatprep.subr.bf16.mxu0 %v1413
    %1982 = vmatpush1.bf16.msra.mxu0 %v1412
    %1983 = vmatprep.subr.bf16.mxu0 %v1418
    %1984 = vmatpush1.bf16.msra.mxu0 %v1417
    %1985 = vmatprep.subr.bf16.mxu0 %v1423
    %1986 = vmatpush1.bf16.msra.mxu0 %v1422
    %1987 = vmatprep.subr.bf16.mxu0 %v1428
    %1988 = vmatpush1.bf16.msra.mxu0 %v1427
    %1989 = vmatprep.subr.bf16.mxu0 %v1433
    %1990 = vmatpush1.bf16.msra.mxu0 %v1432
    %1991 = vmatprep.subr.bf16.mxu0 %v1438
    %1992 = vmatpush1.bf16.msra.mxu0 %v1437
    %1993 = vmatprep.subr.bf16.mxu0 %v1443
    %1994 = vmatpush1.bf16.msra.mxu0 %v1442
    %1995 = vmatprep.subr.bf16.mxu0 %v1448
    %1996 = vmatpush1.bf16.msra.mxu0 %v1447
    %1997 = vmatprep.subr.bf16.mxu0 %v1453
    %1998 = vmatpush1.bf16.msra.mxu0 %v1452
    %1999 = vmatprep.mubr.bf16.mxu0 %v423
    %2000 = vmatmul.mubr.bf16.gmra.mrb[0].mxu0 %v422
    %v2001 = vpop.f32.mrb[0].mxu0
    %v2002 = vadd.f32 %v1959, %v2001
    %v2003 = vpop.f32.mrb[0].mxu0
    %v2004 = vadd.f32 %v1961, %v2003
    %v2005 = vpop.f32.mrb[0].mxu0
    %v2006 = vadd.f32 %v1963, %v2005
    %v2007 = vpop.f32.mrb[0].mxu0
    %v2008 = vadd.f32 %v1965, %v2007
    %2009 = vdwg.mxu0
    %2010 = vmatprep.subr.bf16.mxu0 %v1458
    %2011 = vmatpush1.bf16.msra.mxu0 %v1457
    %2012 = vmatprep.subr.bf16.mxu0 0
    %2013 = vmatpush1.bf16.msra.mxu0 0
    %2014 = vmatprep.subr.bf16.mxu0 0
    %2015 = vmatpush1.bf16.msra.mxu0 0
    %2016 = vmatprep.subr.bf16.mxu0 0
    %2017 = vmatpush1.bf16.msra.mxu0 0
    %2018 = vmatprep.subr.bf16.mxu0 0
    %2019 = vmatpush1.bf16.msra.mxu0 0
    %2020 = vmatprep.subr.bf16.mxu0 0
    %2021 = vmatpush1.bf16.msra.mxu0 0
    %2022 = vmatprep.subr.bf16.mxu0 0
    %2023 = vmatpush1.bf16.msra.mxu0 0
    %2024 = vmatprep.subr.bf16.mxu0 0
    %2025 = vmatpush1.bf16.msra.mxu0 0
    %2026 = vmatprep.subr.bf16.mxu0 0
    %2027 = vmatpush1.bf16.msra.mxu0 0
    %2028 = vmatprep.subr.bf16.mxu0 0
    %2029 = vmatpush1.bf16.msra.mxu0 0
    %2030 = vmatprep.subr.bf16.mxu0 0
    %2031 = vmatpush1.bf16.msra.mxu0 0
    %2032 = vmatprep.subr.bf16.mxu0 0
    %2033 = vmatpush1.bf16.msra.mxu0 0
    %2034 = vmatprep.subr.bf16.mxu0 0
    %2035 = vmatpush1.bf16.msra.mxu0 0
    %2036 = vmatprep.subr.bf16.mxu0 0
    %2037 = vmatpush1.bf16.msra.mxu0 0
    %2038 = vmatprep.subr.bf16.mxu0 0
    %2039 = vmatpush1.bf16.msra.mxu0 0
    %2040 = vmatprep.subr.bf16.mxu0 0
    %2041 = vmatpush1.bf16.msra.mxu0 0
    %2042 = vmatprep.mubr.bf16.mxu0 0
    %2043 = vmatmul.mubr.bf16.gmra.mrb[0].mxu0 %v1707
    %v2044 = vpop.f32.mrb[0].mxu0
    %v2045 = vadd.f32 %v2002, %v2044
    %v2046 = vpop.f32.mrb[0].mxu0
    %v2047 = vadd.f32 %v2004, %v2046
    %v2048 = vpop.f32.mrb[0].mxu0
    %v2049 = vadd.f32 %v2006, %v2048
    %v2050 = vpop.f32.mrb[0].mxu0
    %v2051 = vadd.f32 %v2008, %v2050
    %2052 = vdwg.mxu0
    %2053 = vmatprep.subr.bf16.mxu0 0
    %2054 = vmatpush1.bf16.msra.mxu0 %v1219
    %2055 = vmatprep.subr.bf16.mxu0 0
    %2056 = vmatpush1.bf16.msra.mxu0 %v1224
    %2057 = vmatprep.subr.bf16.mxu0 0
    %2058 = vmatpush1.bf16.msra.mxu0 %v1229
    %2059 = vmatprep.subr.bf16.mxu0 0
    %2060 = vmatpush1.bf16.msra.mxu0 %v1234
    %2061 = vmatprep.subr.bf16.mxu0 0
    %2062 = vmatpush1.bf16.msra.mxu0 %v1239
    %2063 = vmatprep.subr.bf16.mxu0 0
    %2064 = vmatpush1.bf16.msra.mxu0 %v1244
    %2065 = vmatprep.subr.bf16.mxu0 0
    %2066 = vmatpush1.bf16.msra.mxu0 %v1249
    %2067 = vmatprep.subr.bf16.mxu0 0
    %2068 = vmatpush1.bf16.msra.mxu0 %v1254
    %2069 = vmatprep.subr.bf16.mxu0 0
    %2070 = vmatpush1.bf16.msra.mxu0 %v1259
    %2071 = vmatprep.subr.bf16.mxu0 0
    %2072 = vmatpush1.bf16.msra.mxu0 %v1264
    %2073 = vmatprep.subr.bf16.mxu0 0
    %2074 = vmatpush1.bf16.msra.mxu0 %v1269
    %2075 = vmatprep.subr.bf16.mxu0 0
    %2076 = vmatpush1.bf16.msra.mxu0 %v1274
    %2077 = vmatprep.subr.bf16.mxu0 0
    %2078 = vmatpush1.bf16.msra.mxu0 %v1279
    %2079 = vmatprep.subr.bf16.mxu0 0
    %2080 = vmatpush1.bf16.msra.mxu0 %v1284
    %2081 = vmatprep.subr.bf16.mxu0 0
    %2082 = vmatpush1.bf16.msra.mxu0 %v1289
    %2083 = vmatprep.subr.bf16.mxu0 0
    %2084 = vmatpush1.bf16.msra.mxu0 %v1294
    %2085 = vmatprep.mubr.bf16.mxu0 %v419
    %2086 = vmatmul.mubr.bf16.gmra.mrb[0].mxu0 %v418
    %v2087 = vpop.f32.mrb[0].mxu0
    %v2088 = vadd.f32 %v390, %v2087
    %v2089 = vpop.f32.mrb[0].mxu0
    %v2090 = vpop.f32.mrb[0].mxu0
    %v2091 = vadd.f32 %v390, %v2090
    %v2092 = vpop.f32.mrb[0].mxu0
    %2093 = vdwg.mxu0
    %2094 = vmatprep.subr.bf16.mxu0 0
    %2095 = vmatpush1.bf16.msra.mxu0 %v1299
    %2096 = vmatprep.subr.bf16.mxu0 0
    %2097 = vmatpush1.bf16.msra.mxu0 %v1304
    %2098 = vmatprep.subr.bf16.mxu0 0
    %2099 = vmatpush1.bf16.msra.mxu0 %v1309
    %2100 = vmatprep.subr.bf16.mxu0 0
    %2101 = vmatpush1.bf16.msra.mxu0 %v1314
    %2102 = vmatprep.subr.bf16.mxu0 0
    %2103 = vmatpush1.bf16.msra.mxu0 %v1319
    %2104 = vmatprep.subr.bf16.mxu0 0
    %2105 = vmatpush1.bf16.msra.mxu0 %v1324
    %2106 = vmatprep.subr.bf16.mxu0 0
    %2107 = vmatpush1.bf16.msra.mxu0 %v1329
    %2108 = vmatprep.subr.bf16.mxu0 0
    %2109 = vmatpush1.bf16.msra.mxu0 %v1334
    %2110 = vmatprep.subr.bf16.mxu0 0
    %2111 = vmatpush1.bf16.msra.mxu0 %v1339
    %2112 = vmatprep.subr.bf16.mxu0 0
    %2113 = vmatpush1.bf16.msra.mxu0 %v1344
    %2114 = vmatprep.subr.bf16.mxu0 0
    %2115 = vmatpush1.bf16.msra.mxu0 %v1349
    %2116 = vmatprep.subr.bf16.mxu0 0
    %2117 = vmatpush1.bf16.msra.mxu0 %v1354
    %2118 = vmatprep.subr.bf16.mxu0 0
    %2119 = vmatpush1.bf16.msra.mxu0 %v1359
    %2120 = vmatprep.subr.bf16.mxu0 0
    %2121 = vmatpush1.bf16.msra.mxu0 %v1364
    %2122 = vmatprep.subr.bf16.mxu0 0
    %2123 = vmatpush1.bf16.msra.mxu0 %v1369
    %2124 = vmatprep.subr.bf16.mxu0 0
    %2125 = vmatpush1.bf16.msra.mxu0 %v1374
    %2126 = vmatprep.mubr.bf16.mxu0 %v421
    %2127 = vmatmul.mubr.bf16.gmra.mrb[0].mxu0 %v420
    %v2128 = vpop.f32.mrb[0].mxu0
    %v2129 = vadd.f32 %v2088, %v2128
    %v2130 = vpop.f32.mrb[0].mxu0
    %v2131 = vpop.f32.mrb[0].mxu0
    %v2132 = vadd.f32 %v2091, %v2131
    %v2133 = vpop.f32.mrb[0].mxu0
    %2134 = vdwg.mxu0
    %2135 = vmatprep.subr.bf16.mxu0 0
    %2136 = vmatpush1.bf16.msra.mxu0 %v1379
    %2137 = vmatprep.subr.bf16.mxu0 0
    %2138 = vmatpush1.bf16.msra.mxu0 %v1384
    %2139 = vmatprep.subr.bf16.mxu0 0
    %2140 = vmatpush1.bf16.msra.mxu0 %v1389
    %2141 = vmatprep.subr.bf16.mxu0 0
    %2142 = vmatpush1.bf16.msra.mxu0 %v1394
    %2143 = vmatprep.subr.bf16.mxu0 0
    %2144 = vmatpush1.bf16.msra.mxu0 %v1399
    %2145 = vmatprep.subr.bf16.mxu0 0
    %2146 = vmatpush1.bf16.msra.mxu0 %v1404
    %2147 = vmatprep.subr.bf16.mxu0 0
    %2148 = vmatpush1.bf16.msra.mxu0 %v1409
    %2149 = vmatprep.subr.bf16.mxu0 0
    %2150 = vmatpush1.bf16.msra.mxu0 %v1414
    %2151 = vmatprep.subr.bf16.mxu0 0
    %2152 = vmatpush1.bf16.msra.mxu0 %v1419
    %2153 = vmatprep.subr.bf16.mxu0 0
    %2154 = vmatpush1.bf16.msra.mxu0 %v1424
    %2155 = vmatprep.subr.bf16.mxu0 0
    %2156 = vmatpush1.bf16.msra.mxu0 %v1429
    %2157 = vmatprep.subr.bf16.mxu0 0
    %2158 = vmatpush1.bf16.msra.mxu0 %v1434
    %2159 = vmatprep.subr.bf16.mxu0 0
    %2160 = vmatpush1.bf16.msra.mxu0 %v1439
    %2161 = vmatprep.subr.bf16.mxu0 0
    %2162 = vmatpush1.bf16.msra.mxu0 %v1444
    %2163 = vmatprep.subr.bf16.mxu0 0
    %2164 = vmatpush1.bf16.msra.mxu0 %v1449
    %2165 = vmatprep.subr.bf16.mxu0 0
    %2166 = vmatpush1.bf16.msra.mxu0 %v1454
    %2167 = vmatprep.mubr.bf16.mxu0 %v423
    %2168 = vmatmul.mubr.bf16.gmra.mrb[0].mxu0 %v422
    %v2169 = vpop.f32.mrb[0].mxu0
    %v2170 = vadd.f32 %v2129, %v2169
    %v2171 = vpop.f32.mrb[0].mxu0
    %v2172 = vpop.f32.mrb[0].mxu0
    %v2173 = vadd.f32 %v2132, %v2172
    %v2174 = vpop.f32.mrb[0].mxu0
    %2175 = vdwg.mxu0
    %2176 = vmatprep.subr.bf16.mxu0 0
    %2177 = vmatpush1.bf16.msra.mxu0 %v1459
    %2178 = vmatprep.subr.bf16.mxu0 0
    %2179 = vmatpush1.bf16.msra.mxu0 0
    %2180 = vmatprep.subr.bf16.mxu0 0
    %2181 = vmatpush1.bf16.msra.mxu0 0
    %2182 = vmatprep.subr.bf16.mxu0 0
    %2183 = vmatpush1.bf16.msra.mxu0 0
    %2184 = vmatprep.subr.bf16.mxu0 0
    %2185 = vmatpush1.bf16.msra.mxu0 0
    %2186 = vmatprep.subr.bf16.mxu0 0
    %2187 = vmatpush1.bf16.msra.mxu0 0
    %2188 = vmatprep.subr.bf16.mxu0 0
    %2189 = vmatpush1.bf16.msra.mxu0 0
    %2190 = vmatprep.subr.bf16.mxu0 0
    %2191 = vmatpush1.bf16.msra.mxu0 0
    %2192 = vmatprep.subr.bf16.mxu0 0
    %2193 = vmatpush1.bf16.msra.mxu0 0
    %2194 = vmatprep.subr.bf16.mxu0 0
    %2195 = vmatpush1.bf16.msra.mxu0 0
    %2196 = vmatprep.subr.bf16.mxu0 0
    %2197 = vmatpush1.bf16.msra.mxu0 0
    %2198 = vmatprep.subr.bf16.mxu0 0
    %2199 = vmatpush1.bf16.msra.mxu0 0
    %2200 = vmatprep.subr.bf16.mxu0 0
    %2201 = vmatpush1.bf16.msra.mxu0 0
    %2202 = vmatprep.subr.bf16.mxu0 0
    %2203 = vmatpush1.bf16.msra.mxu0 0
    %2204 = vmatprep.subr.bf16.mxu0 0
    %2205 = vmatpush1.bf16.msra.mxu0 0
    %2206 = vmatprep.subr.bf16.mxu0 0
    %2207 = vmatpush1.bf16.msra.mxu0 0
    %2208 = vmatprep.mubr.bf16.mxu0 0
    %2209 = vmatmul.mubr.bf16.gmra.mrb[0].mxu0 %v1707
    %v2210 = vpop.f32.mrb[0].mxu0
    %v2211 = vadd.f32 %v2170, %v2210
    %v2212 = vpop.f32.mrb[0].mxu0
    %v2213 = vpop.f32.mrb[0].mxu0
    %v2214 = vadd.f32 %v2173, %v2213
    %v2215 = vpop.f32.mrb[0].mxu0
    %2216 = vdwg.mxu0
    %v2217 = vmax.f32 %v1873, 0.0
    %v2218 = vmax.f32 %v1875, 0.0
    %v2219 = vmax.f32 %v2045, 0.0
    %v2220 = vmax.f32 %v2047, 0.0
    %v2221 = vmax.f32 %v2211, 0.0
    %v2222 = vmax.f32 %v1877, 0.0
    %v2223 = vmax.f32 %v1879, 0.0
    %v2224 = vmax.f32 %v2049, 0.0
    %v2225 = vmax.f32 %v2051, 0.0
    %v2226 = vmax.f32 %v2214, 0.0
    %v2227 = vpack.c.bf16 %v2222, %v2217
    %v2228 = vpack.c.bf16 %v2223, %v2218
    %v2229 = vpack.c.bf16 %v2224, %v2219
    %v2230 = vpack.c.bf16 %v2225, %v2220
    %v2231 = vpack.c.bf16 %v2226, %v2221
    %v2232 = vld [vmem:[#allocation4] sm:$0xff]
    %v2233 = vld [vmem:[#allocation4 + $0x8] sm:$0xf]
    %v2234 = vld [vmem:[#allocation4 + $0xc] sm:$0xff]
    %v2235 = vld [vmem:[#allocation4 + $0x14] sm:$0xf]
    %v2236 = vld [vmem:[#allocation4 + $0x18] sm:$0xff]
    %v2237 = vld [vmem:[#allocation4 + $0x20] sm:$0xf]
    %v2238 = vld [vmem:[#allocation4 + $0x24] sm:$0xff]
    %v2239 = vld [vmem:[#allocation4 + $0x2c] sm:$0xf]
    %v2240 = vld [vmem:[#allocation4 + $0x30] sm:$0xff]
    %v2241 = vld [vmem:[#allocation4 + $0x38] sm:$0xf]
    %v2242 = vld [vmem:[#allocation4 + $0x3c] sm:$0xff]
    %v2243 = vld [vmem:[#allocation4 + $0x44] sm:$0xf]
    %v2244 = vld [vmem:[#allocation4 + $0x48] sm:$0xff]
    %v2245 = vld [vmem:[#allocation4 + $0x50] sm:$0xf]
    %v2246 = vld [vmem:[#allocation4 + $0x54] sm:$0xff]
    %v2247 = vld [vmem:[#allocation4 + $0x5c] sm:$0xf]
    %v2248 = vld [vmem:[#allocation4 + $0x60] sm:$0xff]
    %v2249 = vld [vmem:[#allocation4 + $0x68] sm:$0xf]
    %v2250 = vld [vmem:[#allocation4 + $0x6c] sm:$0xff]
    %v2251 = vld [vmem:[#allocation4 + $0x74] sm:$0xf]
    %v2252 = vld [vmem:[#allocation4 + $0x78] sm:$0xff]
    %v2253 = vld [vmem:[#allocation4 + $0x80] sm:$0xf]
    %v2254 = vld [vmem:[#allocation4 + $0x84] sm:$0xff]
    %v2255 = vld [vmem:[#allocation4 + $0x8c] sm:$0xf]
    %v2256 = vld [vmem:[#allocation4 + $0x90] sm:$0xff]
    %v2257 = vld [vmem:[#allocation4 + $0x98] sm:$0xf]
    %v2258 = vld [vmem:[#allocation4 + $0x9c] sm:$0xff]
    %v2259 = vld [vmem:[#allocation4 + $0xa4] sm:$0xf]
    %v2260 = vld [vmem:[#allocation4 + $0xa8] sm:$0xff]
    %v2261 = vld [vmem:[#allocation4 + $0xb0] sm:$0xf]
    %v2262 = vld [vmem:[#allocation4 + $0xb4] sm:$0xff]
    %v2263 = vld [vmem:[#allocation4 + $0xbc] sm:$0xf]
    %v2264 = vld [vmem:[#allocation4 + $0xc0] sm:$0xff]
    %v2265 = vld [vmem:[#allocation4 + $0xc8] sm:$0xf]
    %v2266 = vld [vmem:[#allocation4 + $0xcc] sm:$0xff]
    %v2267 = vld [vmem:[#allocation4 + $0xd4] sm:$0xf]
    %v2268 = vld [vmem:[#allocation4 + $0xd8] sm:$0xff]
    %v2269 = vld [vmem:[#allocation4 + $0xe0] sm:$0xf]
    %v2270 = vld [vmem:[#allocation4 + $0xe4] sm:$0xff]
    %v2271 = vld [vmem:[#allocation4 + $0xec] sm:$0xf]
    %v2272 = vld [vmem:[#allocation4 + $0xf0] sm:$0xff]
    %v2273 = vld [vmem:[#allocation4 + $0xf8] sm:$0xf]
    %v2274 = vld [vmem:[#allocation4 + $0xfc] sm:$0xff]
    %v2275 = vld [vmem:[#allocation4 + $0x104] sm:$0xf]
    %v2276 = vld [vmem:[#allocation4 + $0x108] sm:$0xff]
    %v2277 = vld [vmem:[#allocation4 + $0x110] sm:$0xf]
    %v2278 = vld [vmem:[#allocation4 + $0x114] sm:$0xff]
    %v2279 = vld [vmem:[#allocation4 + $0x11c] sm:$0xf]
    %v2280 = vld [vmem:[#allocation4 + $0x120] sm:$0xff]
    %v2281 = vld [vmem:[#allocation4 + $0x128] sm:$0xf]
    %v2282 = vld [vmem:[#allocation4 + $0x12c] sm:$0xff]
    %v2283 = vld [vmem:[#allocation4 + $0x134] sm:$0xf]
    %v2284 = vld [vmem:[#allocation4 + $0x138] sm:$0xff]
    %v2285 = vld [vmem:[#allocation4 + $0x140] sm:$0xf]
    %v2286 = vld [vmem:[#allocation4 + $0x144] sm:$0xff]
    %v2287 = vld [vmem:[#allocation4 + $0x14c] sm:$0xf]
    %v2288 = vld [vmem:[#allocation4 + $0x150] sm:$0xff]
    %v2289 = vld [vmem:[#allocation4 + $0x158] sm:$0xf]
    %v2290 = vld [vmem:[#allocation4 + $0x15c] sm:$0xff]
    %v2291 = vld [vmem:[#allocation4 + $0x164] sm:$0xf]
    %v2292 = vld [vmem:[#allocation4 + $0x168] sm:$0xff]
    %v2293 = vld [vmem:[#allocation4 + $0x170] sm:$0xf]
    %v2294 = vld [vmem:[#allocation4 + $0x174] sm:$0xff]
    %v2295 = vld [vmem:[#allocation4 + $0x17c] sm:$0xf]
    %v2296 = vld [vmem:[#allocation4 + $0x180] sm:$0xff]
    %v2297 = vld [vmem:[#allocation4 + $0x188] sm:$0xf]
    %v2298 = vld [vmem:[#allocation4 + $0x18c] sm:$0xff]
    %v2299 = vld [vmem:[#allocation4 + $0x194] sm:$0xf]
    %v2300 = vld [vmem:[#allocation4 + $0x198] sm:$0xff]
    %v2301 = vld [vmem:[#allocation4 + $0x1a0] sm:$0xf]
    %v2302 = vld [vmem:[#allocation4 + $0x1a4] sm:$0xff]
    %v2303 = vld [vmem:[#allocation4 + $0x1ac] sm:$0xf]
    %v2304 = vld [vmem:[#allocation4 + $0x1b0] sm:$0xff]
    %v2305 = vld [vmem:[#allocation4 + $0x1b8] sm:$0xf]
    %v2306 = vld [vmem:[#allocation4 + $0x1bc] sm:$0xff]
    %v2307 = vld [vmem:[#allocation4 + $0x1c4] sm:$0xf]
    %v2308 = vld [vmem:[#allocation4 + $0x1c8] sm:$0xff]
    %v2309 = vld [vmem:[#allocation4 + $0x1d0] sm:$0xf]
    %v2310 = vld [vmem:[#allocation4 + $0x1d4] sm:$0xff]
    %v2311 = vld [vmem:[#allocation4 + $0x1dc] sm:$0xf]
    %v2312 = vld [vmem:[#allocation4 + $0x1e0] sm:$0xff]
    %v2313 = vld [vmem:[#allocation4 + $0x1e8] sm:$0xf]
    %v2314 = vld [vmem:[#allocation4 + $0x1ec] sm:$0xff]
    %v2315 = vld [vmem:[#allocation4 + $0x1f4] sm:$0xf]
    %v2316 = vld [vmem:[#allocation4 + $0x1f8] sm:$0xff]
    %v2317 = vld [vmem:[#allocation4 + $0x200] sm:$0xf]
    %v2318 = vld [vmem:[#allocation4 + $0x204] sm:$0xff]
    %v2319 = vld [vmem:[#allocation4 + $0x20c] sm:$0xf]
    %v2320 = vld [vmem:[#allocation4 + $0x210] sm:$0xff]
    %v2321 = vld [vmem:[#allocation4 + $0x218] sm:$0xf]
    %v2322 = vld [vmem:[#allocation4 + $0x21c] sm:$0xff]
    %v2323 = vld [vmem:[#allocation4 + $0x224] sm:$0xf]
    %v2324 = vld [vmem:[#allocation4 + $0x228] sm:$0xff]
    %v2325 = vld [vmem:[#allocation4 + $0x230] sm:$0xf]
    %v2326 = vld [vmem:[#allocation4 + $0x234] sm:$0xff]
    %v2327 = vld [vmem:[#allocation4 + $0x23c] sm:$0xf]
    %v2328 = vld [vmem:[#allocation4 + $0x240] sm:$0xff]
    %v2329 = vld [vmem:[#allocation4 + $0x248] sm:$0xf]
    %v2330 = vld [vmem:[#allocation4 + $0x24c] sm:$0xff]
    %v2331 = vld [vmem:[#allocation4 + $0x254] sm:$0xf]
    %v2332 = vld [vmem:[#allocation4 + $0x258] sm:$0xff]
    %v2333 = vld [vmem:[#allocation4 + $0x260] sm:$0xf]
    %v2334 = vld [vmem:[#allocation4 + $0x264] sm:$0xff]
    %v2335 = vld [vmem:[#allocation4 + $0x26c] sm:$0xf]
    %v2336 = vld [vmem:[#allocation4 + $0x270] sm:$0xff]
    %v2337 = vld [vmem:[#allocation4 + $0x278] sm:$0xf]
    %v2338 = vld [vmem:[#allocation4 + $0x27c] sm:$0xff]
    %v2339 = vld [vmem:[#allocation4 + $0x284] sm:$0xf]
    %v2340 = vld [vmem:[#allocation4 + $0x288] sm:$0xff]
    %v2341 = vld [vmem:[#allocation4 + $0x290] sm:$0xf]
    %v2342 = vld [vmem:[#allocation4 + $0x294] sm:$0xff]
    %v2343 = vld [vmem:[#allocation4 + $0x29c] sm:$0xf]
    %v2344 = vld [vmem:[#allocation4 + $0x2a0] sm:$0xff]
    %v2345 = vld [vmem:[#allocation4 + $0x2a8] sm:$0xf]
    %v2346 = vld [vmem:[#allocation4 + $0x2ac] sm:$0xff]
    %v2347 = vld [vmem:[#allocation4 + $0x2b4] sm:$0xf]
    %v2348 = vld [vmem:[#allocation4 + $0x2b8] sm:$0xff]
    %v2349 = vld [vmem:[#allocation4 + $0x2c0] sm:$0xf]
    %v2350 = vld [vmem:[#allocation4 + $0x2c4] sm:$0xff]
    %v2351 = vld [vmem:[#allocation4 + $0x2cc] sm:$0xf]
    %v2352 = vld [vmem:[#allocation4 + $0x2d0] sm:$0xff]
    %v2353 = vld [vmem:[#allocation4 + $0x2d8] sm:$0xf]
    %v2354 = vld [vmem:[#allocation4 + $0x2dc] sm:$0xff]
    %v2355 = vld [vmem:[#allocation4 + $0x2e4] sm:$0xf]
    %v2356 = vld [vmem:[#allocation4 + $0x2e8] sm:$0xff]
    %v2357 = vld [vmem:[#allocation4 + $0x2f0] sm:$0xf]
    %v2358 = vld [vmem:[#allocation4 + $0x2f4] sm:$0xff]
    %v2359 = vld [vmem:[#allocation4 + $0x2fc] sm:$0xf]
    %v2360 = vld [vmem:[#allocation4 + $0x300] sm:$0xff]
    %v2361 = vld [vmem:[#allocation4 + $0x308] sm:$0xf]
    %v2362 = vld [vmem:[#allocation4 + $0x30c] sm:$0xff]
    %v2363 = vld [vmem:[#allocation4 + $0x314] sm:$0xf]
    %v2364 = vld [vmem:[#allocation4 + $0x318] sm:$0xff]
    %v2365 = vld [vmem:[#allocation4 + $0x320] sm:$0xf]
    %v2366 = vld [vmem:[#allocation4 + $0x324] sm:$0xff]
    %v2367 = vld [vmem:[#allocation4 + $0x32c] sm:$0xf]
    %v2368 = vld [vmem:[#allocation4 + $0x330] sm:$0xff]
    %v2369 = vld [vmem:[#allocation4 + $0x338] sm:$0xf]
    %v2370 = vld [vmem:[#allocation4 + $0x33c] sm:$0xff]
    %v2371 = vld [vmem:[#allocation4 + $0x344] sm:$0xf]
    %v2372 = vld [vmem:[#allocation4 + $0x348] sm:$0xff]
    %v2373 = vld [vmem:[#allocation4 + $0x350] sm:$0xf]
    %v2374 = vld [vmem:[#allocation4 + $0x354] sm:$0xff]
    %v2375 = vld [vmem:[#allocation4 + $0x35c] sm:$0xf]
    %v2376 = vld [vmem:[#allocation4 + $0x360] sm:$0xff]
    %v2377 = vld [vmem:[#allocation4 + $0x368] sm:$0xf]
    %v2378 = vld [vmem:[#allocation4 + $0x36c] sm:$0xff]
    %v2379 = vld [vmem:[#allocation4 + $0x374] sm:$0xf]
    %v2380 = vld [vmem:[#allocation4 + $0x378] sm:$0xff]
    %v2381 = vld [vmem:[#allocation4 + $0x380] sm:$0xf]
    %v2382 = vld [vmem:[#allocation4 + $0x384] sm:$0xff]
    %v2383 = vld [vmem:[#allocation4 + $0x38c] sm:$0xf]
    %v2384 = vld [vmem:[#allocation4 + $0x390] sm:$0xff]
    %v2385 = vld [vmem:[#allocation4 + $0x398] sm:$0xf]
    %v2386 = vld [vmem:[#allocation4 + $0x39c] sm:$0xff]
    %v2387 = vld [vmem:[#allocation4 + $0x3a4] sm:$0xf]
    %v2388 = vld [vmem:[#allocation4 + $0x3a8] sm:$0xff]
    %v2389 = vld [vmem:[#allocation4 + $0x3b0] sm:$0xf]
    %v2390 = vld [vmem:[#allocation4 + $0x3b4] sm:$0xff]
    %v2391 = vld [vmem:[#allocation4 + $0x3bc] sm:$0xf]
    %v2392 = vld [vmem:[%s4] sm:$0x7]
    %v2394 = vlaneseq
    %v2395 = vshrl.u32 %v2394, 7
    %v2396 = vsub.s32 0, %v2395
    %v2397 = vrot.slane %v2392, %v2396
    %v2398 = vlaneseq
    %v2399 = vshrl.u32 %v2398, 7
    %v2400 = vsub.s32 1, %v2399
    %v2401 = vrot.slane %v2392, %v2400
    %v2402 = vlaneseq
    %v2403 = vshrl.u32 %v2402, 7
    %v2404 = vsub.s32 2, %v2403
    %v2405 = vrot.slane %v2392, %v2404
    %v2569 = vunpack.c.l.b16 %v2232
    %v2570 = vunpack.c.h.b16 %v2232
    %v2571 = vunpack.c.l.b16 %v2233
    %v2572 = vunpack.c.l.b16 %v2234
    %v2573 = vunpack.c.h.b16 %v2234
    %v2574 = vunpack.c.l.b16 %v2235
    %v2575 = vunpack.c.l.b16 %v2236
    %v2576 = vunpack.c.h.b16 %v2236
    %v2577 = vunpack.c.l.b16 %v2237
    %v2578 = vunpack.c.l.b16 %v2238
    %v2579 = vunpack.c.h.b16 %v2238
    %v2580 = vunpack.c.l.b16 %v2239
    %v2581 = vunpack.c.l.b16 %v2240
    %v2582 = vunpack.c.h.b16 %v2240
    %v2583 = vunpack.c.l.b16 %v2241
    %v2584 = vunpack.c.l.b16 %v2242
    %v2585 = vunpack.c.h.b16 %v2242
    %v2586 = vunpack.c.l.b16 %v2243
    %v2587 = vunpack.c.l.b16 %v2244
    %v2588 = vunpack.c.h.b16 %v2244
    %v2589 = vunpack.c.l.b16 %v2245
    %v2590 = vunpack.c.l.b16 %v2246
    %v2591 = vunpack.c.h.b16 %v2246
    %v2592 = vunpack.c.l.b16 %v2247
    %v2593 = vunpack.c.l.b16 %v2248
    %v2594 = vunpack.c.h.b16 %v2248
    %v2595 = vunpack.c.l.b16 %v2249
    %v2596 = vunpack.c.l.b16 %v2250
    %v2597 = vunpack.c.h.b16 %v2250
    %v2598 = vunpack.c.l.b16 %v2251
    %v2599 = vunpack.c.l.b16 %v2252
    %v2600 = vunpack.c.h.b16 %v2252
    %v2601 = vunpack.c.l.b16 %v2253
    %v2602 = vunpack.c.l.b16 %v2254
    %v2603 = vunpack.c.h.b16 %v2254
    %v2604 = vunpack.c.l.b16 %v2255
    %v2605 = vunpack.c.l.b16 %v2256
    %v2606 = vunpack.c.h.b16 %v2256
    %v2607 = vunpack.c.l.b16 %v2257
    %v2608 = vunpack.c.l.b16 %v2258
    %v2609 = vunpack.c.h.b16 %v2258
    %v2610 = vunpack.c.l.b16 %v2259
    %v2611 = vunpack.c.l.b16 %v2260
    %v2612 = vunpack.c.h.b16 %v2260
    %v2613 = vunpack.c.l.b16 %v2261
    %v2614 = vunpack.c.l.b16 %v2262
    %v2615 = vunpack.c.h.b16 %v2262
    %v2616 = vunpack.c.l.b16 %v2263
    %v2617 = vunpack.c.l.b16 %v2264
    %v2618 = vunpack.c.h.b16 %v2264
    %v2619 = vunpack.c.l.b16 %v2265
    %v2620 = vunpack.c.l.b16 %v2266
    %v2621 = vunpack.c.h.b16 %v2266
    %v2622 = vunpack.c.l.b16 %v2267
    %v2623 = vunpack.c.l.b16 %v2268
    %v2624 = vunpack.c.h.b16 %v2268
    %v2625 = vunpack.c.l.b16 %v2269
    %v2626 = vunpack.c.l.b16 %v2270
    %v2627 = vunpack.c.h.b16 %v2270
    %v2628 = vunpack.c.l.b16 %v2271
    %v2629 = vunpack.c.l.b16 %v2272
    %v2630 = vunpack.c.h.b16 %v2272
    %v2631 = vunpack.c.l.b16 %v2273
    %v2632 = vunpack.c.l.b16 %v2274
    %v2633 = vunpack.c.h.b16 %v2274
    %v2634 = vunpack.c.l.b16 %v2275
    %v2635 = vunpack.c.l.b16 %v2276
    %v2636 = vunpack.c.h.b16 %v2276
    %v2637 = vunpack.c.l.b16 %v2277
    %v2638 = vunpack.c.l.b16 %v2278
    %v2639 = vunpack.c.h.b16 %v2278
    %v2640 = vunpack.c.l.b16 %v2279
    %v2641 = vunpack.c.l.b16 %v2280
    %v2642 = vunpack.c.h.b16 %v2280
    %v2643 = vunpack.c.l.b16 %v2281
    %v2644 = vunpack.c.l.b16 %v2282
    %v2645 = vunpack.c.h.b16 %v2282
    %v2646 = vunpack.c.l.b16 %v2283
    %v2647 = vunpack.c.l.b16 %v2284
    %v2648 = vunpack.c.h.b16 %v2284
    %v2649 = vunpack.c.l.b16 %v2285
    %v2650 = vunpack.c.l.b16 %v2286
    %v2651 = vunpack.c.h.b16 %v2286
    %v2652 = vunpack.c.l.b16 %v2287
    %v2653 = vunpack.c.l.b16 %v2288
    %v2654 = vunpack.c.h.b16 %v2288
    %v2655 = vunpack.c.l.b16 %v2289
    %v2656 = vunpack.c.l.b16 %v2290
    %v2657 = vunpack.c.h.b16 %v2290
    %v2658 = vunpack.c.l.b16 %v2291
    %v2659 = vunpack.c.l.b16 %v2292
    %v2660 = vunpack.c.h.b16 %v2292
    %v2661 = vunpack.c.l.b16 %v2293
    %v2662 = vunpack.c.l.b16 %v2294
    %v2663 = vunpack.c.h.b16 %v2294
    %v2664 = vunpack.c.l.b16 %v2295
    %v2665 = vunpack.c.l.b16 %v2296
    %v2666 = vunpack.c.h.b16 %v2296
    %v2667 = vunpack.c.l.b16 %v2297
    %v2668 = vunpack.c.l.b16 %v2298
    %v2669 = vunpack.c.h.b16 %v2298
    %v2670 = vunpack.c.l.b16 %v2299
    %v2671 = vunpack.c.l.b16 %v2300
    %v2672 = vunpack.c.h.b16 %v2300
    %v2673 = vunpack.c.l.b16 %v2301
    %v2674 = vunpack.c.l.b16 %v2302
    %v2675 = vunpack.c.h.b16 %v2302
    %v2676 = vunpack.c.l.b16 %v2303
    %v2677 = vunpack.c.l.b16 %v2304
    %v2678 = vunpack.c.h.b16 %v2304
    %v2679 = vunpack.c.l.b16 %v2305
    %v2680 = vunpack.c.l.b16 %v2306
    %v2681 = vunpack.c.h.b16 %v2306
    %v2682 = vunpack.c.l.b16 %v2307
    %v2683 = vunpack.c.l.b16 %v2308
    %v2684 = vunpack.c.h.b16 %v2308
    %v2685 = vunpack.c.l.b16 %v2309
    %v2686 = vunpack.c.l.b16 %v2310
    %v2687 = vunpack.c.h.b16 %v2310
    %v2688 = vunpack.c.l.b16 %v2311
    %v2689 = vunpack.c.l.b16 %v2312
    %v2690 = vunpack.c.h.b16 %v2312
    %v2691 = vunpack.c.l.b16 %v2313
    %v2692 = vunpack.c.l.b16 %v2314
    %v2693 = vunpack.c.h.b16 %v2314
    %v2694 = vunpack.c.l.b16 %v2315
    %v2695 = vunpack.c.l.b16 %v2316
    %v2696 = vunpack.c.h.b16 %v2316
    %v2697 = vunpack.c.l.b16 %v2317
    %v2698 = vunpack.c.l.b16 %v2318
    %v2699 = vunpack.c.h.b16 %v2318
    %v2700 = vunpack.c.l.b16 %v2319
    %v2701 = vunpack.c.l.b16 %v2320
    %v2702 = vunpack.c.h.b16 %v2320
    %v2703 = vunpack.c.l.b16 %v2321
    %v2704 = vunpack.c.l.b16 %v2322
    %v2705 = vunpack.c.h.b16 %v2322
    %v2706 = vunpack.c.l.b16 %v2323
    %v2707 = vunpack.c.l.b16 %v2324
    %v2708 = vunpack.c.h.b16 %v2324
    %v2709 = vunpack.c.l.b16 %v2325
    %v2710 = vunpack.c.l.b16 %v2326
    %v2711 = vunpack.c.h.b16 %v2326
    %v2712 = vunpack.c.l.b16 %v2327
    %v2713 = vunpack.c.l.b16 %v2328
    %v2714 = vunpack.c.h.b16 %v2328
    %v2715 = vunpack.c.l.b16 %v2329
    %v2716 = vunpack.c.l.b16 %v2330
    %v2717 = vunpack.c.h.b16 %v2330
    %v2718 = vunpack.c.l.b16 %v2331
    %v2719 = vunpack.c.l.b16 %v2332
    %v2720 = vunpack.c.h.b16 %v2332
    %v2721 = vunpack.c.l.b16 %v2333
    %v2722 = vunpack.c.l.b16 %v2334
    %v2723 = vunpack.c.h.b16 %v2334
    %v2724 = vunpack.c.l.b16 %v2335
    %v2725 = vunpack.c.l.b16 %v2336
    %v2726 = vunpack.c.h.b16 %v2336
    %v2727 = vunpack.c.l.b16 %v2337
    %v2728 = vunpack.c.l.b16 %v2338
    %v2729 = vunpack.c.h.b16 %v2338
    %v2730 = vunpack.c.l.b16 %v2339
    %v2731 = vunpack.c.l.b16 %v2340
    %v2732 = vunpack.c.h.b16 %v2340
    %v2733 = vunpack.c.l.b16 %v2341
    %v2734 = vunpack.c.l.b16 %v2342
    %v2735 = vunpack.c.h.b16 %v2342
    %v2736 = vunpack.c.l.b16 %v2343
    %v2737 = vunpack.c.l.b16 %v2344
    %v2738 = vunpack.c.h.b16 %v2344
    %v2739 = vunpack.c.l.b16 %v2345
    %v2740 = vunpack.c.l.b16 %v2346
    %v2741 = vunpack.c.h.b16 %v2346
    %v2742 = vunpack.c.l.b16 %v2347
    %v2743 = vunpack.c.l.b16 %v2348
    %v2744 = vunpack.c.h.b16 %v2348
    %v2745 = vunpack.c.l.b16 %v2349
    %v2746 = vunpack.c.l.b16 %v2350
    %v2747 = vunpack.c.h.b16 %v2350
    %v2748 = vunpack.c.l.b16 %v2351
    %v2749 = vunpack.c.l.b16 %v2352
    %v2750 = vunpack.c.h.b16 %v2352
    %v2751 = vunpack.c.l.b16 %v2353
    %v2752 = vunpack.c.l.b16 %v2354
    %v2753 = vunpack.c.h.b16 %v2354
    %v2754 = vunpack.c.l.b16 %v2355
    %v2755 = vunpack.c.l.b16 %v2356
    %v2756 = vunpack.c.h.b16 %v2356
    %v2757 = vunpack.c.l.b16 %v2357
    %v2758 = vunpack.c.l.b16 %v2358
    %v2759 = vunpack.c.h.b16 %v2358
    %v2760 = vunpack.c.l.b16 %v2359
    %v2761 = vunpack.c.l.b16 %v2360
    %v2762 = vunpack.c.h.b16 %v2360
    %v2763 = vunpack.c.l.b16 %v2361
    %v2764 = vunpack.c.l.b16 %v2362
    %v2765 = vunpack.c.h.b16 %v2362
    %v2766 = vunpack.c.l.b16 %v2363
    %v2767 = vunpack.c.l.b16 %v2364
    %v2768 = vunpack.c.h.b16 %v2364
    %v2769 = vunpack.c.l.b16 %v2365
    %v2770 = vunpack.c.l.b16 %v2366
    %v2771 = vunpack.c.h.b16 %v2366
    %v2772 = vunpack.c.l.b16 %v2367
    %v2773 = vunpack.c.l.b16 %v2368
    %v2774 = vunpack.c.h.b16 %v2368
    %v2775 = vunpack.c.l.b16 %v2369
    %v2776 = vunpack.c.l.b16 %v2370
    %v2777 = vunpack.c.h.b16 %v2370
    %v2778 = vunpack.c.l.b16 %v2371
    %v2779 = vunpack.c.l.b16 %v2372
    %v2780 = vunpack.c.h.b16 %v2372
    %v2781 = vunpack.c.l.b16 %v2373
    %v2782 = vunpack.c.l.b16 %v2374
    %v2783 = vunpack.c.h.b16 %v2374
    %v2784 = vunpack.c.l.b16 %v2375
    %v2785 = vunpack.c.l.b16 %v2376
    %v2786 = vunpack.c.h.b16 %v2376
    %v2787 = vunpack.c.l.b16 %v2377
    %v2788 = vunpack.c.l.b16 %v2378
    %v2789 = vunpack.c.h.b16 %v2378
    %v2790 = vunpack.c.l.b16 %v2379
    %v2791 = vunpack.c.l.b16 %v2380
    %v2792 = vunpack.c.h.b16 %v2380
    %v2793 = vunpack.c.l.b16 %v2381
    %v2794 = vunpack.c.l.b16 %v2382
    %v2795 = vunpack.c.h.b16 %v2382
    %v2796 = vunpack.c.l.b16 %v2383
    %v2797 = vunpack.c.l.b16 %v2384
    %v2798 = vunpack.c.h.b16 %v2384
    %v2799 = vunpack.c.l.b16 %v2385
    %v2800 = vunpack.c.l.b16 %v2386
    %v2801 = vunpack.c.h.b16 %v2386
    %v2802 = vunpack.c.l.b16 %v2387
    %v2803 = vunpack.c.l.b16 %v2388
    %v2804 = vunpack.c.h.b16 %v2388
    %v2805 = vunpack.c.l.b16 %v2389
    %v2806 = vunpack.c.l.b16 %v2390
    %v2807 = vunpack.c.h.b16 %v2390
    %v2808 = vunpack.c.l.b16 %v2391
    %v2809 = vpack.c.b16 %v2572, %v2569
    %v2810 = vpack.c.b16 %v2573, %v2570
    %v2811 = vpack.c.b16 %v2574, %v2571
    %v2812 = vpack.c.b16 %v2578, %v2575
    %v2813 = vpack.c.b16 %v2579, %v2576
    %v2814 = vpack.c.b16 %v2580, %v2577
    %v2815 = vpack.c.b16 %v2584, %v2581
    %v2816 = vpack.c.b16 %v2585, %v2582
    %v2817 = vpack.c.b16 %v2586, %v2583
    %v2818 = vpack.c.b16 %v2590, %v2587
    %v2819 = vpack.c.b16 %v2591, %v2588
    %v2820 = vpack.c.b16 %v2592, %v2589
    %v2821 = vpack.c.b16 %v2596, %v2593
    %v2822 = vpack.c.b16 %v2597, %v2594
    %v2823 = vpack.c.b16 %v2598, %v2595
    %v2824 = vpack.c.b16 %v2602, %v2599
    %v2825 = vpack.c.b16 %v2603, %v2600
    %v2826 = vpack.c.b16 %v2604, %v2601
    %v2827 = vpack.c.b16 %v2608, %v2605
    %v2828 = vpack.c.b16 %v2609, %v2606
    %v2829 = vpack.c.b16 %v2610, %v2607
    %v2830 = vpack.c.b16 %v2614, %v2611
    %v2831 = vpack.c.b16 %v2615, %v2612
    %v2832 = vpack.c.b16 %v2616, %v2613
    %v2833 = vpack.c.b16 %v2620, %v2617
    %v2834 = vpack.c.b16 %v2621, %v2618
    %v2835 = vpack.c.b16 %v2622, %v2619
    %v2836 = vpack.c.b16 %v2626, %v2623
    %v2837 = vpack.c.b16 %v2627, %v2624
    %v2838 = vpack.c.b16 %v2628, %v2625
    %v2839 = vpack.c.b16 %v2632, %v2629
    %v2840 = vpack.c.b16 %v2633, %v2630
    %v2841 = vpack.c.b16 %v2634, %v2631
    %v2842 = vpack.c.b16 %v2638, %v2635
    %v2843 = vpack.c.b16 %v2639, %v2636
    %v2844 = vpack.c.b16 %v2640, %v2637
    %v2845 = vpack.c.b16 %v2644, %v2641
    %v2846 = vpack.c.b16 %v2645, %v2642
    %v2847 = vpack.c.b16 %v2646, %v2643
    %v2848 = vpack.c.b16 %v2650, %v2647
    %v2849 = vpack.c.b16 %v2651, %v2648
    %v2850 = vpack.c.b16 %v2652, %v2649
    %v2851 = vpack.c.b16 %v2656, %v2653
    %v2852 = vpack.c.b16 %v2657, %v2654
    %v2853 = vpack.c.b16 %v2658, %v2655
    %v2854 = vpack.c.b16 %v2662, %v2659
    %v2855 = vpack.c.b16 %v2663, %v2660
    %v2856 = vpack.c.b16 %v2664, %v2661
    %v2857 = vpack.c.b16 %v2668, %v2665
    %v2858 = vpack.c.b16 %v2669, %v2666
    %v2859 = vpack.c.b16 %v2670, %v2667
    %v2860 = vpack.c.b16 %v2674, %v2671
    %v2861 = vpack.c.b16 %v2675, %v2672
    %v2862 = vpack.c.b16 %v2676, %v2673
    %v2863 = vpack.c.b16 %v2680, %v2677
    %v2864 = vpack.c.b16 %v2681, %v2678
    %v2865 = vpack.c.b16 %v2682, %v2679
    %v2866 = vpack.c.b16 %v2686, %v2683
    %v2867 = vpack.c.b16 %v2687, %v2684
    %v2868 = vpack.c.b16 %v2688, %v2685
    %v2869 = vpack.c.b16 %v2692, %v2689
    %v2870 = vpack.c.b16 %v2693, %v2690
    %v2871 = vpack.c.b16 %v2694, %v2691
    %v2872 = vpack.c.b16 %v2698, %v2695
    %v2873 = vpack.c.b16 %v2699, %v2696
    %v2874 = vpack.c.b16 %v2700, %v2697
    %v2875 = vpack.c.b16 %v2704, %v2701
    %v2876 = vpack.c.b16 %v2705, %v2702
    %v2877 = vpack.c.b16 %v2706, %v2703
    %v2878 = vpack.c.b16 %v2710, %v2707
    %v2879 = vpack.c.b16 %v2711, %v2708
    %v2880 = vpack.c.b16 %v2712, %v2709
    %v2881 = vpack.c.b16 %v2716, %v2713
    %v2882 = vpack.c.b16 %v2717, %v2714
    %v2883 = vpack.c.b16 %v2718, %v2715
    %v2884 = vpack.c.b16 %v2722, %v2719
    %v2885 = vpack.c.b16 %v2723, %v2720
    %v2886 = vpack.c.b16 %v2724, %v2721
    %v2887 = vpack.c.b16 %v2728, %v2725
    %v2888 = vpack.c.b16 %v2729, %v2726
    %v2889 = vpack.c.b16 %v2730, %v2727
    %v2890 = vpack.c.b16 %v2734, %v2731
    %v2891 = vpack.c.b16 %v2735, %v2732
    %v2892 = vpack.c.b16 %v2736, %v2733
    %v2893 = vpack.c.b16 %v2740, %v2737
    %v2894 = vpack.c.b16 %v2741, %v2738
    %v2895 = vpack.c.b16 %v2742, %v2739
    %v2896 = vpack.c.b16 %v2746, %v2743
    %v2897 = vpack.c.b16 %v2747, %v2744
    %v2898 = vpack.c.b16 %v2748, %v2745
    %v2899 = vpack.c.b16 %v2752, %v2749
    %v2900 = vpack.c.b16 %v2753, %v2750
    %v2901 = vpack.c.b16 %v2754, %v2751
    %v2902 = vpack.c.b16 %v2758, %v2755
    %v2903 = vpack.c.b16 %v2759, %v2756
    %v2904 = vpack.c.b16 %v2760, %v2757
    %v2905 = vpack.c.b16 %v2764, %v2761
    %v2906 = vpack.c.b16 %v2765, %v2762
    %v2907 = vpack.c.b16 %v2766, %v2763
    %v2908 = vpack.c.b16 %v2770, %v2767
    %v2909 = vpack.c.b16 %v2771, %v2768
    %v2910 = vpack.c.b16 %v2772, %v2769
    %v2911 = vpack.c.b16 %v2776, %v2773
    %v2912 = vpack.c.b16 %v2777, %v2774
    %v2913 = vpack.c.b16 %v2778, %v2775
    %v2914 = vpack.c.b16 %v2782, %v2779
    %v2915 = vpack.c.b16 %v2783, %v2780
    %v2916 = vpack.c.b16 %v2784, %v2781
    %v2917 = vpack.c.b16 %v2788, %v2785
    %v2918 = vpack.c.b16 %v2789, %v2786
    %v2919 = vpack.c.b16 %v2790, %v2787
    %v2920 = vpack.c.b16 %v2794, %v2791
    %v2921 = vpack.c.b16 %v2795, %v2792
    %v2922 = vpack.c.b16 %v2796, %v2793
    %v2923 = vpack.c.b16 %v2800, %v2797
    %v2924 = vpack.c.b16 %v2801, %v2798
    %v2925 = vpack.c.b16 %v2802, %v2799
    %v2926 = vpack.c.b16 %v2806, %v2803
    %v2927 = vpack.c.b16 %v2807, %v2804
    %v2928 = vpack.c.b16 %v2808, %v2805
    %3049 = vmatprep.subr.bf16.mxu0 %v2810
    %3050 = vmatpush1.bf16.msra.mxu0 %v2809
    %3051 = vmatprep.subr.bf16.mxu0 %v2813
    %3052 = vmatpush1.bf16.msra.mxu0 %v2812
    %3053 = vmatprep.subr.bf16.mxu0 %v2816
    %3054 = vmatpush1.bf16.msra.mxu0 %v2815
    %3055 = vmatprep.subr.bf16.mxu0 %v2819
    %3056 = vmatpush1.bf16.msra.mxu0 %v2818
    %3057 = vmatprep.subr.bf16.mxu0 %v2822
    %3058 = vmatpush1.bf16.msra.mxu0 %v2821
    %3059 = vmatprep.subr.bf16.mxu0 %v2825
    %3060 = vmatpush1.bf16.msra.mxu0 %v2824
    %3061 = vmatprep.subr.bf16.mxu0 %v2828
    %3062 = vmatpush1.bf16.msra.mxu0 %v2827
    %3063 = vmatprep.subr.bf16.mxu0 %v2831
    %3064 = vmatpush1.bf16.msra.mxu0 %v2830
    %3065 = vmatprep.subr.bf16.mxu0 %v2834
    %3066 = vmatpush1.bf16.msra.mxu0 %v2833
    %3067 = vmatprep.subr.bf16.mxu0 %v2837
    %3068 = vmatpush1.bf16.msra.mxu0 %v2836
    %3069 = vmatprep.subr.bf16.mxu0 %v2840
    %3070 = vmatpush1.bf16.msra.mxu0 %v2839
    %3071 = vmatprep.subr.bf16.mxu0 %v2843
    %3072 = vmatpush1.bf16.msra.mxu0 %v2842
    %3073 = vmatprep.subr.bf16.mxu0 %v2846
    %3074 = vmatpush1.bf16.msra.mxu0 %v2845
    %3075 = vmatprep.subr.bf16.mxu0 %v2849
    %3076 = vmatpush1.bf16.msra.mxu0 %v2848
    %3077 = vmatprep.subr.bf16.mxu0 %v2852
    %3078 = vmatpush1.bf16.msra.mxu0 %v2851
    %3079 = vmatprep.subr.bf16.mxu0 %v2855
    %3080 = vmatpush1.bf16.msra.mxu0 %v2854
    %3081 = vmatprep.mubr.bf16.mxu0 %v2228
    %3082 = vmatmul.mubr.bf16.gmra.mrb[0].mxu0 %v2227
    %v3083 = vpop.f32.mrb[0].mxu0
    %v3084 = vadd.f32 %v2397, %v3083
    %v3085 = vpop.f32.mrb[0].mxu0
    %v3086 = vadd.f32 %v2401, %v3085
    %v3087 = vpop.f32.mrb[0].mxu0
    %v3088 = vadd.f32 %v2397, %v3087
    %v3089 = vpop.f32.mrb[0].mxu0
    %v3090 = vadd.f32 %v2401, %v3089
    %3091 = vdwg.mxu0
    %3092 = vmatprep.subr.bf16.mxu0 %v2858
    %3093 = vmatpush1.bf16.msra.mxu0 %v2857
    %3094 = vmatprep.subr.bf16.mxu0 %v2861
    %3095 = vmatpush1.bf16.msra.mxu0 %v2860
    %3096 = vmatprep.subr.bf16.mxu0 %v2864
    %3097 = vmatpush1.bf16.msra.mxu0 %v2863
    %3098 = vmatprep.subr.bf16.mxu0 %v2867
    %3099 = vmatpush1.bf16.msra.mxu0 %v2866
    %3100 = vmatprep.subr.bf16.mxu0 %v2870
    %3101 = vmatpush1.bf16.msra.mxu0 %v2869
    %3102 = vmatprep.subr.bf16.mxu0 %v2873
    %3103 = vmatpush1.bf16.msra.mxu0 %v2872
    %3104 = vmatprep.subr.bf16.mxu0 %v2876
    %3105 = vmatpush1.bf16.msra.mxu0 %v2875
    %3106 = vmatprep.subr.bf16.mxu0 %v2879
    %3107 = vmatpush1.bf16.msra.mxu0 %v2878
    %3108 = vmatprep.subr.bf16.mxu0 %v2882
    %3109 = vmatpush1.bf16.msra.mxu0 %v2881
    %3110 = vmatprep.subr.bf16.mxu0 %v2885
    %3111 = vmatpush1.bf16.msra.mxu0 %v2884
    %3112 = vmatprep.subr.bf16.mxu0 %v2888
    %3113 = vmatpush1.bf16.msra.mxu0 %v2887
    %3114 = vmatprep.subr.bf16.mxu0 %v2891
    %3115 = vmatpush1.bf16.msra.mxu0 %v2890
    %3116 = vmatprep.subr.bf16.mxu0 %v2894
    %3117 = vmatpush1.bf16.msra.mxu0 %v2893
    %3118 = vmatprep.subr.bf16.mxu0 %v2897
    %3119 = vmatpush1.bf16.msra.mxu0 %v2896
    %3120 = vmatprep.subr.bf16.mxu0 %v2900
    %3121 = vmatpush1.bf16.msra.mxu0 %v2899
    %3122 = vmatprep.subr.bf16.mxu0 %v2903
    %3123 = vmatpush1.bf16.msra.mxu0 %v2902
    %3124 = vmatprep.mubr.bf16.mxu0 %v2230
    %3125 = vmatmul.mubr.bf16.gmra.mrb[0].mxu0 %v2229
    %v3126 = vpop.f32.mrb[0].mxu0
    %v3127 = vadd.f32 %v3084, %v3126
    %v3128 = vpop.f32.mrb[0].mxu0
    %v3129 = vadd.f32 %v3086, %v3128
    %v3130 = vpop.f32.mrb[0].mxu0
    %v3131 = vadd.f32 %v3088, %v3130
    %v3132 = vpop.f32.mrb[0].mxu0
    %v3133 = vadd.f32 %v3090, %v3132
    %3134 = vdwg.mxu0
    %3135 = vmatprep.subr.bf16.mxu0 %v2906
    %3136 = vmatpush1.bf16.msra.mxu0 %v2905
    %3137 = vmatprep.subr.bf16.mxu0 %v2909
    %3138 = vmatpush1.bf16.msra.mxu0 %v2908
    %3139 = vmatprep.subr.bf16.mxu0 %v2912
    %3140 = vmatpush1.bf16.msra.mxu0 %v2911
    %3141 = vmatprep.subr.bf16.mxu0 %v2915
    %3142 = vmatpush1.bf16.msra.mxu0 %v2914
    %3143 = vmatprep.subr.bf16.mxu0 %v2918
    %3144 = vmatpush1.bf16.msra.mxu0 %v2917
    %3145 = vmatprep.subr.bf16.mxu0 %v2921
    %3146 = vmatpush1.bf16.msra.mxu0 %v2920
    %3147 = vmatprep.subr.bf16.mxu0 %v2924
    %3148 = vmatpush1.bf16.msra.mxu0 %v2923
    %3149 = vmatprep.subr.bf16.mxu0 %v2927
    %3150 = vmatpush1.bf16.msra.mxu0 %v2926
    %3151 = vmatprep.subr.bf16.mxu0 0
    %3152 = vmatpush1.bf16.msra.mxu0 0
    %3153 = vmatprep.subr.bf16.mxu0 0
    %3154 = vmatpush1.bf16.msra.mxu0 0
    %3155 = vmatprep.subr.bf16.mxu0 0
    %3156 = vmatpush1.bf16.msra.mxu0 0
    %3157 = vmatprep.subr.bf16.mxu0 0
    %3158 = vmatpush1.bf16.msra.mxu0 0
    %3159 = vmatprep.subr.bf16.mxu0 0
    %3160 = vmatpush1.bf16.msra.mxu0 0
    %3161 = vmatprep.subr.bf16.mxu0 0
    %3162 = vmatpush1.bf16.msra.mxu0 0
    %3163 = vmatprep.subr.bf16.mxu0 0
    %3164 = vmatpush1.bf16.msra.mxu0 0
    %3165 = vmatprep.subr.bf16.mxu0 0
    %3166 = vmatpush1.bf16.msra.mxu0 0
    %3167 = vmatprep.mubr.bf16.mxu0 0
    %3168 = vmatmul.mubr.bf16.gmra.mrb[0].mxu0 %v2231
    %v3169 = vpop.f32.mrb[0].mxu0
    %v3170 = vadd.f32 %v3127, %v3169
    %v3171 = vpop.f32.mrb[0].mxu0
    %v3172 = vadd.f32 %v3129, %v3171
    %v3173 = vpop.f32.mrb[0].mxu0
    %v3174 = vadd.f32 %v3131, %v3173
    %v3175 = vpop.f32.mrb[0].mxu0
    %v3176 = vadd.f32 %v3133, %v3175
    %3177 = vdwg.mxu0
    %3178 = vmatprep.subr.bf16.mxu0 0
    %3179 = vmatpush1.bf16.msra.mxu0 %v2811
    %3180 = vmatprep.subr.bf16.mxu0 0
    %3181 = vmatpush1.bf16.msra.mxu0 %v2814
    %3182 = vmatprep.subr.bf16.mxu0 0
    %3183 = vmatpush1.bf16.msra.mxu0 %v2817
    %3184 = vmatprep.subr.bf16.mxu0 0
    %3185 = vmatpush1.bf16.msra.mxu0 %v2820
    %3186 = vmatprep.subr.bf16.mxu0 0
    %3187 = vmatpush1.bf16.msra.mxu0 %v2823
    %3188 = vmatprep.subr.bf16.mxu0 0
    %3189 = vmatpush1.bf16.msra.mxu0 %v2826
    %3190 = vmatprep.subr.bf16.mxu0 0
    %3191 = vmatpush1.bf16.msra.mxu0 %v2829
    %3192 = vmatprep.subr.bf16.mxu0 0
    %3193 = vmatpush1.bf16.msra.mxu0 %v2832
    %3194 = vmatprep.subr.bf16.mxu0 0
    %3195 = vmatpush1.bf16.msra.mxu0 %v2835
    %3196 = vmatprep.subr.bf16.mxu0 0
    %3197 = vmatpush1.bf16.msra.mxu0 %v2838
    %3198 = vmatprep.subr.bf16.mxu0 0
    %3199 = vmatpush1.bf16.msra.mxu0 %v2841
    %3200 = vmatprep.subr.bf16.mxu0 0
    %3201 = vmatpush1.bf16.msra.mxu0 %v2844
    %3202 = vmatprep.subr.bf16.mxu0 0
    %3203 = vmatpush1.bf16.msra.mxu0 %v2847
    %3204 = vmatprep.subr.bf16.mxu0 0
    %3205 = vmatpush1.bf16.msra.mxu0 %v2850
    %3206 = vmatprep.subr.bf16.mxu0 0
    %3207 = vmatpush1.bf16.msra.mxu0 %v2853
    %3208 = vmatprep.subr.bf16.mxu0 0
    %3209 = vmatpush1.bf16.msra.mxu0 %v2856
    %3210 = vmatprep.mubr.bf16.mxu0 %v2228
    %3211 = vmatmul.mubr.bf16.gmra.mrb[0].mxu0 %v2227
    %v3212 = vpop.f32.mrb[0].mxu0
    %v3213 = vadd.f32 %v2405, %v3212
    %v3214 = vpop.f32.mrb[0].mxu0
    %v3215 = vpop.f32.mrb[0].mxu0
    %v3216 = vadd.f32 %v2405, %v3215
    %v3217 = vpop.f32.mrb[0].mxu0
    %3218 = vdwg.mxu0
    %3219 = vmatprep.subr.bf16.mxu0 0
    %3220 = vmatpush1.bf16.msra.mxu0 %v2859
    %3221 = vmatprep.subr.bf16.mxu0 0
    %3222 = vmatpush1.bf16.msra.mxu0 %v2862
    %3223 = vmatprep.subr.bf16.mxu0 0
    %3224 = vmatpush1.bf16.msra.mxu0 %v2865
    %3225 = vmatprep.subr.bf16.mxu0 0
    %3226 = vmatpush1.bf16.msra.mxu0 %v2868
    %3227 = vmatprep.subr.bf16.mxu0 0
    %3228 = vmatpush1.bf16.msra.mxu0 %v2871
    %3229 = vmatprep.subr.bf16.mxu0 0
    %3230 = vmatpush1.bf16.msra.mxu0 %v2874
    %3231 = vmatprep.subr.bf16.mxu0 0
    %3232 = vmatpush1.bf16.msra.mxu0 %v2877
    %3233 = vmatprep.subr.bf16.mxu0 0
    %3234 = vmatpush1.bf16.msra.mxu0 %v2880
    %3235 = vmatprep.subr.bf16.mxu0 0
    %3236 = vmatpush1.bf16.msra.mxu0 %v2883
    %3237 = vmatprep.subr.bf16.mxu0 0
    %3238 = vmatpush1.bf16.msra.mxu0 %v2886
    %3239 = vmatprep.subr.bf16.mxu0 0
    %3240 = vmatpush1.bf16.msra.mxu0 %v2889
    %3241 = vmatprep.subr.bf16.mxu0 0
    %3242 = vmatpush1.bf16.msra.mxu0 %v2892
    %3243 = vmatprep.subr.bf16.mxu0 0
    %3244 = vmatpush1.bf16.msra.mxu0 %v2895
    %3245 = vmatprep.subr.bf16.mxu0 0
    %3246 = vmatpush1.bf16.msra.mxu0 %v2898
    %3247 = vmatprep.subr.bf16.mxu0 0
    %3248 = vmatpush1.bf16.msra.mxu0 %v2901
    %3249 = vmatprep.subr.bf16.mxu0 0
    %3250 = vmatpush1.bf16.msra.mxu0 %v2904
    %3251 = vmatprep.mubr.bf16.mxu0 %v2230
    %3252 = vmatmul.mubr.bf16.gmra.mrb[0].mxu0 %v2229
    %v3253 = vpop.f32.mrb[0].mxu0
    %v3254 = vadd.f32 %v3213, %v3253
    %v3255 = vpop.f32.mrb[0].mxu0
    %v3256 = vpop.f32.mrb[0].mxu0
    %v3257 = vadd.f32 %v3216, %v3256
    %v3258 = vpop.f32.mrb[0].mxu0
    %3259 = vdwg.mxu0
    %3260 = vmatprep.subr.bf16.mxu0 0
    %3261 = vmatpush1.bf16.msra.mxu0 %v2907
    %3262 = vmatprep.subr.bf16.mxu0 0
    %3263 = vmatpush1.bf16.msra.mxu0 %v2910
    %3264 = vmatprep.subr.bf16.mxu0 0
    %3265 = vmatpush1.bf16.msra.mxu0 %v2913
    %3266 = vmatprep.subr.bf16.mxu0 0
    %3267 = vmatpush1.bf16.msra.mxu0 %v2916
    %3268 = vmatprep.subr.bf16.mxu0 0
    %3269 = vmatpush1.bf16.msra.mxu0 %v2919
    %3270 = vmatprep.subr.bf16.mxu0 0
    %3271 = vmatpush1.bf16.msra.mxu0 %v2922
    %3272 = vmatprep.subr.bf16.mxu0 0
    %3273 = vmatpush1.bf16.msra.mxu0 %v2925
    %3274 = vmatprep.subr.bf16.mxu0 0
    %3275 = vmatpush1.bf16.msra.mxu0 %v2928
    %3276 = vmatprep.subr.bf16.mxu0 0
    %3277 = vmatpush1.bf16.msra.mxu0 0
    %3278 = vmatprep.subr.bf16.mxu0 0
    %3279 = vmatpush1.bf16.msra.mxu0 0
    %3280 = vmatprep.subr.bf16.mxu0 0
    %3281 = vmatpush1.bf16.msra.mxu0 0
    %3282 = vmatprep.subr.bf16.mxu0 0
    %3283 = vmatpush1.bf16.msra.mxu0 0
    %3284 = vmatprep.subr.bf16.mxu0 0
    %3285 = vmatpush1.bf16.msra.mxu0 0
    %3286 = vmatprep.subr.bf16.mxu0 0
    %3287 = vmatpush1.bf16.msra.mxu0 0
    %3288 = vmatprep.subr.bf16.mxu0 0
    %3289 = vmatpush1.bf16.msra.mxu0 0
    %3290 = vmatprep.subr.bf16.mxu0 0
    %3291 = vmatpush1.bf16.msra.mxu0 0
    %3292 = vmatprep.mubr.bf16.mxu0 0
    %3293 = vmatmul.mubr.bf16.gmra.mrb[0].mxu0 %v2231
    %v3294 = vpop.f32.mrb[0].mxu0
    %v3295 = vadd.f32 %v3254, %v3294
    %v3296 = vpop.f32.mrb[0].mxu0
    %v3297 = vpop.f32.mrb[0].mxu0
    %v3298 = vadd.f32 %v3257, %v3297
    %v3299 = vpop.f32.mrb[0].mxu0
    %3300 = vdwg.mxu0
    %v3301 = vmax.f32 %v3170, 0.0
    %v3302 = vmax.f32 %v3172, 0.0
    %v3303 = vmax.f32 %v3295, 0.0
    %v3304 = vmax.f32 %v3174, 0.0
    %v3305 = vmax.f32 %v3176, 0.0
    %v3306 = vmax.f32 %v3298, 0.0
    %v3307 = vpack.c.bf16 %v3304, %v3301
    %v3308 = vpack.c.bf16 %v3305, %v3302
    %v3309 = vpack.c.bf16 %v3306, %v3303
    %v3310 = vld [vmem:[%s5] sm:$0xff]
    %v3311 = vld [vmem:[%s5 + $0x8] sm:$0xff]
    %v3312 = vld [vmem:[%s5 + $0x10] sm:$0xff]
    %v3313 = vld [vmem:[%s5 + $0x18] sm:$0xff]
    %v3314 = vld [vmem:[%s5 + $0x20] sm:$0xff]
    %v3315 = vld [vmem:[%s5 + $0x28] sm:$0xff]
    %v3316 = vld [vmem:[%s5 + $0x30] sm:$0xff]
    %v3317 = vld [vmem:[%s5 + $0x38] sm:$0xff]
    %v3318 = vld [vmem:[%s5 + $0x40] sm:$0xff]
    %v3319 = vld [vmem:[%s5 + $0x48] sm:$0xff]
    %v3320 = vld [vmem:[%s5 + $0x50] sm:$0xff]
    %v3321 = vld [vmem:[%s5 + $0x58] sm:$0xff]
    %v3322 = vld [vmem:[%s5 + $0x60] sm:$0xff]
    %v3323 = vld [vmem:[%s5 + $0x68] sm:$0xff]
    %v3324 = vld [vmem:[%s5 + $0x70] sm:$0xff]
    %v3325 = vld [vmem:[%s5 + $0x78] sm:$0xff]
    %v3326 = vld [vmem:[%s5 + $0x80] sm:$0xff]
    %v3327 = vld [vmem:[%s5 + $0x88] sm:$0xff]
    %v3328 = vld [vmem:[%s5 + $0x90] sm:$0xff]
    %v3329 = vld [vmem:[%s5 + $0x98] sm:$0xff]
    %v3330 = vld [vmem:[%s5 + $0xa0] sm:$0xff]
    %v3331 = vld [vmem:[%s5 + $0xa8] sm:$0xff]
    %v3332 = vld [vmem:[%s5 + $0xb0] sm:$0xff]
    %v3333 = vld [vmem:[%s5 + $0xb8] sm:$0xff]
    %v3334 = vld [vmem:[%s5 + $0xc0] sm:$0xff]
    %v3335 = vld [vmem:[%s5 + $0xc8] sm:$0xff]
    %v3336 = vld [vmem:[%s5 + $0xd0] sm:$0xff]
    %v3337 = vld [vmem:[%s5 + $0xd8] sm:$0xff]
    %v3338 = vld [vmem:[%s5 + $0xe0] sm:$0xff]
    %v3339 = vld [vmem:[%s5 + $0xe8] sm:$0xff]
    %v3340 = vld [vmem:[%s5 + $0xf0] sm:$0xff]
    %v3341 = vld [vmem:[%s5 + $0xf8] sm:$0xff]
    %v3342 = vld [vmem:[%s5 + $0x100] sm:$0xff]
    %v3343 = vld [vmem:[%s5 + $0x108] sm:$0xff]
    %v3344 = vld [vmem:[%s5 + $0x110] sm:$0xff]
    %v3345 = vld [vmem:[%s5 + $0x118] sm:$0xff]
    %v3346 = vld [vmem:[%s5 + $0x120] sm:$0xff]
    %v3347 = vld [vmem:[%s5 + $0x128] sm:$0xff]
    %v3348 = vld [vmem:[%s5 + $0x130] sm:$0xff]
    %v3349 = vld [vmem:[%s5 + $0x138] sm:$0xff]
    %v3350 = vld [vmem:[%s5 + $0x140] sm:$0xff]
    %v3351 = vld [vmem:[%s5 + $0x148] sm:$0xff]
    %v3352 = vld [vmem:[%s5 + $0x150] sm:$0xff]
    %v3353 = vld [vmem:[%s5 + $0x158] sm:$0xff]
    %v3354 = vld [vmem:[%s5 + $0x160] sm:$0xff]
    %v3355 = vld [vmem:[%s5 + $0x168] sm:$0xff]
    %v3356 = vld [vmem:[%s5 + $0x170] sm:$0xff]
    %v3357 = vld [vmem:[%s5 + $0x178] sm:$0xff]
    %v3358 = vld [vmem:[%s6] sm:$0x3]
    %v3360 = vlaneseq
    %v3361 = vshrl.u32 %v3360, 7
    %v3362 = vsub.s32 0, %v3361
    %v3363 = vrot.slane %v3358, %v3362
    %v3364 = vlaneseq
    %v3365 = vshrl.u32 %v3364, 7
    %v3366 = vsub.s32 1, %v3365
    %v3367 = vrot.slane %v3358, %v3366
    %v3418 = vunpack.c.l.b16 %v3310
    %v3419 = vunpack.c.h.b16 %v3310
    %v3420 = vunpack.c.l.b16 %v3311
    %v3421 = vunpack.c.h.b16 %v3311
    %v3422 = vunpack.c.l.b16 %v3312
    %v3423 = vunpack.c.h.b16 %v3312
    %v3424 = vunpack.c.l.b16 %v3313
    %v3425 = vunpack.c.h.b16 %v3313
    %v3426 = vunpack.c.l.b16 %v3314
    %v3427 = vunpack.c.h.b16 %v3314
    %v3428 = vunpack.c.l.b16 %v3315
    %v3429 = vunpack.c.h.b16 %v3315
    %v3430 = vunpack.c.l.b16 %v3316
    %v3431 = vunpack.c.h.b16 %v3316
    %v3432 = vunpack.c.l.b16 %v3317
    %v3433 = vunpack.c.h.b16 %v3317
    %v3434 = vunpack.c.l.b16 %v3318
    %v3435 = vunpack.c.h.b16 %v3318
    %v3436 = vunpack.c.l.b16 %v3319
    %v3437 = vunpack.c.h.b16 %v3319
    %v3438 = vunpack.c.l.b16 %v3320
    %v3439 = vunpack.c.h.b16 %v3320
    %v3440 = vunpack.c.l.b16 %v3321
    %v3441 = vunpack.c.h.b16 %v3321
    %v3442 = vunpack.c.l.b16 %v3322
    %v3443 = vunpack.c.h.b16 %v3322
    %v3444 = vunpack.c.l.b16 %v3323
    %v3445 = vunpack.c.h.b16 %v3323
    %v3446 = vunpack.c.l.b16 %v3324
    %v3447 = vunpack.c.h.b16 %v3324
    %v3448 = vunpack.c.l.b16 %v3325
    %v3449 = vunpack.c.h.b16 %v3325
    %v3450 = vunpack.c.l.b16 %v3326
    %v3451 = vunpack.c.h.b16 %v3326
    %v3452 = vunpack.c.l.b16 %v3327
    %v3453 = vunpack.c.h.b16 %v3327
    %v3454 = vunpack.c.l.b16 %v3328
    %v3455 = vunpack.c.h.b16 %v3328
    %v3456 = vunpack.c.l.b16 %v3329
    %v3457 = vunpack.c.h.b16 %v3329
    %v3458 = vunpack.c.l.b16 %v3330
    %v3459 = vunpack.c.h.b16 %v3330
    %v3460 = vunpack.c.l.b16 %v3331
    %v3461 = vunpack.c.h.b16 %v3331
    %v3462 = vunpack.c.l.b16 %v3332
    %v3463 = vunpack.c.h.b16 %v3332
    %v3464 = vunpack.c.l.b16 %v3333
    %v3465 = vunpack.c.h.b16 %v3333
    %v3466 = vunpack.c.l.b16 %v3334
    %v3467 = vunpack.c.h.b16 %v3334
    %v3468 = vunpack.c.l.b16 %v3335
    %v3469 = vunpack.c.h.b16 %v3335
    %v3470 = vunpack.c.l.b16 %v3336
    %v3471 = vunpack.c.h.b16 %v3336
    %v3472 = vunpack.c.l.b16 %v3337
    %v3473 = vunpack.c.h.b16 %v3337
    %v3474 = vunpack.c.l.b16 %v3338
    %v3475 = vunpack.c.h.b16 %v3338
    %v3476 = vunpack.c.l.b16 %v3339
    %v3477 = vunpack.c.h.b16 %v3339
    %v3478 = vunpack.c.l.b16 %v3340
    %v3479 = vunpack.c.h.b16 %v3340
    %v3480 = vunpack.c.l.b16 %v3341
    %v3481 = vunpack.c.h.b16 %v3341
    %v3482 = vunpack.c.l.b16 %v3342
    %v3483 = vunpack.c.h.b16 %v3342
    %v3484 = vunpack.c.l.b16 %v3343
    %v3485 = vunpack.c.h.b16 %v3343
    %v3486 = vunpack.c.l.b16 %v3344
    %v3487 = vunpack.c.h.b16 %v3344
    %v3488 = vunpack.c.l.b16 %v3345
    %v3489 = vunpack.c.h.b16 %v3345
    %v3490 = vunpack.c.l.b16 %v3346
    %v3491 = vunpack.c.h.b16 %v3346
    %v3492 = vunpack.c.l.b16 %v3347
    %v3493 = vunpack.c.h.b16 %v3347
    %v3494 = vunpack.c.l.b16 %v3348
    %v3495 = vunpack.c.h.b16 %v3348
    %v3496 = vunpack.c.l.b16 %v3349
    %v3497 = vunpack.c.h.b16 %v3349
    %v3498 = vunpack.c.l.b16 %v3350
    %v3499 = vunpack.c.h.b16 %v3350
    %v3500 = vunpack.c.l.b16 %v3351
    %v3501 = vunpack.c.h.b16 %v3351
    %v3502 = vunpack.c.l.b16 %v3352
    %v3503 = vunpack.c.h.b16 %v3352
    %v3504 = vunpack.c.l.b16 %v3353
    %v3505 = vunpack.c.h.b16 %v3353
    %v3506 = vunpack.c.l.b16 %v3354
    %v3507 = vunpack.c.h.b16 %v3354
    %v3508 = vunpack.c.l.b16 %v3355
    %v3509 = vunpack.c.h.b16 %v3355
    %v3510 = vunpack.c.l.b16 %v3356
    %v3511 = vunpack.c.h.b16 %v3356
    %v3512 = vunpack.c.l.b16 %v3357
    %v3513 = vunpack.c.h.b16 %v3357
    %v3514 = vpack.c.b16 %v3420, %v3418
    %v3515 = vpack.c.b16 %v3421, %v3419
    %v3516 = vpack.c.b16 %v3424, %v3422
    %v3517 = vpack.c.b16 %v3425, %v3423
    %v3518 = vpack.c.b16 %v3428, %v3426
    %v3519 = vpack.c.b16 %v3429, %v3427
    %v3520 = vpack.c.b16 %v3432, %v3430
    %v3521 = vpack.c.b16 %v3433, %v3431
    %v3522 = vpack.c.b16 %v3436, %v3434
    %v3523 = vpack.c.b16 %v3437, %v3435
    %v3524 = vpack.c.b16 %v3440, %v3438
    %v3525 = vpack.c.b16 %v3441, %v3439
    %v3526 = vpack.c.b16 %v3444, %v3442
    %v3527 = vpack.c.b16 %v3445, %v3443
    %v3528 = vpack.c.b16 %v3448, %v3446
    %v3529 = vpack.c.b16 %v3449, %v3447
    %v3530 = vpack.c.b16 %v3452, %v3450
    %v3531 = vpack.c.b16 %v3453, %v3451
    %v3532 = vpack.c.b16 %v3456, %v3454
    %v3533 = vpack.c.b16 %v3457, %v3455
    %v3534 = vpack.c.b16 %v3460, %v3458
    %v3535 = vpack.c.b16 %v3461, %v3459
    %v3536 = vpack.c.b16 %v3464, %v3462
    %v3537 = vpack.c.b16 %v3465, %v3463
    %v3538 = vpack.c.b16 %v3468, %v3466
    %v3539 = vpack.c.b16 %v3469, %v3467
    %v3540 = vpack.c.b16 %v3472, %v3470
    %v3541 = vpack.c.b16 %v3473, %v3471
    %v3542 = vpack.c.b16 %v3476, %v3474
    %v3543 = vpack.c.b16 %v3477, %v3475
    %v3544 = vpack.c.b16 %v3480, %v3478
    %v3545 = vpack.c.b16 %v3481, %v3479
    %v3546 = vpack.c.b16 %v3484, %v3482
    %v3547 = vpack.c.b16 %v3485, %v3483
    %v3548 = vpack.c.b16 %v3488, %v3486
    %v3549 = vpack.c.b16 %v3489, %v3487
    %v3550 = vpack.c.b16 %v3492, %v3490
    %v3551 = vpack.c.b16 %v3493, %v3491
    %v3552 = vpack.c.b16 %v3496, %v3494
    %v3553 = vpack.c.b16 %v3497, %v3495
    %v3554 = vpack.c.b16 %v3500, %v3498
    %v3555 = vpack.c.b16 %v3501, %v3499
    %v3556 = vpack.c.b16 %v3504, %v3502
    %v3557 = vpack.c.b16 %v3505, %v3503
    %v3558 = vpack.c.b16 %v3508, %v3506
    %v3559 = vpack.c.b16 %v3509, %v3507
    %v3560 = vpack.c.b16 %v3512, %v3510
    %v3561 = vpack.c.b16 %v3513, %v3511
    %3610 = vmatprep.subr.bf16.mxu0 %v3515
    %3611 = vmatpush1.bf16.msra.mxu0 %v3514
    %3612 = vmatprep.subr.bf16.mxu0 %v3517
    %3613 = vmatpush1.bf16.msra.mxu0 %v3516
    %3614 = vmatprep.subr.bf16.mxu0 %v3519
    %3615 = vmatpush1.bf16.msra.mxu0 %v3518
    %3616 = vmatprep.subr.bf16.mxu0 %v3521
    %3617 = vmatpush1.bf16.msra.mxu0 %v3520
    %3618 = vmatprep.subr.bf16.mxu0 %v3523
    %3619 = vmatpush1.bf16.msra.mxu0 %v3522
    %3620 = vmatprep.subr.bf16.mxu0 %v3525
    %3621 = vmatpush1.bf16.msra.mxu0 %v3524
    %3622 = vmatprep.subr.bf16.mxu0 %v3527
    %3623 = vmatpush1.bf16.msra.mxu0 %v3526
    %3624 = vmatprep.subr.bf16.mxu0 %v3529
    %3625 = vmatpush1.bf16.msra.mxu0 %v3528
    %3626 = vmatprep.subr.bf16.mxu0 %v3531
    %3627 = vmatpush1.bf16.msra.mxu0 %v3530
    %3628 = vmatprep.subr.bf16.mxu0 %v3533
    %3629 = vmatpush1.bf16.msra.mxu0 %v3532
    %3630 = vmatprep.subr.bf16.mxu0 %v3535
    %3631 = vmatpush1.bf16.msra.mxu0 %v3534
    %3632 = vmatprep.subr.bf16.mxu0 %v3537
    %3633 = vmatpush1.bf16.msra.mxu0 %v3536
    %3634 = vmatprep.subr.bf16.mxu0 %v3539
    %3635 = vmatpush1.bf16.msra.mxu0 %v3538
    %3636 = vmatprep.subr.bf16.mxu0 %v3541
    %3637 = vmatpush1.bf16.msra.mxu0 %v3540
    %3638 = vmatprep.subr.bf16.mxu0 %v3543
    %3639 = vmatpush1.bf16.msra.mxu0 %v3542
    %3640 = vmatprep.subr.bf16.mxu0 %v3545
    %3641 = vmatpush1.bf16.msra.mxu0 %v3544
    %3642 = vmatprep.mubr.bf16.mxu0 %v3308
    %3643 = vmatmul.mubr.bf16.gmra.mrb[0].mxu0 %v3307
    %v3644 = vpop.f32.mrb[0].mxu0
    %v3645 = vadd.f32 %v3363, %v3644
    %v3646 = vpop.f32.mrb[0].mxu0
    %v3647 = vadd.f32 %v3367, %v3646
    %v3648 = vpop.f32.mrb[0].mxu0
    %v3649 = vadd.f32 %v3363, %v3648
    %v3650 = vpop.f32.mrb[0].mxu0
    %v3651 = vadd.f32 %v3367, %v3650
    %3652 = vdwg.mxu0
    %3653 = vmatprep.subr.bf16.mxu0 %v3547
    %3654 = vmatpush1.bf16.msra.mxu0 %v3546
    %3655 = vmatprep.subr.bf16.mxu0 %v3549
    %3656 = vmatpush1.bf16.msra.mxu0 %v3548
    %3657 = vmatprep.subr.bf16.mxu0 %v3551
    %3658 = vmatpush1.bf16.msra.mxu0 %v3550
    %3659 = vmatprep.subr.bf16.mxu0 %v3553
    %3660 = vmatpush1.bf16.msra.mxu0 %v3552
    %3661 = vmatprep.subr.bf16.mxu0 %v3555
    %3662 = vmatpush1.bf16.msra.mxu0 %v3554
    %3663 = vmatprep.subr.bf16.mxu0 %v3557
    %3664 = vmatpush1.bf16.msra.mxu0 %v3556
    %3665 = vmatprep.subr.bf16.mxu0 %v3559
    %3666 = vmatpush1.bf16.msra.mxu0 %v3558
    %3667 = vmatprep.subr.bf16.mxu0 %v3561
    %3668 = vmatpush1.bf16.msra.mxu0 %v3560
    %3669 = vmatprep.subr.bf16.mxu0 0
    %3670 = vmatpush1.bf16.msra.mxu0 0
    %3671 = vmatprep.subr.bf16.mxu0 0
    %3672 = vmatpush1.bf16.msra.mxu0 0
    %3673 = vmatprep.subr.bf16.mxu0 0
    %3674 = vmatpush1.bf16.msra.mxu0 0
    %3675 = vmatprep.subr.bf16.mxu0 0
    %3676 = vmatpush1.bf16.msra.mxu0 0
    %3677 = vmatprep.subr.bf16.mxu0 0
    %3678 = vmatpush1.bf16.msra.mxu0 0
    %3679 = vmatprep.subr.bf16.mxu0 0
    %3680 = vmatpush1.bf16.msra.mxu0 0
    %3681 = vmatprep.subr.bf16.mxu0 0
    %3682 = vmatpush1.bf16.msra.mxu0 0
    %3683 = vmatprep.subr.bf16.mxu0 0
    %3684 = vmatpush1.bf16.msra.mxu0 0
    %3685 = vmatprep.mubr.bf16.mxu0 0
    %3686 = vmatmul.mubr.bf16.gmra.mrb[0].mxu0 %v3309
    %v3687 = vpop.f32.mrb[0].mxu0
    %v3688 = vadd.f32 %v3645, %v3687
    %v3689 = vpop.f32.mrb[0].mxu0
    %v3690 = vadd.f32 %v3647, %v3689
    %v3691 = vpop.f32.mrb[0].mxu0
    %v3692 = vadd.f32 %v3649, %v3691
    %v3693 = vpop.f32.mrb[0].mxu0
    %v3694 = vadd.f32 %v3651, %v3693
    %3695 = vdwg.mxu0
    %v3696 = vmax.f32 %v3688, 0.0
    %v3697 = vmax.f32 %v3690, 0.0
    %v3698 = vmax.f32 %v3692, 0.0
    %v3699 = vmax.f32 %v3694, 0.0
    %v3700 = vpack.c.bf16 %v3698, %v3696
    %v3701 = vpack.c.bf16 %v3699, %v3697
    %v3702 = vld [vmem:[%s7] sm:$0xf]
    %v3703 = vld [vmem:[%s7 + $0x4] sm:$0xf]
    %v3704 = vld [vmem:[%s7 + $0x8] sm:$0xf]
    %v3705 = vld [vmem:[%s7 + $0xc] sm:$0xf]
    %v3706 = vld [vmem:[%s7 + $0x10] sm:$0xf]
    %v3707 = vld [vmem:[%s7 + $0x14] sm:$0xf]
    %v3708 = vld [vmem:[%s7 + $0x18] sm:$0xf]
    %v3709 = vld [vmem:[%s7 + $0x1c] sm:$0xf]
    %v3710 = vld [vmem:[%s7 + $0x20] sm:$0xf]
    %v3711 = vld [vmem:[%s7 + $0x24] sm:$0xf]
    %v3712 = vld [vmem:[%s7 + $0x28] sm:$0xf]
    %v3713 = vld [vmem:[%s7 + $0x2c] sm:$0xf]
    %v3714 = vld [vmem:[%s7 + $0x30] sm:$0xf]
    %v3715 = vld [vmem:[%s7 + $0x34] sm:$0xf]
    %v3716 = vld [vmem:[%s7 + $0x38] sm:$0xf]
    %v3717 = vld [vmem:[%s7 + $0x3c] sm:$0xf]
    %v3718 = vld [vmem:[%s7 + $0x40] sm:$0xf]
    %v3719 = vld [vmem:[%s7 + $0x44] sm:$0xf]
    %v3720 = vld [vmem:[%s7 + $0x48] sm:$0xf]
    %v3721 = vld [vmem:[%s7 + $0x4c] sm:$0xf]
    %v3722 = vld [vmem:[%s7 + $0x50] sm:$0xf]
    %v3723 = vld [vmem:[%s7 + $0x54] sm:$0xf]
    %v3724 = vld [vmem:[%s7 + $0x58] sm:$0xf]
    %v3725 = vld [vmem:[%s7 + $0x5c] sm:$0xf]
    %v3726 = vld [vmem:[%s7 + $0x60] sm:$0xf]
    %v3727 = vld [vmem:[%s7 + $0x64] sm:$0xf]
    %v3728 = vld [vmem:[%s7 + $0x68] sm:$0xf]
    %v3729 = vld [vmem:[%s7 + $0x6c] sm:$0xf]
    %v3730 = vld [vmem:[%s7 + $0x70] sm:$0xf]
    %v3731 = vld [vmem:[%s7 + $0x74] sm:$0xf]
    %v3732 = vld [vmem:[%s7 + $0x78] sm:$0xf]
    %v3733 = vld [vmem:[%s7 + $0x7c] sm:$0xf]
    %v3734 = vld [vmem:[%s8] sm:$0x1]
    %v3736 = vlaneseq
    %v3737 = vshrl.u32 %v3736, 7
    %v3738 = vsub.s32 0, %v3737
    %v3739 = vrot.slane %v3734, %v3738
    %v3773 = vunpack.c.l.b16 %v3702
    %v3774 = vunpack.c.l.b16 %v3703
    %v3775 = vunpack.c.l.b16 %v3704
    %v3776 = vunpack.c.l.b16 %v3705
    %v3777 = vunpack.c.l.b16 %v3706
    %v3778 = vunpack.c.l.b16 %v3707
    %v3779 = vunpack.c.l.b16 %v3708
    %v3780 = vunpack.c.l.b16 %v3709
    %v3781 = vunpack.c.l.b16 %v3710
    %v3782 = vunpack.c.l.b16 %v3711
    %v3783 = vunpack.c.l.b16 %v3712
    %v3784 = vunpack.c.l.b16 %v3713
    %v3785 = vunpack.c.l.b16 %v3714
    %v3786 = vunpack.c.l.b16 %v3715
    %v3787 = vunpack.c.l.b16 %v3716
    %v3788 = vunpack.c.l.b16 %v3717
    %v3789 = vunpack.c.l.b16 %v3718
    %v3790 = vunpack.c.l.b16 %v3719
    %v3791 = vunpack.c.l.b16 %v3720
    %v3792 = vunpack.c.l.b16 %v3721
    %v3793 = vunpack.c.l.b16 %v3722
    %v3794 = vunpack.c.l.b16 %v3723
    %v3795 = vunpack.c.l.b16 %v3724
    %v3796 = vunpack.c.l.b16 %v3725
    %v3797 = vunpack.c.l.b16 %v3726
    %v3798 = vunpack.c.l.b16 %v3727
    %v3799 = vunpack.c.l.b16 %v3728
    %v3800 = vunpack.c.l.b16 %v3729
    %v3801 = vunpack.c.l.b16 %v3730
    %v3802 = vunpack.c.l.b16 %v3731
    %v3803 = vunpack.c.l.b16 %v3732
    %v3804 = vunpack.c.l.b16 %v3733
    %v3805 = vpack.c.b16 %v3774, %v3773
    %v3806 = vpack.c.b16 %v3776, %v3775
    %v3807 = vpack.c.b16 %v3778, %v3777
    %v3808 = vpack.c.b16 %v3780, %v3779
    %v3809 = vpack.c.b16 %v3782, %v3781
    %v3810 = vpack.c.b16 %v3784, %v3783
    %v3811 = vpack.c.b16 %v3786, %v3785
    %v3812 = vpack.c.b16 %v3788, %v3787
    %v3813 = vpack.c.b16 %v3790, %v3789
    %v3814 = vpack.c.b16 %v3792, %v3791
    %v3815 = vpack.c.b16 %v3794, %v3793
    %v3816 = vpack.c.b16 %v3796, %v3795
    %v3817 = vpack.c.b16 %v3798, %v3797
    %v3818 = vpack.c.b16 %v3800, %v3799
    %v3819 = vpack.c.b16 %v3802, %v3801
    %v3820 = vpack.c.b16 %v3804, %v3803
    %3837 = vmatprep.subr.bf16.mxu0 0
    %3838 = vmatpush1.bf16.msra.mxu0 %v3805
    %3839 = vmatprep.subr.bf16.mxu0 0
    %3840 = vmatpush1.bf16.msra.mxu0 %v3806
    %3841 = vmatprep.subr.bf16.mxu0 0
    %3842 = vmatpush1.bf16.msra.mxu0 %v3807
    %3843 = vmatprep.subr.bf16.mxu0 0
    %3844 = vmatpush1.bf16.msra.mxu0 %v3808
    %3845 = vmatprep.subr.bf16.mxu0 0
    %3846 = vmatpush1.bf16.msra.mxu0 %v3809
    %3847 = vmatprep.subr.bf16.mxu0 0
    %3848 = vmatpush1.bf16.msra.mxu0 %v3810
    %3849 = vmatprep.subr.bf16.mxu0 0
    %3850 = vmatpush1.bf16.msra.mxu0 %v3811
    %3851 = vmatprep.subr.bf16.mxu0 0
    %3852 = vmatpush1.bf16.msra.mxu0 %v3812
    %3853 = vmatprep.subr.bf16.mxu0 0
    %3854 = vmatpush1.bf16.msra.mxu0 %v3813
    %3855 = vmatprep.subr.bf16.mxu0 0
    %3856 = vmatpush1.bf16.msra.mxu0 %v3814
    %3857 = vmatprep.subr.bf16.mxu0 0
    %3858 = vmatpush1.bf16.msra.mxu0 %v3815
    %3859 = vmatprep.subr.bf16.mxu0 0
    %3860 = vmatpush1.bf16.msra.mxu0 %v3816
    %3861 = vmatprep.subr.bf16.mxu0 0
    %3862 = vmatpush1.bf16.msra.mxu0 %v3817
    %3863 = vmatprep.subr.bf16.mxu0 0
    %3864 = vmatpush1.bf16.msra.mxu0 %v3818
    %3865 = vmatprep.subr.bf16.mxu0 0
    %3866 = vmatpush1.bf16.msra.mxu0 %v3819
    %3867 = vmatprep.subr.bf16.mxu0 0
    %3868 = vmatpush1.bf16.msra.mxu0 %v3820
    %3869 = vmatprep.mubr.bf16.mxu0 %v3701
    %3870 = vmatmul.mubr.bf16.gmra.mrb[0].mxu0 %v3700
    %v3871 = vpop.f32.mrb[0].mxu0
    %v3872 = vadd.f32 %v3739, %v3871
    %v3873 = vpop.f32.mrb[0].mxu0
    %v3874 = vpop.f32.mrb[0].mxu0
    %v3875 = vadd.f32 %v3739, %v3874
    %v3876 = vpop.f32.mrb[0].mxu0
    %3877 = vdwg.mxu0
    %v3878 = vmax.f32 %v3872, 0.0
    %v3879 = vmax.f32 %v3875, 0.0
    %v3880 = vpack.c.bf16 %v3879, %v3878
    %v3881 = vld [vmem:[%s9] sm:$0xf]
    %v3882 = vld [vmem:[%s9 + $0x4] sm:$0xf]
    %v3883 = vld [vmem:[%s9 + $0x8] sm:$0xf]
    %v3884 = vld [vmem:[%s9 + $0xc] sm:$0xf]
    %v3885 = vld [vmem:[%s9 + $0x10] sm:$0xf]
    %v3886 = vld [vmem:[%s9 + $0x14] sm:$0xf]
    %v3887 = vld [vmem:[%s9 + $0x18] sm:$0xf]
    %v3888 = vld [vmem:[%s9 + $0x1c] sm:$0xf]
    %v3889 = vld [vmem:[%s9 + $0x20] sm:$0xf]
    %v3890 = vld [vmem:[%s9 + $0x24] sm:$0xf]
    %v3891 = vld [vmem:[%s9 + $0x28] sm:$0xf]
    %v3892 = vld [vmem:[%s9 + $0x2c] sm:$0xf]
    %v3893 = vld [vmem:[%s9 + $0x30] sm:$0xf]
    %v3894 = vld [vmem:[%s9 + $0x34] sm:$0xf]
    %v3895 = vld [vmem:[%s9 + $0x38] sm:$0xf]
    %v3896 = vld [vmem:[%s9 + $0x3c] sm:$0xf]
    %v3897 = vld [vmem:[%s10] sm:$0x1]
    %v3899 = vlaneseq
    %v3900 = vshrl.u32 %v3899, 7
    %v3901 = vsub.s32 0, %v3900
    %v3902 = vrot.slane %v3897, %v3901
    %v3920 = vunpack.c.l.b16 %v3881
    %v3921 = vunpack.c.l.b16 %v3882
    %v3922 = vunpack.c.l.b16 %v3883
    %v3923 = vunpack.c.l.b16 %v3884
    %v3924 = vunpack.c.l.b16 %v3885
    %v3925 = vunpack.c.l.b16 %v3886
    %v3926 = vunpack.c.l.b16 %v3887
    %v3927 = vunpack.c.l.b16 %v3888
    %v3928 = vunpack.c.l.b16 %v3889
    %v3929 = vunpack.c.l.b16 %v3890
    %v3930 = vunpack.c.l.b16 %v3891
    %v3931 = vunpack.c.l.b16 %v3892
    %v3932 = vunpack.c.l.b16 %v3893
    %v3933 = vunpack.c.l.b16 %v3894
    %v3934 = vunpack.c.l.b16 %v3895
    %v3935 = vunpack.c.l.b16 %v3896
    %v3936 = vpack.c.b16 %v3921, %v3920
    %v3937 = vpack.c.b16 %v3923, %v3922
    %v3938 = vpack.c.b16 %v3925, %v3924
    %v3939 = vpack.c.b16 %v3927, %v3926
    %v3940 = vpack.c.b16 %v3929, %v3928
    %v3941 = vpack.c.b16 %v3931, %v3930
    %v3942 = vpack.c.b16 %v3933, %v3932
    %v3943 = vpack.c.b16 %v3935, %v3934
    %3952 = vmatprep.subr.bf16.mxu0 0
    %3953 = vmatpush1.bf16.msra.mxu0 %v3936
    %3954 = vmatprep.subr.bf16.mxu0 0
    %3955 = vmatpush1.bf16.msra.mxu0 %v3937
    %3956 = vmatprep.subr.bf16.mxu0 0
    %3957 = vmatpush1.bf16.msra.mxu0 %v3938
    %3958 = vmatprep.subr.bf16.mxu0 0
    %3959 = vmatpush1.bf16.msra.mxu0 %v3939
    %3960 = vmatprep.subr.bf16.mxu0 0
    %3961 = vmatpush1.bf16.msra.mxu0 %v3940
    %3962 = vmatprep.subr.bf16.mxu0 0
    %3963 = vmatpush1.bf16.msra.mxu0 %v3941
    %3964 = vmatprep.subr.bf16.mxu0 0
    %3965 = vmatpush1.bf16.msra.mxu0 %v3942
    %3966 = vmatprep.subr.bf16.mxu0 0
    %3967 = vmatpush1.bf16.msra.mxu0 %v3943
    %3968 = vmatprep.subr.bf16.mxu0 0
    %3969 = vmatpush1.bf16.msra.mxu0 0
    %3970 = vmatprep.subr.bf16.mxu0 0
    %3971 = vmatpush1.bf16.msra.mxu0 0
    %3972 = vmatprep.subr.bf16.mxu0 0
    %3973 = vmatpush1.bf16.msra.mxu0 0
    %3974 = vmatprep.subr.bf16.mxu0 0
    %3975 = vmatpush1.bf16.msra.mxu0 0
    %3976 = vmatprep.subr.bf16.mxu0 0
    %3977 = vmatpush1.bf16.msra.mxu0 0
    %3978 = vmatprep.subr.bf16.mxu0 0
    %3979 = vmatpush1.bf16.msra.mxu0 0
    %3980 = vmatprep.subr.bf16.mxu0 0
    %3981 = vmatpush1.bf16.msra.mxu0 0
    %3982 = vmatprep.subr.bf16.mxu0 0
    %3983 = vmatpush1.bf16.msra.mxu0 0
    %3984 = vmatprep.mubr.bf16.mxu0 0
    %3985 = vmatmul.mubr.bf16.gmra.mrb[0].mxu0 %v3880
    %v3986 = vpop.f32.mrb[0].mxu0
    %v3987 = vadd.f32 %v3902, %v3986
    %v3988 = vpop.f32.mrb[0].mxu0
    %v3989 = vpop.f32.mrb[0].mxu0
    %v3990 = vadd.f32 %v3902, %v3989
    %v3991 = vpop.f32.mrb[0].mxu0
    %3992 = vdwg.mxu0
    %3993 = vst [vmem:[%s11] sm:$0xff] %v3987
    %3994 = vst [vmem:[%s11 + $0x8] sm:$0xff] %v3990
    // Predicated region
    $region54: #{net_forward.1} parent=1 // pred_check
      _
    $region55: #{net_forward.1} parent=1 // pred_check_branch
      %3996 = sbr.rel (0) target = $region57
    $region56: #{net_forward.1} parent=1 // pred_region
      _
    $region57: #{net_forward.1} parent=1 // pred_fallthru
      _
    // Predicated region
    $region58: #{net_forward.1} parent=1 // pred_check
      _
    $region59: #{net_forward.1} parent=1 // pred_check_branch
      %3998 = sbr.rel (0) target = $region61
    $region60: #{net_forward.1} parent=1 // pred_region
      _
    $region61: #{net_forward.1} parent=1 // pred_fallthru
      _
    %3999 = vsyncpa [#allocation3], 1
    %4000 = vsyncpa [#allocation5], 1

</llo_original>
